<compile_context>
chip_gen: v6e
topology: v6e:2x2x1
jax: 0.10.0
libtpu: 0.0.40
codegen_flags: <defaults>
</compile_context>

<pallas_src>
import functools

import jax
import jax.numpy as jnp
from jax.experimental import pallas as pl
from jax.experimental.pallas import tpu as pltpu


def vae_forward_kernel(
    x_ref,                 # (TB, Dp)
    w1_ref, b1_ref,        # img_hid        : (Dp, H), (1, H)
    w_ms_ref, b_ms_ref,    # fused mu|sig   : (H, 2Z), (1, 2Z)
    w4_ref, b4_ref,        # z_hid          : (Z, H), (1, H)
    w5_ref, b5_ref,        # hid_img        : (H, Dp), (1, Dp)
    eps_ref,               # (TB, Z) standard normal noise
    out_ref,               # (TB, Dp) reconstructed image
):
    z_dim = eps_ref.shape[-1]
    cdt = w1_ref.dtype  # compute dtype for MXU operands (f32 or bf16)

    x = x_ref[...]

    # ---- encode ----
    hid = jnp.dot(x.astype(cdt), w1_ref[...],
                  preferred_element_type=jnp.float32) + b1_ref[...]
    hid = jnp.maximum(hid, 0.0)                                    # ReLU (f32, VPU)

    # fused mu/sig head: one (TB, H) x (H, 2Z) dot, then slice
    ms = jnp.dot(hid.astype(cdt), w_ms_ref[...],
                 preferred_element_type=jnp.float32) + b_ms_ref[...]
    mu = ms[:, :z_dim]
    sig = ms[:, z_dim:]

    # ---- reparametrization: z = mu + sig * eps ----
    z = mu + sig * eps_ref[...]

    # ---- decode ----
    hid2 = jnp.dot(z.astype(cdt), w4_ref[...],
                   preferred_element_type=jnp.float32) + b4_ref[...]
    hid2 = jnp.maximum(hid2, 0.0)                                  # ReLU
    logits = jnp.dot(hid2.astype(cdt), w5_ref[...],
                     preferred_element_type=jnp.float32) + b5_ref[...]

    out_ref[...] = jax.nn.sigmoid(logits).astype(out_ref.dtype)


def _round_up(n, m):
    return ((n + m - 1) // m) * m


def _pick_batch_tile(batch, tb):
    """Large tile (amortize ~0.35us/step overhead) but keep >=2 grid steps
    so both TensorCores on v7x get work; tb must be a multiple of 8 unless
    it equals the full batch."""
    tb = min(tb, batch)
    if tb == batch and batch > 8:
        tb = _round_up(pl.cdiv(batch, 2), 8)
    if tb != batch:
        tb = max(8, (tb // 8) * 8)
    return tb


@functools.partial(jax.jit, static_argnames=("tb", "compute_dtype", "out_dtype"))
def vae_forward(x, params, eps, *, tb=512, compute_dtype=None, out_dtype=None):
    """VAE forward. Batch-gridded pallas_call, weights VMEM-resident.

    compute_dtype=None  -> f32 matmuls (exact vs reference)
    compute_dtype=bf16  -> bf16 MXU operands + bf16 activation I/O, f32
                           accumulation. Valid/fast on v5e, v6e and v7x.
    """
    B, D = x.shape
    H = params["w1"].shape[1]
    Z = eps.shape[1]
    out_dtype = out_dtype or x.dtype

    tb = _pick_batch_tile(B, tb)

    # --- lane-dense image dim: zero-pad D to a multiple of 128 ---------------
    Dp = _round_up(D, 128)
    w1, b1 = params["w1"], params["b1"]
    w4, b4 = params["w4"], params["b4"]
    w5, b5 = params["w5"], params["b5"]
    if Dp != D:
        x = jnp.pad(x, ((0, 0), (0, Dp - D)))
        w1 = jnp.pad(w1, ((0, Dp - D), (0, 0)))   # extra input cols are zero
        w5 = jnp.pad(w5, ((0, 0), (0, Dp - D)))   # extra output cols sliced off
        b5 = jnp.pad(b5, ((0, 0), (0, Dp - D)))

    # Fuse mu/sig weights into one lane-denser head (H, 2Z).
    w_ms = jnp.concatenate([params["w_mu"], params["w_sig"]], axis=1)
    b_ms = jnp.concatenate([params["b_mu"], params["b_sig"]], axis=1)

    if compute_dtype is not None:
        # Cast MXU operands *and* streamed activations; biases / elementwise
        # math stay f32 (required on v5e: no bf16 VPU/EUP).
        w1 = w1.astype(compute_dtype)
        w_ms = w_ms.astype(compute_dtype)
        w4 = w4.astype(compute_dtype)
        w5 = w5.astype(compute_dtype)
        x = x.astype(compute_dtype)
        eps = eps.astype(compute_dtype)

    args = (x, w1, b1, w_ms, b_ms, w4, b4, w5, b5, eps)

    def row_spec(cols):
        # batch-tiled activation blocks (pipelined/double-buffered)
        return pl.BlockSpec((tb, cols), lambda i: (i, 0))

    def resident(a):
        # full-array block, same index every grid step -> fetched once, stays
        # in VMEM; single-buffered so it doesn't cost 2x VMEM.
        return pl.BlockSpec(a.shape, lambda i: (0, 0),
                            pipeline_mode=pl.Buffered(1))

    in_specs = [
        row_spec(Dp),
        resident(w1), resident(b1),
        resident(w_ms), resident(b_ms),
        resident(w4), resident(b4),
        resident(w5), resident(b5),
        row_spec(Z),
    ]

    # --- cost + VMEM budget ---------------------------------------------------
    flops = 2 * B * (Dp * H + H * (2 * Z) + Z * H + H * Dp)
    bytes_accessed = sum(int(a.size) * a.dtype.itemsize for a in args)
    bytes_accessed += B * Dp * jnp.dtype(out_dtype).itemsize

    act_isz = jnp.dtype(x.dtype).itemsize
    out_isz = jnp.dtype(out_dtype).itemsize
    weight_bytes = sum(int(a.size) * a.dtype.itemsize for a in args[1:-1])
    vmem_est = (
        weight_bytes                              # single-buffered weights
        + 2 * tb * (Dp + Z) * act_isz             # double-buffered x, eps
        + 2 * tb * Dp * out_isz                   # double-buffered out
        + tb * (H + 3 * Z + H + Dp) * 4           # in-kernel f32 temporaries
    )
    vmem_limit = int(max(32 << 20, min(100 << 20, 1.5 * vmem_est + (4 << 20))))

    out = pl.pallas_call(
        vae_forward_kernel,
        out_shape=jax.ShapeDtypeStruct((B, Dp), out_dtype),
        grid=(pl.cdiv(B, tb),),
        in_specs=in_specs,
        out_specs=row_spec(Dp),
        compiler_params=pltpu.CompilerParams(
            dimension_semantics=("parallel",),   # shard batch across TCs on v7x
            vmem_limit_bytes=vmem_limit,
        ),
        cost_estimate=pl.CostEstimate(
            flops=flops,
            transcendentals=B * Dp,              # sigmoid exp
            bytes_accessed=bytes_accessed,
        ),
    )(*args)

    if Dp != D:
        out = out[:, :D]
    return out


def init_params(key, img_dim, hid_dim, z_dim, dtype=jnp.float32):
    """Deterministic synthetic parameters. Weights stored as (in, out)."""
    ks = jax.random.split(key, 10)

    def linear(kw, kb, fan_in, fan_out):
        bound = 1.0 / jnp.sqrt(fan_in)
        w = jax.random.uniform(kw, (fan_in, fan_out), dtype, -bound, bound)
        b = jax.random.uniform(kb, (1, fan_out), dtype, -bound, bound)
        return w, b

    w1, b1 = linear(ks[0], ks[1], img_dim, hid_dim)    # img_hid
    w_mu, b_mu = linear(ks[2], ks[3], hid_dim, z_dim)  # hid_mu
    w_sg, b_sg = linear(ks[4], ks[5], hid_dim, z_dim)  # hid_sig
    w4, b4 = linear(ks[6], ks[7], z_dim, hid_dim)      # z_hid
    w5, b5 = linear(ks[8], ks[9], hid_dim, img_dim)    # hid_img
    return {
        "w1": w1, "b1": b1,
        "w_mu": w_mu, "b_mu": b_mu,
        "w_sig": w_sg, "b_sig": b_sg,
        "w4": w4, "b4": b4,
        "w5": w5, "b5": b5,
    }


def vae_forward_ref(x, params, eps):
    """Pure-JAX reference (matches the PyTorch module semantics)."""
    hid = jax.nn.relu(x @ params["w1"] + params["b1"])
    mu = hid @ params["w_mu"] + params["b_mu"]
    sig = hid @ params["w_sig"] + params["b_sig"]
    z = mu + sig * eps
    hid2 = jax.nn.relu(z @ params["w4"] + params["b4"])
    return jax.nn.sigmoid(hid2 @ params["w5"] + params["b5"])


# TODO(synk): PyTorch forward() returns only the reconstruction; if the KL term
# is needed for training, add mu/sig as extra pallas_call outputs (already
# computed in-kernel). If that is done, the partial-last-tile rows must be
# masked before any in-kernel reduction.

if __name__ == "__main__":
    # Classic VAE (MNIST-like) shapes with the module's default widths:
    # D=784 exercises the lane-dense padding path (784 -> 896); batch 256
    # splits into a 2-step parallel grid (both v7x TensorCores busy).
    B, IMG_DIM, HID_DIM, Z_DIM = 256, 784, 200, 20

    key = jax.random.PRNGKey(0)
    k_params, k_x, k_eps = jax.random.split(key, 3)

    params = init_params(k_params, IMG_DIM, HID_DIM, Z_DIM)
    x = jax.random.uniform(k_x, (B, IMG_DIM), jnp.float32)      # "image" batch
    eps = jax.random.normal(k_eps, (B, Z_DIM), jnp.float32)     # randn_like(sig)

    ref = vae_forward_ref(x, params, eps)

    # f32 path (matches reference semantics)
    out = jax.block_until_ready(vae_forward(x, params, eps))
    assert out.shape == (B, IMG_DIM)
    assert jnp.allclose(out, ref, atol=1e-4, rtol=1e-4), "f32 mismatch vs reference"

    # bf16 MXU-operand + activation-I/O path, f32 accumulation (all chips)
    out_bf16 = jax.block_until_ready(
        vae_forward(x, params, eps, compute_dtype=jnp.bfloat16)
    )
    assert out_bf16.shape == (B, IMG_DIM)
    assert jnp.allclose(out_bf16, ref, atol=5e-2, rtol=5e-2), "bf16 mismatch vs reference"

    print("KERNEL_OK")
</pallas_src>

<mosaic_0001>
module attributes {stable_mosaic.version = 11 : i64} {
  func.func @vae_forward_kernel(%arg0: i32, %arg1: memref<128x896xf32, #tpu.memory_space<vmem>>, %arg2: memref<896x200xf32, #tpu.memory_space<vmem>>, %arg3: memref<1x200xf32, #tpu.memory_space<vmem>>, %arg4: memref<200x40xf32, #tpu.memory_space<vmem>>, %arg5: memref<1x40xf32, #tpu.memory_space<vmem>>, %arg6: memref<20x200xf32, #tpu.memory_space<vmem>>, %arg7: memref<1x200xf32, #tpu.memory_space<vmem>>, %arg8: memref<200x896xf32, #tpu.memory_space<vmem>>, %arg9: memref<1x896xf32, #tpu.memory_space<vmem>>, %arg10: memref<128x20xf32, #tpu.memory_space<vmem>>, %arg11: memref<128x896xf32, #tpu.memory_space<vmem>>) attributes {dimension_semantics = [#tpu.dimension_semantics<parallel>], iteration_bounds = array<i64: 2>, scalar_prefetch = 0 : i64, scratch_operands = 0 : i64, tpu.core_type = #tpu.core_type<tc>, window_params = [{transform_indices = @transform_0, window_bounds = array<i64: 128, 896>}, {pipeline_mode = #tpu.pipeline_mode<synchronous>, transform_indices = @transform_1, window_bounds = array<i64: 896, 200>}, {pipeline_mode = #tpu.pipeline_mode<synchronous>, transform_indices = @transform_2, window_bounds = array<i64: 1, 200>}, {pipeline_mode = #tpu.pipeline_mode<synchronous>, transform_indices = @transform_3, window_bounds = array<i64: 200, 40>}, {pipeline_mode = #tpu.pipeline_mode<synchronous>, transform_indices = @transform_4, window_bounds = array<i64: 1, 40>}, {pipeline_mode = #tpu.pipeline_mode<synchronous>, transform_indices = @transform_5, window_bounds = array<i64: 20, 200>}, {pipeline_mode = #tpu.pipeline_mode<synchronous>, transform_indices = @transform_6, window_bounds = array<i64: 1, 200>}, {pipeline_mode = #tpu.pipeline_mode<synchronous>, transform_indices = @transform_7, window_bounds = array<i64: 200, 896>}, {pipeline_mode = #tpu.pipeline_mode<synchronous>, transform_indices = @transform_8, window_bounds = array<i64: 1, 896>}, {transform_indices = @transform_9, window_bounds = array<i64: 128, 20>}, {transform_indices = @transform_10, window_bounds = array<i64: 128, 896>}]} {
    %c0 = arith.constant 0 : index
    %c0_0 = arith.constant 0 : index
    %0 = vector.load %arg1[%c0, %c0_0] : memref<128x896xf32, #tpu.memory_space<vmem>>, vector<128x896xf32>
    %c0_1 = arith.constant 0 : index
    %c0_2 = arith.constant 0 : index
    %1 = vector.load %arg2[%c0_1, %c0_2] : memref<896x200xf32, #tpu.memory_space<vmem>>, vector<896x200xf32>
    %cst = arith.constant dense<0.000000e+00> : vector<128x200xf32>
    %2 = tpu.matmul %0, %1, %cst {dimension_numbers = #tpu.dot_dimension_numbers<[1], [0], [0], [1], [0, 0, 1, 1], [], []>} : vector<128x896xf32>, vector<896x200xf32>, vector<128x200xf32> -> vector<128x200xf32>
    %c0_3 = arith.constant 0 : index
    %c0_4 = arith.constant 0 : index
    %3 = vector.load %arg3[%c0_3, %c0_4] : memref<1x200xf32, #tpu.memory_space<vmem>>, vector<1x200xf32>
    %4 = vector.broadcast %3 : vector<1x200xf32> to vector<128x200xf32>
    %5 = arith.addf %2, %4 : vector<128x200xf32>
    %cst_5 = arith.constant 0.000000e+00 : f32
    %6 = vector.broadcast %cst_5 : f32 to vector<128x200xf32>
    %7 = arith.maximumf %5, %6 : vector<128x200xf32>
    %c0_6 = arith.constant 0 : index
    %c0_7 = arith.constant 0 : index
    %8 = vector.load %arg4[%c0_6, %c0_7] : memref<200x40xf32, #tpu.memory_space<vmem>>, vector<200x40xf32>
    %cst_8 = arith.constant dense<0.000000e+00> : vector<128x40xf32>
    %9 = tpu.matmul %7, %8, %cst_8 {dimension_numbers = #tpu.dot_dimension_numbers<[1], [0], [0], [1], [0, 0, 1, 1], [], []>} : vector<128x200xf32>, vector<200x40xf32>, vector<128x40xf32> -> vector<128x40xf32>
    %c0_9 = arith.constant 0 : index
    %c0_10 = arith.constant 0 : index
    %10 = vector.load %arg5[%c0_9, %c0_10] : memref<1x40xf32, #tpu.memory_space<vmem>>, vector<1x40xf32>
    %11 = vector.broadcast %10 : vector<1x40xf32> to vector<128x40xf32>
    %12 = arith.addf %9, %11 : vector<128x40xf32>
    %13 = vector.extract_strided_slice %12 {offsets = [0, 0], sizes = [128, 20], strides = [1, 1]} : vector<128x40xf32> to vector<128x20xf32>
    %14 = vector.extract_strided_slice %12 {offsets = [0, 20], sizes = [128, 20], strides = [1, 1]} : vector<128x40xf32> to vector<128x20xf32>
    %c0_11 = arith.constant 0 : index
    %c0_12 = arith.constant 0 : index
    %15 = vector.load %arg10[%c0_11, %c0_12] : memref<128x20xf32, #tpu.memory_space<vmem>>, vector<128x20xf32>
    %16 = arith.mulf %14, %15 : vector<128x20xf32>
    %17 = arith.addf %13, %16 : vector<128x20xf32>
    %c0_13 = arith.constant 0 : index
    %c0_14 = arith.constant 0 : index
    %18 = vector.load %arg6[%c0_13, %c0_14] : memref<20x200xf32, #tpu.memory_space<vmem>>, vector<20x200xf32>
    %cst_15 = arith.constant dense<0.000000e+00> : vector<128x200xf32>
    %19 = tpu.matmul %17, %18, %cst_15 {dimension_numbers = #tpu.dot_dimension_numbers<[1], [0], [0], [1], [0, 0, 1, 1], [], []>} : vector<128x20xf32>, vector<20x200xf32>, vector<128x200xf32> -> vector<128x200xf32>
    %c0_16 = arith.constant 0 : index
    %c0_17 = arith.constant 0 : index
    %20 = vector.load %arg7[%c0_16, %c0_17] : memref<1x200xf32, #tpu.memory_space<vmem>>, vector<1x200xf32>
    %21 = vector.broadcast %20 : vector<1x200xf32> to vector<128x200xf32>
    %22 = arith.addf %19, %21 : vector<128x200xf32>
    %cst_18 = arith.constant 0.000000e+00 : f32
    %23 = vector.broadcast %cst_18 : f32 to vector<128x200xf32>
    %24 = arith.maximumf %22, %23 : vector<128x200xf32>
    %c0_19 = arith.constant 0 : index
    %c0_20 = arith.constant 0 : index
    %25 = vector.load %arg8[%c0_19, %c0_20] : memref<200x896xf32, #tpu.memory_space<vmem>>, vector<200x896xf32>
    %cst_21 = arith.constant dense<0.000000e+00> : vector<128x896xf32>
    %26 = tpu.matmul %24, %25, %cst_21 {dimension_numbers = #tpu.dot_dimension_numbers<[1], [0], [0], [1], [0, 0, 1, 1], [], []>} : vector<128x200xf32>, vector<200x896xf32>, vector<128x896xf32> -> vector<128x896xf32>
    %c0_22 = arith.constant 0 : index
    %c0_23 = arith.constant 0 : index
    %27 = vector.load %arg9[%c0_22, %c0_23] : memref<1x896xf32, #tpu.memory_space<vmem>>, vector<1x896xf32>
    %28 = vector.broadcast %27 : vector<1x896xf32> to vector<128x896xf32>
    %29 = arith.addf %26, %28 : vector<128x896xf32>
    %30 = arith.negf %29 : vector<128x896xf32>
    %31 = math.exp %30 : vector<128x896xf32>
    %cst_24 = arith.constant 1.000000e+00 : f32
    %32 = vector.broadcast %cst_24 : f32 to vector<128x896xf32>
    %33 = arith.addf %32, %31 : vector<128x896xf32>
    %34 = arith.divf %32, %33 : vector<128x896xf32>
    %c0_25 = arith.constant 0 : index
    %c0_26 = arith.constant 0 : index
    %35 = vector.load %arg11[%c0_25, %c0_26] : memref<128x896xf32, #tpu.memory_space<vmem>>, vector<128x896xf32>
    tpu.vector_store %arg11[%c0_25, %c0_26], %34 {strides = array<i32>} : memref<128x896xf32, #tpu.memory_space<vmem>>, vector<128x896xf32>,
    return
  }
  func.func @transform_0(%arg0: i32) -> (i32, i32) {
    %c0_i32 = arith.constant 0 : i32
    %c0_i32_0 = arith.constant 0 : i32
    return %arg0, %c0_i32 : i32, i32
  }
  func.func @transform_1(%arg0: i32) -> (i32, i32) {
    %c0_i32 = arith.constant 0 : i32
    %c0_i32_0 = arith.constant 0 : i32
    %c0_i32_1 = arith.constant 0 : i32
    return %c0_i32, %c0_i32_0 : i32, i32
  }
  func.func @transform_2(%arg0: i32) -> (i32, i32) {
    %c0_i32 = arith.constant 0 : i32
    %c0_i32_0 = arith.constant 0 : i32
    %c0_i32_1 = arith.constant 0 : i32
    return %c0_i32, %c0_i32_0 : i32, i32
  }
  func.func @transform_3(%arg0: i32) -> (i32, i32) {
    %c0_i32 = arith.constant 0 : i32
    %c0_i32_0 = arith.constant 0 : i32
    %c0_i32_1 = arith.constant 0 : i32
    return %c0_i32, %c0_i32_0 : i32, i32
  }
  func.func @transform_4(%arg0: i32) -> (i32, i32) {
    %c0_i32 = arith.constant 0 : i32
    %c0_i32_0 = arith.constant 0 : i32
    %c0_i32_1 = arith.constant 0 : i32
    return %c0_i32, %c0_i32_0 : i32, i32
  }
  func.func @transform_5(%arg0: i32) -> (i32, i32) {
    %c0_i32 = arith.constant 0 : i32
    %c0_i32_0 = arith.constant 0 : i32
    %c0_i32_1 = arith.constant 0 : i32
    return %c0_i32, %c0_i32_0 : i32, i32
  }
  func.func @transform_6(%arg0: i32) -> (i32, i32) {
    %c0_i32 = arith.constant 0 : i32
    %c0_i32_0 = arith.constant 0 : i32
    %c0_i32_1 = arith.constant 0 : i32
    return %c0_i32, %c0_i32_0 : i32, i32
  }
  func.func @transform_7(%arg0: i32) -> (i32, i32) {
    %c0_i32 = arith.constant 0 : i32
    %c0_i32_0 = arith.constant 0 : i32
    %c0_i32_1 = arith.constant 0 : i32
    return %c0_i32, %c0_i32_0 : i32, i32
  }
  func.func @transform_8(%arg0: i32) -> (i32, i32) {
    %c0_i32 = arith.constant 0 : i32
    %c0_i32_0 = arith.constant 0 : i32
    %c0_i32_1 = arith.constant 0 : i32
    return %c0_i32, %c0_i32_0 : i32, i32
  }
  func.func @transform_9(%arg0: i32) -> (i32, i32) {
    %c0_i32 = arith.constant 0 : i32
    %c0_i32_0 = arith.constant 0 : i32
    return %arg0, %c0_i32 : i32, i32
  }
  func.func @transform_10(%arg0: i32) -> (i32, i32) {
    %c0_i32 = arith.constant 0 : i32
    %c0_i32_0 = arith.constant 0 : i32
    return %arg0, %c0_i32 : i32, i32
  }
}

</mosaic_0001>

<llo_original>
// kernel: vae_forward.1
$region0: #{vae_forward.1}
  #allocation0 [shape = 'u32[]', space=smem, size = 0x4, offset = 0x4, fixed_abs, tag = 'smem constant byte address 0x4 - core index']
  #allocation1 [shape = 'u32[144,128]{1,0:T(1,128)}', space=vmem, size = 0x12000, scoped, tag = 'internal scratch']
  %s0 = inlined_call_operand.vmem [shape: f32[256,896], index: 0, kind: input, shape index: {}]
  %s1 = inlined_call_operand.vmem [shape: f32[896,200], index: 1, kind: input, shape index: {}]
  %s2 = inlined_call_operand.vmem [shape: f32[1,200], index: 2, kind: input, shape index: {}]
  %s3 = inlined_call_operand.vmem [shape: f32[200,40], index: 3, kind: input, shape index: {}]
  %s4 = inlined_call_operand.vmem [shape: f32[1,40], index: 4, kind: input, shape index: {}]
  %s5 = inlined_call_operand.vmem [shape: f32[20,200], index: 5, kind: input, shape index: {}]
  %s6 = inlined_call_operand.vmem [shape: f32[1,200], index: 6, kind: input, shape index: {}]
  %s7 = inlined_call_operand.vmem [shape: f32[200,896], index: 7, kind: input, shape index: {}]
  %s8 = inlined_call_operand.vmem [shape: f32[1,896], index: 8, kind: input, shape index: {}]
  %s9 = inlined_call_operand.vmem [shape: f32[256,20], index: 9, kind: input, shape index: {}]
  %s10 = inlined_call_operand.vmem [shape: f32[256,896], index: 10, kind: output, shape index: {}]
  %s11 = sld [smem:[#allocation0]]
  $region73: #{vae_forward.1} parent=0
    _
  %s13 = ssub.s32 1, %s11
  %s14 = scalar_select 0, %s13, %s11
  loop: start=0, step=1, limit=4
  $region2: #{vae_forward.1} parent=0 // loop_pre_header
    _
  $region3: #{vae_forward.1} parent=0 // loop_header
    %s16 = sphi 0, %s20
    %p17 = scmp.ge.s32.totalorder %s16, 4
    %s26 = sphi 0, %s28
    %s29 = sphi 0, %s26
    %s30 = sphi 0, %s29
    %s46 = sphi 0, %s30
    %s50 = sphi 0, %s50
    %s52 = sphi 0, %s50
    %s53 = sphi 0, %s52
    %s67 = sphi 0, %s53
    %s71 = sphi 0, %s71
    %s73 = sphi 0, %s71
    %s74 = sphi 0, %s73
    %s88 = sphi 0, %s74
    %s92 = sphi 0, %s92
    %s94 = sphi 0, %s92
    %s95 = sphi 0, %s94
    %s109 = sphi 0, %s95
    %s113 = sphi 0, %s113
    %s115 = sphi 0, %s113
    %s116 = sphi 0, %s115
    %s130 = sphi 0, %s116
    %s134 = sphi 0, %s134
    %s136 = sphi 0, %s134
    %s137 = sphi 0, %s136
    %s151 = sphi 0, %s137
    %s155 = sphi 0, %s155
    %s157 = sphi 0, %s155
    %s158 = sphi 0, %s157
    %s172 = sphi 0, %s158
    %s176 = sphi 0, %s176
    %s178 = sphi 0, %s176
    %s179 = sphi 0, %s178
    %s193 = sphi 0, %s179
    %s197 = sphi 0, %s197
    %s199 = sphi 0, %s197
    %s200 = sphi 0, %s199
    %s214 = sphi 0, %s200
    %s220 = sphi 0, %s222
    %s223 = sphi 0, %s220
    %s224 = sphi 0, %s223
    %s240 = sphi 0, %s224
    %s246 = sphi 0, %s248
    %s249 = sphi 0, %s246
    %s250 = sphi 0, %s249
    %s266 = sphi 0, %s250
  $region4: #{vae_forward.1} parent=0 // loop_header_branch
    %19 = sbr.rel (%p17) target = $region8
  $region5: #{vae_forward.1} parent=0 // loop_body
    %s21 = ssub.s32 %s16, 1
    %s22 = ssub.s32 %s16, 2
    %s23 = sadd.s32 %s16, 1
    %s24 = ssub.s32 %s16, %s23
    %p25 = scmp.eq.s32.totalorder %s24, 0
    %s27 = sadd.s32 %s26, 1
    %s28 = scalar_select %p25, %s26, %s27
    %p31 = pneg %p25
    %p32 = scmp.eq.s32.totalorder %s16, 1
    %p33 = por %p31, %p32
    %p34 = scmp.ne.s32.totalorder %s26, %s29
    %p35 = scmp.eq.s32.totalorder %s16, 0
    %p36 = por %p34, %p35
    %p37 = scmp.ne.s32.totalorder %s26, %s29
    %p38 = scmp.eq.s32.totalorder %s21, 1
    %p39 = por %p37, %p38
    %p40 = scmp.ne.s32.totalorder %s29, %s30
    %p41 = scmp.eq.s32.totalorder %s21, 0
    %p42 = por %p40, %p41
    %p43 = scmp.ne.s32.totalorder %s29, %s30
    %p44 = scmp.eq.s32.totalorder %s22, 1
    %p45 = por %p43, %p44
    %p47 = scmp.ne.s32.totalorder %s30, %s46
    %p48 = scmp.eq.s32.totalorder %s22, 0
    %p49 = por %p47, %p48
    %s51 = sadd.s32 %s50, 1
    %p54 = scmp.eq.s32.totalorder %s16, 1
    %p55 = scmp.ne.s32.totalorder %s50, %s52
    %p56 = scmp.eq.s32.totalorder %s16, 0
    %p57 = por %p55, %p56
    %p58 = scmp.ne.s32.totalorder %s50, %s52
    %p59 = scmp.eq.s32.totalorder %s21, 1
    %p60 = por %p58, %p59
    %p61 = scmp.ne.s32.totalorder %s52, %s53
    %p62 = scmp.eq.s32.totalorder %s21, 0
    %p63 = por %p61, %p62
    %p64 = scmp.ne.s32.totalorder %s52, %s53
    %p65 = scmp.eq.s32.totalorder %s22, 1
    %p66 = por %p64, %p65
    %p68 = scmp.ne.s32.totalorder %s53, %s67
    %p69 = scmp.eq.s32.totalorder %s22, 0
    %p70 = por %p68, %p69
    %s72 = sadd.s32 %s71, 1
    %p75 = scmp.eq.s32.totalorder %s16, 1
    %p76 = scmp.ne.s32.totalorder %s71, %s73
    %p77 = scmp.eq.s32.totalorder %s16, 0
    %p78 = por %p76, %p77
    %p79 = scmp.ne.s32.totalorder %s71, %s73
    %p80 = scmp.eq.s32.totalorder %s21, 1
    %p81 = por %p79, %p80
    %p82 = scmp.ne.s32.totalorder %s73, %s74
    %p83 = scmp.eq.s32.totalorder %s21, 0
    %p84 = por %p82, %p83
    %p85 = scmp.ne.s32.totalorder %s73, %s74
    %p86 = scmp.eq.s32.totalorder %s22, 1
    %p87 = por %p85, %p86
    %p89 = scmp.ne.s32.totalorder %s74, %s88
    %p90 = scmp.eq.s32.totalorder %s22, 0
    %p91 = por %p89, %p90
    %s93 = sadd.s32 %s92, 1
    %p96 = scmp.eq.s32.totalorder %s16, 1
    %p97 = scmp.ne.s32.totalorder %s92, %s94
    %p98 = scmp.eq.s32.totalorder %s16, 0
    %p99 = por %p97, %p98
    %p100 = scmp.ne.s32.totalorder %s92, %s94
    %p101 = scmp.eq.s32.totalorder %s21, 1
    %p102 = por %p100, %p101
    %p103 = scmp.ne.s32.totalorder %s94, %s95
    %p104 = scmp.eq.s32.totalorder %s21, 0
    %p105 = por %p103, %p104
    %p106 = scmp.ne.s32.totalorder %s94, %s95
    %p107 = scmp.eq.s32.totalorder %s22, 1
    %p108 = por %p106, %p107
    %p110 = scmp.ne.s32.totalorder %s95, %s109
    %p111 = scmp.eq.s32.totalorder %s22, 0
    %p112 = por %p110, %p111
    %s114 = sadd.s32 %s113, 1
    %p117 = scmp.eq.s32.totalorder %s16, 1
    %p118 = scmp.ne.s32.totalorder %s113, %s115
    %p119 = scmp.eq.s32.totalorder %s16, 0
    %p120 = por %p118, %p119
    %p121 = scmp.ne.s32.totalorder %s113, %s115
    %p122 = scmp.eq.s32.totalorder %s21, 1
    %p123 = por %p121, %p122
    %p124 = scmp.ne.s32.totalorder %s115, %s116
    %p125 = scmp.eq.s32.totalorder %s21, 0
    %p126 = por %p124, %p125
    %p127 = scmp.ne.s32.totalorder %s115, %s116
    %p128 = scmp.eq.s32.totalorder %s22, 1
    %p129 = por %p127, %p128
    %p131 = scmp.ne.s32.totalorder %s116, %s130
    %p132 = scmp.eq.s32.totalorder %s22, 0
    %p133 = por %p131, %p132
    %s135 = sadd.s32 %s134, 1
    %p138 = scmp.eq.s32.totalorder %s16, 1
    %p139 = scmp.ne.s32.totalorder %s134, %s136
    %p140 = scmp.eq.s32.totalorder %s16, 0
    %p141 = por %p139, %p140
    %p142 = scmp.ne.s32.totalorder %s134, %s136
    %p143 = scmp.eq.s32.totalorder %s21, 1
    %p144 = por %p142, %p143
    %p145 = scmp.ne.s32.totalorder %s136, %s137
    %p146 = scmp.eq.s32.totalorder %s21, 0
    %p147 = por %p145, %p146
    %p148 = scmp.ne.s32.totalorder %s136, %s137
    %p149 = scmp.eq.s32.totalorder %s22, 1
    %p150 = por %p148, %p149
    %p152 = scmp.ne.s32.totalorder %s137, %s151
    %p153 = scmp.eq.s32.totalorder %s22, 0
    %p154 = por %p152, %p153
    %s156 = sadd.s32 %s155, 1
    %p159 = scmp.eq.s32.totalorder %s16, 1
    %p160 = scmp.ne.s32.totalorder %s155, %s157
    %p161 = scmp.eq.s32.totalorder %s16, 0
    %p162 = por %p160, %p161
    %p163 = scmp.ne.s32.totalorder %s155, %s157
    %p164 = scmp.eq.s32.totalorder %s21, 1
    %p165 = por %p163, %p164
    %p166 = scmp.ne.s32.totalorder %s157, %s158
    %p167 = scmp.eq.s32.totalorder %s21, 0
    %p168 = por %p166, %p167
    %p169 = scmp.ne.s32.totalorder %s157, %s158
    %p170 = scmp.eq.s32.totalorder %s22, 1
    %p171 = por %p169, %p170
    %p173 = scmp.ne.s32.totalorder %s158, %s172
    %p174 = scmp.eq.s32.totalorder %s22, 0
    %p175 = por %p173, %p174
    %s177 = sadd.s32 %s176, 1
    %p180 = scmp.eq.s32.totalorder %s16, 1
    %p181 = scmp.ne.s32.totalorder %s176, %s178
    %p182 = scmp.eq.s32.totalorder %s16, 0
    %p183 = por %p181, %p182
    %p184 = scmp.ne.s32.totalorder %s176, %s178
    %p185 = scmp.eq.s32.totalorder %s21, 1
    %p186 = por %p184, %p185
    %p187 = scmp.ne.s32.totalorder %s178, %s179
    %p188 = scmp.eq.s32.totalorder %s21, 0
    %p189 = por %p187, %p188
    %p190 = scmp.ne.s32.totalorder %s178, %s179
    %p191 = scmp.eq.s32.totalorder %s22, 1
    %p192 = por %p190, %p191
    %p194 = scmp.ne.s32.totalorder %s179, %s193
    %p195 = scmp.eq.s32.totalorder %s22, 0
    %p196 = por %p194, %p195
    %s198 = sadd.s32 %s197, 1
    %p201 = scmp.eq.s32.totalorder %s16, 1
    %p202 = scmp.ne.s32.totalorder %s197, %s199
    %p203 = scmp.eq.s32.totalorder %s16, 0
    %p204 = por %p202, %p203
    %p205 = scmp.ne.s32.totalorder %s197, %s199
    %p206 = scmp.eq.s32.totalorder %s21, 1
    %p207 = por %p205, %p206
    %p208 = scmp.ne.s32.totalorder %s199, %s200
    %p209 = scmp.eq.s32.totalorder %s21, 0
    %p210 = por %p208, %p209
    %p211 = scmp.ne.s32.totalorder %s199, %s200
    %p212 = scmp.eq.s32.totalorder %s22, 1
    %p213 = por %p211, %p212
    %p215 = scmp.ne.s32.totalorder %s200, %s214
    %p216 = scmp.eq.s32.totalorder %s22, 0
    %p217 = por %p215, %p216
    %s218 = ssub.s32 %s16, %s23
    %p219 = scmp.eq.s32.totalorder %s218, 0
    %s221 = sadd.s32 %s220, 1
    %s222 = scalar_select %p219, %s220, %s221
    %p225 = pneg %p219
    %p226 = scmp.eq.s32.totalorder %s16, 1
    %p227 = por %p225, %p226
    %p228 = scmp.ne.s32.totalorder %s220, %s223
    %p229 = scmp.eq.s32.totalorder %s16, 0
    %p230 = por %p228, %p229
    %p231 = scmp.ne.s32.totalorder %s220, %s223
    %p232 = scmp.eq.s32.totalorder %s21, 1
    %p233 = por %p231, %p232
    %p234 = scmp.ne.s32.totalorder %s223, %s224
    %p235 = scmp.eq.s32.totalorder %s21, 0
    %p236 = por %p234, %p235
    %p237 = scmp.ne.s32.totalorder %s223, %s224
    %p238 = scmp.eq.s32.totalorder %s22, 1
    %p239 = por %p237, %p238
    %p241 = scmp.ne.s32.totalorder %s224, %s240
    %p242 = scmp.eq.s32.totalorder %s22, 0
    %p243 = por %p241, %p242
    %s244 = ssub.s32 %s16, %s23
    %p245 = scmp.eq.s32.totalorder %s244, 0
    %s247 = sadd.s32 %s246, 1
    %s248 = scalar_select %p245, %s246, %s247
    %p251 = pneg %p245
    %p252 = scmp.eq.s32.totalorder %s16, 1
    %p253 = por %p251, %p252
    %p254 = scmp.ne.s32.totalorder %s246, %s249
    %p255 = scmp.eq.s32.totalorder %s16, 0
    %p256 = por %p254, %p255
    %p257 = scmp.ne.s32.totalorder %s246, %s249
    %p258 = scmp.eq.s32.totalorder %s21, 1
    %p259 = por %p257, %p258
    %p260 = scmp.ne.s32.totalorder %s249, %s250
    %p261 = scmp.eq.s32.totalorder %s21, 0
    %p262 = por %p260, %p261
    %p263 = scmp.ne.s32.totalorder %s249, %s250
    %p264 = scmp.eq.s32.totalorder %s22, 1
    %p265 = por %p263, %p264
    %p267 = scmp.ne.s32.totalorder %s250, %s266
    %p268 = scmp.eq.s32.totalorder %s22, 0
    %p269 = por %p267, %p268
    %p270 = scmp.le.s32.totalorder 1, %s16
    %p271 = scmp.lt.s32.totalorder %s16, 3
    %p272 = pnand %p270, %p271
    %p273 = pneg %p272
    // Predicated region
    $region9: #{vae_forward.1} parent=5 // pred_check
      _
    $region10: #{vae_forward.1} parent=5 // pred_check_branch
      %275 = sbr.rel (%p272) target = $region12
    $region11: #{vae_forward.1} parent=5 // pred_region
      %s276 = ssub.s32 %s16, 1
      // Predicated region
      $region13: #{vae_forward.1} parent=11 // pred_check
        %p277 = pneg %p63
      $region14: #{vae_forward.1} parent=11 // pred_check_branch
        %279 = sbr.rel (%p277) target = $region16
      $region15: #{vae_forward.1} parent=11 // pred_region
        _
      $region16: #{vae_forward.1} parent=11 // pred_fallthru
        _
      // Predicated region
      $region17: #{vae_forward.1} parent=11 // pred_check
        %p280 = pneg %p84
      $region18: #{vae_forward.1} parent=11 // pred_check_branch
        %282 = sbr.rel (%p280) target = $region20
      $region19: #{vae_forward.1} parent=11 // pred_region
        _
      $region20: #{vae_forward.1} parent=11 // pred_fallthru
        _
      // Predicated region
      $region21: #{vae_forward.1} parent=11 // pred_check
        %p283 = pneg %p105
      $region22: #{vae_forward.1} parent=11 // pred_check_branch
        %285 = sbr.rel (%p283) target = $region24
      $region23: #{vae_forward.1} parent=11 // pred_region
        _
      $region24: #{vae_forward.1} parent=11 // pred_fallthru
        _
      // Predicated region
      $region25: #{vae_forward.1} parent=11 // pred_check
        %p286 = pneg %p126
      $region26: #{vae_forward.1} parent=11 // pred_check_branch
        %288 = sbr.rel (%p286) target = $region28
      $region27: #{vae_forward.1} parent=11 // pred_region
        _
      $region28: #{vae_forward.1} parent=11 // pred_fallthru
        _
      // Predicated region
      $region29: #{vae_forward.1} parent=11 // pred_check
        %p289 = pneg %p147
      $region30: #{vae_forward.1} parent=11 // pred_check_branch
        %291 = sbr.rel (%p289) target = $region32
      $region31: #{vae_forward.1} parent=11 // pred_region
        _
      $region32: #{vae_forward.1} parent=11 // pred_fallthru
        _
      // Predicated region
      $region33: #{vae_forward.1} parent=11 // pred_check
        %p292 = pneg %p168
      $region34: #{vae_forward.1} parent=11 // pred_check_branch
        %294 = sbr.rel (%p292) target = $region36
      $region35: #{vae_forward.1} parent=11 // pred_region
        _
      $region36: #{vae_forward.1} parent=11 // pred_fallthru
        _
      // Predicated region
      $region37: #{vae_forward.1} parent=11 // pred_check
        %p295 = pneg %p189
      $region38: #{vae_forward.1} parent=11 // pred_check_branch
        %297 = sbr.rel (%p295) target = $region40
      $region39: #{vae_forward.1} parent=11 // pred_region
        _
      $region40: #{vae_forward.1} parent=11 // pred_fallthru
        _
      // Predicated region
      $region41: #{vae_forward.1} parent=11 // pred_check
        %p298 = pneg %p210
      $region42: #{vae_forward.1} parent=11 // pred_check_branch
        %300 = sbr.rel (%p298) target = $region44
      $region43: #{vae_forward.1} parent=11 // pred_region
        _
      $region44: #{vae_forward.1} parent=11 // pred_fallthru
        _
    $region12: #{vae_forward.1} parent=5 // pred_fallthru
      _
    %p301 = scmp.lt.s32.totalorder %s16, 2
    // Predicated region
    $region45: #{vae_forward.1} parent=5 // pred_check
      %p302 = pneg %p301
    $region46: #{vae_forward.1} parent=5 // pred_check_branch
      %304 = sbr.rel (%p302) target = $region48
    $region47: #{vae_forward.1} parent=5 // pred_region
      // Predicated region
      $region49: #{vae_forward.1} parent=47 // pred_check
        %p305 = pneg %p36
      $region50: #{vae_forward.1} parent=47 // pred_check_branch
        %307 = sbr.rel (%p305) target = $region52
      $region51: #{vae_forward.1} parent=47 // pred_region
        %s308 = smul.u32 16, %s16
        %p309 = scmp.lt.s32.totalorder %s308, 31
        %s310 = scalar_select %p309, %s308, 31
        %s311 = smul.addr %s310, 7
        %s312 = smul.addr %s311, 8
        %s313 = scalar_lea.vmem %s0, %s312
        %s314 = smul.u32 16, %s16
      $region52: #{vae_forward.1} parent=47 // pred_fallthru
        _
      // Predicated region
      $region53: #{vae_forward.1} parent=47 // pred_check
        %p315 = pneg %p230
      $region54: #{vae_forward.1} parent=47 // pred_check_branch
        %317 = sbr.rel (%p315) target = $region56
      $region55: #{vae_forward.1} parent=47 // pred_region
        %s318 = smul.u32 16, %s16
        %p319 = scmp.lt.s32.totalorder %s318, 31
        %s320 = scalar_select %p319, %s318, 31
        %s321 = smul.addr %s320, 8
        %s322 = scalar_lea.vmem %s9, %s321
        %s323 = smul.u32 16, %s16
      $region56: #{vae_forward.1} parent=47 // pred_fallthru
        _
    $region48: #{vae_forward.1} parent=5 // pred_fallthru
      _
    %p324 = scmp.le.s32.totalorder 1, %s16
    %p325 = scmp.lt.s32.totalorder %s16, 3
    %p326 = pnand %p324, %p325
    %p327 = pneg %p326
    // Predicated region
    $region57: #{vae_forward.1} parent=5 // pred_check
      _
    $region58: #{vae_forward.1} parent=5 // pred_check_branch
      %329 = sbr.rel (%p326) target = $region60
    $region59: #{vae_forward.1} parent=5 // pred_region
      %s330 = ssub.s32 %s16, 1
      %s331 = smul.u32 16, %s21
      %p332 = scmp.lt.s32.totalorder %s331, 31
      %s333 = scalar_select %p332, %s331, 31
      %s334 = smul.addr %s333, 7
      %s335 = smul.addr %s334, 8
      %s336 = scalar_lea.vmem %s0, %s335
      %p337 = pneg %p42
      %p338 = pneg %p39
      %p339 = pneg %p63
      %p340 = pneg %p60
      %p341 = pneg %p84
      %p342 = pneg %p81
      %p343 = pneg %p105
      %p344 = pneg %p102
      %p345 = pneg %p126
      %p346 = pneg %p123
      %p347 = pneg %p147
      %p348 = pneg %p144
      %p349 = pneg %p168
      %p350 = pneg %p165
      %p351 = pneg %p189
      %p352 = pneg %p186
      %p353 = pneg %p210
      %p354 = pneg %p207
      %s355 = smul.u32 16, %s21
      %p356 = scmp.lt.s32.totalorder %s355, 31
      %s357 = scalar_select %p356, %s355, 31
      %s358 = smul.addr %s357, 8
      %s359 = scalar_lea.vmem %s9, %s358
      %p360 = pneg %p236
      %p361 = pneg %p233
      %p362 = pneg %p262
      %p363 = pneg %p259
      %s364 = smul.u32 16, %s21
      %p365 = scmp.lt.s32.totalorder %s364, 31
      %s366 = scalar_select %p365, %s364, 31
      %s367 = smul.addr %s366, 7
      %s368 = smul.addr %s367, 8
      %s369 = scalar_lea.vmem %s10, %s368
      %s370 = smul.u32 16, %s21
      %p371 = scmp.lt.s32.totalorder %s370, 31
      %s372 = scalar_select %p371, %s370, 31
      %s373 = smul.addr %s372, 7
      %s374 = smul.addr %s373, 8
      %s375 = scalar_lea.vmem %s0, %s374
      %s376 = smul.u32 16, %s21
      %s377 = smul.u32 16, %s21
      %p378 = scmp.lt.s32.totalorder %s377, 31
      %s379 = scalar_select %p378, %s377, 31
      %s380 = smul.addr %s379, 8
      %s381 = scalar_lea.vmem %s9, %s380
      %s382 = smul.u32 16, %s21
      %s383 = smul.u32 16, %s21
      %p384 = scmp.lt.s32.totalorder %s383, 31
      %s385 = scalar_select %p384, %s383, 31
      %s386 = smul.addr %s385, 7
      %s387 = smul.addr %s386, 8
      %s388 = scalar_lea.vmem %s10, %s387
      %s389 = smul.u32 16, %s21
      %v390 = vld [vmem:[%s375] sm:$0xff]
      %v391 = vld [vmem:[%s375 + $0x8] sm:$0xff]
      %v392 = vld [vmem:[%s375 + $0x10] sm:$0xff]
      %v393 = vld [vmem:[%s375 + $0x18] sm:$0xff]
      %v394 = vld [vmem:[%s375 + $0x20] sm:$0xff]
      %v395 = vld [vmem:[%s375 + $0x28] sm:$0xff]
      %v396 = vld [vmem:[%s375 + $0x30] sm:$0xff]
      %v397 = vld [vmem:[%s375 + $0x38] sm:$0xff]
      %v398 = vld [vmem:[%s375 + $0x40] sm:$0xff]
      %v399 = vld [vmem:[%s375 + $0x48] sm:$0xff]
      %v400 = vld [vmem:[%s375 + $0x50] sm:$0xff]
      %v401 = vld [vmem:[%s375 + $0x58] sm:$0xff]
      %v402 = vld [vmem:[%s375 + $0x60] sm:$0xff]
      %v403 = vld [vmem:[%s375 + $0x68] sm:$0xff]
      %v404 = vld [vmem:[%s375 + $0x70] sm:$0xff]
      %v405 = vld [vmem:[%s375 + $0x78] sm:$0xff]
      %v406 = vld [vmem:[%s375 + $0x80] sm:$0xff]
      %v407 = vld [vmem:[%s375 + $0x88] sm:$0xff]
      %v408 = vld [vmem:[%s375 + $0x90] sm:$0xff]
      %v409 = vld [vmem:[%s375 + $0x98] sm:$0xff]
      %v410 = vld [vmem:[%s375 + $0xa0] sm:$0xff]
      %v411 = vld [vmem:[%s375 + $0xa8] sm:$0xff]
      %v412 = vld [vmem:[%s375 + $0xb0] sm:$0xff]
      %v413 = vld [vmem:[%s375 + $0xb8] sm:$0xff]
      %v414 = vld [vmem:[%s375 + $0xc0] sm:$0xff]
      %v415 = vld [vmem:[%s375 + $0xc8] sm:$0xff]
      %v416 = vld [vmem:[%s375 + $0xd0] sm:$0xff]
      %v417 = vld [vmem:[%s375 + $0xd8] sm:$0xff]
      %v418 = vld [vmem:[%s375 + $0xe0] sm:$0xff]
      %v419 = vld [vmem:[%s375 + $0xe8] sm:$0xff]
      %v420 = vld [vmem:[%s375 + $0xf0] sm:$0xff]
      %v421 = vld [vmem:[%s375 + $0xf8] sm:$0xff]
      %v422 = vld [vmem:[%s375 + $0x100] sm:$0xff]
      %v423 = vld [vmem:[%s375 + $0x108] sm:$0xff]
      %v424 = vld [vmem:[%s375 + $0x110] sm:$0xff]
      %v425 = vld [vmem:[%s375 + $0x118] sm:$0xff]
      %v426 = vld [vmem:[%s375 + $0x120] sm:$0xff]
      %v427 = vld [vmem:[%s375 + $0x128] sm:$0xff]
      %v428 = vld [vmem:[%s375 + $0x130] sm:$0xff]
      %v429 = vld [vmem:[%s375 + $0x138] sm:$0xff]
      %v430 = vld [vmem:[%s375 + $0x140] sm:$0xff]
      %v431 = vld [vmem:[%s375 + $0x148] sm:$0xff]
      %v432 = vld [vmem:[%s375 + $0x150] sm:$0xff]
      %v433 = vld [vmem:[%s375 + $0x158] sm:$0xff]
      %v434 = vld [vmem:[%s375 + $0x160] sm:$0xff]
      %v435 = vld [vmem:[%s375 + $0x168] sm:$0xff]
      %v436 = vld [vmem:[%s375 + $0x170] sm:$0xff]
      %v437 = vld [vmem:[%s375 + $0x178] sm:$0xff]
      %v438 = vld [vmem:[%s375 + $0x180] sm:$0xff]
      %v439 = vld [vmem:[%s375 + $0x188] sm:$0xff]
      %v440 = vld [vmem:[%s375 + $0x190] sm:$0xff]
      %v441 = vld [vmem:[%s375 + $0x198] sm:$0xff]
      %v442 = vld [vmem:[%s375 + $0x1a0] sm:$0xff]
      %v443 = vld [vmem:[%s375 + $0x1a8] sm:$0xff]
      %v444 = vld [vmem:[%s375 + $0x1b0] sm:$0xff]
      %v445 = vld [vmem:[%s375 + $0x1b8] sm:$0xff]
      %v446 = vld [vmem:[%s375 + $0x1c0] sm:$0xff]
      %v447 = vld [vmem:[%s375 + $0x1c8] sm:$0xff]
      %v448 = vld [vmem:[%s375 + $0x1d0] sm:$0xff]
      %v449 = vld [vmem:[%s375 + $0x1d8] sm:$0xff]
      %v450 = vld [vmem:[%s375 + $0x1e0] sm:$0xff]
      %v451 = vld [vmem:[%s375 + $0x1e8] sm:$0xff]
      %v452 = vld [vmem:[%s375 + $0x1f0] sm:$0xff]
      %v453 = vld [vmem:[%s375 + $0x1f8] sm:$0xff]
      %v454 = vld [vmem:[%s375 + $0x200] sm:$0xff]
      %v455 = vld [vmem:[%s375 + $0x208] sm:$0xff]
      %v456 = vld [vmem:[%s375 + $0x210] sm:$0xff]
      %v457 = vld [vmem:[%s375 + $0x218] sm:$0xff]
      %v458 = vld [vmem:[%s375 + $0x220] sm:$0xff]
      %v459 = vld [vmem:[%s375 + $0x228] sm:$0xff]
      %v460 = vld [vmem:[%s375 + $0x230] sm:$0xff]
      %v461 = vld [vmem:[%s375 + $0x238] sm:$0xff]
      %v462 = vld [vmem:[%s375 + $0x240] sm:$0xff]
      %v463 = vld [vmem:[%s375 + $0x248] sm:$0xff]
      %v464 = vld [vmem:[%s375 + $0x250] sm:$0xff]
      %v465 = vld [vmem:[%s375 + $0x258] sm:$0xff]
      %v466 = vld [vmem:[%s375 + $0x260] sm:$0xff]
      %v467 = vld [vmem:[%s375 + $0x268] sm:$0xff]
      %v468 = vld [vmem:[%s375 + $0x270] sm:$0xff]
      %v469 = vld [vmem:[%s375 + $0x278] sm:$0xff]
      %v470 = vld [vmem:[%s375 + $0x280] sm:$0xff]
      %v471 = vld [vmem:[%s375 + $0x288] sm:$0xff]
      %v472 = vld [vmem:[%s375 + $0x290] sm:$0xff]
      %v473 = vld [vmem:[%s375 + $0x298] sm:$0xff]
      %v474 = vld [vmem:[%s375 + $0x2a0] sm:$0xff]
      %v475 = vld [vmem:[%s375 + $0x2a8] sm:$0xff]
      %v476 = vld [vmem:[%s375 + $0x2b0] sm:$0xff]
      %v477 = vld [vmem:[%s375 + $0x2b8] sm:$0xff]
      %v478 = vld [vmem:[%s375 + $0x2c0] sm:$0xff]
      %v479 = vld [vmem:[%s375 + $0x2c8] sm:$0xff]
      %v480 = vld [vmem:[%s375 + $0x2d0] sm:$0xff]
      %v481 = vld [vmem:[%s375 + $0x2d8] sm:$0xff]
      %v482 = vld [vmem:[%s375 + $0x2e0] sm:$0xff]
      %v483 = vld [vmem:[%s375 + $0x2e8] sm:$0xff]
      %v484 = vld [vmem:[%s375 + $0x2f0] sm:$0xff]
      %v485 = vld [vmem:[%s375 + $0x2f8] sm:$0xff]
      %v486 = vld [vmem:[%s375 + $0x300] sm:$0xff]
      %v487 = vld [vmem:[%s375 + $0x308] sm:$0xff]
      %v488 = vld [vmem:[%s375 + $0x310] sm:$0xff]
      %v489 = vld [vmem:[%s375 + $0x318] sm:$0xff]
      %v490 = vld [vmem:[%s375 + $0x320] sm:$0xff]
      %v491 = vld [vmem:[%s375 + $0x328] sm:$0xff]
      %v492 = vld [vmem:[%s375 + $0x330] sm:$0xff]
      %v493 = vld [vmem:[%s375 + $0x338] sm:$0xff]
      %v494 = vld [vmem:[%s375 + $0x340] sm:$0xff]
      %v495 = vld [vmem:[%s375 + $0x348] sm:$0xff]
      %v496 = vld [vmem:[%s375 + $0x350] sm:$0xff]
      %v497 = vld [vmem:[%s375 + $0x358] sm:$0xff]
      %v498 = vld [vmem:[%s375 + $0x360] sm:$0xff]
      %v499 = vld [vmem:[%s375 + $0x368] sm:$0xff]
      %v500 = vld [vmem:[%s375 + $0x370] sm:$0xff]
      %v501 = vld [vmem:[%s375 + $0x378] sm:$0xff]
      %v502 = vld [vmem:[%s1] sm:$0xff]
      %v503 = vld [vmem:[%s1 + $0x8] sm:$0xff]
      %v504 = vld [vmem:[%s1 + $0x10] sm:$0xff]
      %v505 = vld [vmem:[%s1 + $0x18] sm:$0xff]
      %v506 = vld [vmem:[%s1 + $0x20] sm:$0xff]
      %v507 = vld [vmem:[%s1 + $0x28] sm:$0xff]
      %v508 = vld [vmem:[%s1 + $0x30] sm:$0xff]
      %v509 = vld [vmem:[%s1 + $0x38] sm:$0xff]
      %v510 = vld [vmem:[%s1 + $0x40] sm:$0xff]
      %v511 = vld [vmem:[%s1 + $0x48] sm:$0xff]
      %v512 = vld [vmem:[%s1 + $0x50] sm:$0xff]
      %v513 = vld [vmem:[%s1 + $0x58] sm:$0xff]
      %v514 = vld [vmem:[%s1 + $0x60] sm:$0xff]
      %v515 = vld [vmem:[%s1 + $0x68] sm:$0xff]
      %v516 = vld [vmem:[%s1 + $0x70] sm:$0xff]
      %v517 = vld [vmem:[%s1 + $0x78] sm:$0xff]
      %v518 = vld [vmem:[%s1 + $0x80] sm:$0xff]
      %v519 = vld [vmem:[%s1 + $0x88] sm:$0xff]
      %v520 = vld [vmem:[%s1 + $0x90] sm:$0xff]
      %v521 = vld [vmem:[%s1 + $0x98] sm:$0xff]
      %v522 = vld [vmem:[%s1 + $0xa0] sm:$0xff]
      %v523 = vld [vmem:[%s1 + $0xa8] sm:$0xff]
      %v524 = vld [vmem:[%s1 + $0xb0] sm:$0xff]
      %v525 = vld [vmem:[%s1 + $0xb8] sm:$0xff]
      %v526 = vld [vmem:[%s1 + $0xc0] sm:$0xff]
      %v527 = vld [vmem:[%s1 + $0xc8] sm:$0xff]
      %v528 = vld [vmem:[%s1 + $0xd0] sm:$0xff]
      %v529 = vld [vmem:[%s1 + $0xd8] sm:$0xff]
      %v530 = vld [vmem:[%s1 + $0xe0] sm:$0xff]
      %v531 = vld [vmem:[%s1 + $0xe8] sm:$0xff]
      %v532 = vld [vmem:[%s1 + $0xf0] sm:$0xff]
      %v533 = vld [vmem:[%s1 + $0xf8] sm:$0xff]
      %v534 = vld [vmem:[%s1 + $0x100] sm:$0xff]
      %v535 = vld [vmem:[%s1 + $0x108] sm:$0xff]
      %v536 = vld [vmem:[%s1 + $0x110] sm:$0xff]
      %v537 = vld [vmem:[%s1 + $0x118] sm:$0xff]
      %v538 = vld [vmem:[%s1 + $0x120] sm:$0xff]
      %v539 = vld [vmem:[%s1 + $0x128] sm:$0xff]
      %v540 = vld [vmem:[%s1 + $0x130] sm:$0xff]
      %v541 = vld [vmem:[%s1 + $0x138] sm:$0xff]
      %v542 = vld [vmem:[%s1 + $0x140] sm:$0xff]
      %v543 = vld [vmem:[%s1 + $0x148] sm:$0xff]
      %v544 = vld [vmem:[%s1 + $0x150] sm:$0xff]
      %v545 = vld [vmem:[%s1 + $0x158] sm:$0xff]
      %v546 = vld [vmem:[%s1 + $0x160] sm:$0xff]
      %v547 = vld [vmem:[%s1 + $0x168] sm:$0xff]
      %v548 = vld [vmem:[%s1 + $0x170] sm:$0xff]
      %v549 = vld [vmem:[%s1 + $0x178] sm:$0xff]
      %v550 = vld [vmem:[%s1 + $0x180] sm:$0xff]
      %v551 = vld [vmem:[%s1 + $0x188] sm:$0xff]
      %v552 = vld [vmem:[%s1 + $0x190] sm:$0xff]
      %v553 = vld [vmem:[%s1 + $0x198] sm:$0xff]
      %v554 = vld [vmem:[%s1 + $0x1a0] sm:$0xff]
      %v555 = vld [vmem:[%s1 + $0x1a8] sm:$0xff]
      %v556 = vld [vmem:[%s1 + $0x1b0] sm:$0xff]
      %v557 = vld [vmem:[%s1 + $0x1b8] sm:$0xff]
      %v558 = vld [vmem:[%s1 + $0x1c0] sm:$0xff]
      %v559 = vld [vmem:[%s1 + $0x1c8] sm:$0xff]
      %v560 = vld [vmem:[%s1 + $0x1d0] sm:$0xff]
      %v561 = vld [vmem:[%s1 + $0x1d8] sm:$0xff]
      %v562 = vld [vmem:[%s1 + $0x1e0] sm:$0xff]
      %v563 = vld [vmem:[%s1 + $0x1e8] sm:$0xff]
      %v564 = vld [vmem:[%s1 + $0x1f0] sm:$0xff]
      %v565 = vld [vmem:[%s1 + $0x1f8] sm:$0xff]
      %v566 = vld [vmem:[%s1 + $0x200] sm:$0xff]
      %v567 = vld [vmem:[%s1 + $0x208] sm:$0xff]
      %v568 = vld [vmem:[%s1 + $0x210] sm:$0xff]
      %v569 = vld [vmem:[%s1 + $0x218] sm:$0xff]
      %v570 = vld [vmem:[%s1 + $0x220] sm:$0xff]
      %v571 = vld [vmem:[%s1 + $0x228] sm:$0xff]
      %v572 = vld [vmem:[%s1 + $0x230] sm:$0xff]
      %v573 = vld [vmem:[%s1 + $0x238] sm:$0xff]
      %v574 = vld [vmem:[%s1 + $0x240] sm:$0xff]
      %v575 = vld [vmem:[%s1 + $0x248] sm:$0xff]
      %v576 = vld [vmem:[%s1 + $0x250] sm:$0xff]
      %v577 = vld [vmem:[%s1 + $0x258] sm:$0xff]
      %v578 = vld [vmem:[%s1 + $0x260] sm:$0xff]
      %v579 = vld [vmem:[%s1 + $0x268] sm:$0xff]
      %v580 = vld [vmem:[%s1 + $0x270] sm:$0xff]
      %v581 = vld [vmem:[%s1 + $0x278] sm:$0xff]
      %v582 = vld [vmem:[%s1 + $0x280] sm:$0xff]
      %v583 = vld [vmem:[%s1 + $0x288] sm:$0xff]
      %v584 = vld [vmem:[%s1 + $0x290] sm:$0xff]
      %v585 = vld [vmem:[%s1 + $0x298] sm:$0xff]
      %v586 = vld [vmem:[%s1 + $0x2a0] sm:$0xff]
      %v587 = vld [vmem:[%s1 + $0x2a8] sm:$0xff]
      %v588 = vld [vmem:[%s1 + $0x2b0] sm:$0xff]
      %v589 = vld [vmem:[%s1 + $0x2b8] sm:$0xff]
      %v590 = vld [vmem:[%s1 + $0x2c0] sm:$0xff]
      %v591 = vld [vmem:[%s1 + $0x2c8] sm:$0xff]
      %v592 = vld [vmem:[%s1 + $0x2d0] sm:$0xff]
      %v593 = vld [vmem:[%s1 + $0x2d8] sm:$0xff]
      %v594 = vld [vmem:[%s1 + $0x2e0] sm:$0xff]
      %v595 = vld [vmem:[%s1 + $0x2e8] sm:$0xff]
      %v596 = vld [vmem:[%s1 + $0x2f0] sm:$0xff]
      %v597 = vld [vmem:[%s1 + $0x2f8] sm:$0xff]
      %v598 = vld [vmem:[%s1 + $0x300] sm:$0xff]
      %v599 = vld [vmem:[%s1 + $0x308] sm:$0xff]
      %v600 = vld [vmem:[%s1 + $0x310] sm:$0xff]
      %v601 = vld [vmem:[%s1 + $0x318] sm:$0xff]
      %v602 = vld [vmem:[%s1 + $0x320] sm:$0xff]
      %v603 = vld [vmem:[%s1 + $0x328] sm:$0xff]
      %v604 = vld [vmem:[%s1 + $0x330] sm:$0xff]
      %v605 = vld [vmem:[%s1 + $0x338] sm:$0xff]
      %v606 = vld [vmem:[%s1 + $0x340] sm:$0xff]
      %v607 = vld [vmem:[%s1 + $0x348] sm:$0xff]
      %v608 = vld [vmem:[%s1 + $0x350] sm:$0xff]
      %v609 = vld [vmem:[%s1 + $0x358] sm:$0xff]
      %v610 = vld [vmem:[%s1 + $0x360] sm:$0xff]
      %v611 = vld [vmem:[%s1 + $0x368] sm:$0xff]
      %v612 = vld [vmem:[%s1 + $0x370] sm:$0xff]
      %v613 = vld [vmem:[%s1 + $0x378] sm:$0xff]
      %v614 = vld [vmem:[%s1 + $0x380] sm:$0xff]
      %v615 = vld [vmem:[%s1 + $0x388] sm:$0xff]
      %v616 = vld [vmem:[%s1 + $0x390] sm:$0xff]
      %v617 = vld [vmem:[%s1 + $0x398] sm:$0xff]
      %v618 = vld [vmem:[%s1 + $0x3a0] sm:$0xff]
      %v619 = vld [vmem:[%s1 + $0x3a8] sm:$0xff]
      %v620 = vld [vmem:[%s1 + $0x3b0] sm:$0xff]
      %v621 = vld [vmem:[%s1 + $0x3b8] sm:$0xff]
      %v622 = vld [vmem:[%s1 + $0x3c0] sm:$0xff]
      %v623 = vld [vmem:[%s1 + $0x3c8] sm:$0xff]
      %v624 = vld [vmem:[%s1 + $0x3d0] sm:$0xff]
      %v625 = vld [vmem:[%s1 + $0x3d8] sm:$0xff]
      %v626 = vld [vmem:[%s1 + $0x3e0] sm:$0xff]
      %v627 = vld [vmem:[%s1 + $0x3e8] sm:$0xff]
      %v628 = vld [vmem:[%s1 + $0x3f0] sm:$0xff]
      %v629 = vld [vmem:[%s1 + $0x3f8] sm:$0xff]
      %v630 = vld [vmem:[%s1 + $0x400] sm:$0xff]
      %v631 = vld [vmem:[%s1 + $0x408] sm:$0xff]
      %v632 = vld [vmem:[%s1 + $0x410] sm:$0xff]
      %v633 = vld [vmem:[%s1 + $0x418] sm:$0xff]
      %v634 = vld [vmem:[%s1 + $0x420] sm:$0xff]
      %v635 = vld [vmem:[%s1 + $0x428] sm:$0xff]
      %v636 = vld [vmem:[%s1 + $0x430] sm:$0xff]
      %v637 = vld [vmem:[%s1 + $0x438] sm:$0xff]
      %v638 = vld [vmem:[%s1 + $0x440] sm:$0xff]
      %v639 = vld [vmem:[%s1 + $0x448] sm:$0xff]
      %v640 = vld [vmem:[%s1 + $0x450] sm:$0xff]
      %v641 = vld [vmem:[%s1 + $0x458] sm:$0xff]
      %v642 = vld [vmem:[%s1 + $0x460] sm:$0xff]
      %v643 = vld [vmem:[%s1 + $0x468] sm:$0xff]
      %v644 = vld [vmem:[%s1 + $0x470] sm:$0xff]
      %v645 = vld [vmem:[%s1 + $0x478] sm:$0xff]
      %v646 = vld [vmem:[%s1 + $0x480] sm:$0xff]
      %v647 = vld [vmem:[%s1 + $0x488] sm:$0xff]
      %v648 = vld [vmem:[%s1 + $0x490] sm:$0xff]
      %v649 = vld [vmem:[%s1 + $0x498] sm:$0xff]
      %v650 = vld [vmem:[%s1 + $0x4a0] sm:$0xff]
      %v651 = vld [vmem:[%s1 + $0x4a8] sm:$0xff]
      %v652 = vld [vmem:[%s1 + $0x4b0] sm:$0xff]
      %v653 = vld [vmem:[%s1 + $0x4b8] sm:$0xff]
      %v654 = vld [vmem:[%s1 + $0x4c0] sm:$0xff]
      %v655 = vld [vmem:[%s1 + $0x4c8] sm:$0xff]
      %v656 = vld [vmem:[%s1 + $0x4d0] sm:$0xff]
      %v657 = vld [vmem:[%s1 + $0x4d8] sm:$0xff]
      %v658 = vld [vmem:[%s1 + $0x4e0] sm:$0xff]
      %v659 = vld [vmem:[%s1 + $0x4e8] sm:$0xff]
      %v660 = vld [vmem:[%s1 + $0x4f0] sm:$0xff]
      %v661 = vld [vmem:[%s1 + $0x4f8] sm:$0xff]
      %v662 = vld [vmem:[%s1 + $0x500] sm:$0xff]
      %v663 = vld [vmem:[%s1 + $0x508] sm:$0xff]
      %v664 = vld [vmem:[%s1 + $0x510] sm:$0xff]
      %v665 = vld [vmem:[%s1 + $0x518] sm:$0xff]
      %v666 = vld [vmem:[%s1 + $0x520] sm:$0xff]
      %v667 = vld [vmem:[%s1 + $0x528] sm:$0xff]
      %v668 = vld [vmem:[%s1 + $0x530] sm:$0xff]
      %v669 = vld [vmem:[%s1 + $0x538] sm:$0xff]
      %v670 = vld [vmem:[%s1 + $0x540] sm:$0xff]
      %v671 = vld [vmem:[%s1 + $0x548] sm:$0xff]
      %v672 = vld [vmem:[%s1 + $0x550] sm:$0xff]
      %v673 = vld [vmem:[%s1 + $0x558] sm:$0xff]
      %v674 = vld [vmem:[%s1 + $0x560] sm:$0xff]
      %v675 = vld [vmem:[%s1 + $0x568] sm:$0xff]
      %v676 = vld [vmem:[%s1 + $0x570] sm:$0xff]
      %v677 = vld [vmem:[%s1 + $0x578] sm:$0xff]
      %v678 = vld [vmem:[%s1 + $0x580] sm:$0xff]
      %v679 = vld [vmem:[%s1 + $0x588] sm:$0xff]
      %v680 = vld [vmem:[%s1 + $0x590] sm:$0xff]
      %v681 = vld [vmem:[%s1 + $0x598] sm:$0xff]
      %v682 = vld [vmem:[%s1 + $0x5a0] sm:$0xff]
      %v683 = vld [vmem:[%s1 + $0x5a8] sm:$0xff]
      %v684 = vld [vmem:[%s1 + $0x5b0] sm:$0xff]
      %v685 = vld [vmem:[%s1 + $0x5b8] sm:$0xff]
      %v686 = vld [vmem:[%s1 + $0x5c0] sm:$0xff]
      %v687 = vld [vmem:[%s1 + $0x5c8] sm:$0xff]
      %v688 = vld [vmem:[%s1 + $0x5d0] sm:$0xff]
      %v689 = vld [vmem:[%s1 + $0x5d8] sm:$0xff]
      %v690 = vld [vmem:[%s1 + $0x5e0] sm:$0xff]
      %v691 = vld [vmem:[%s1 + $0x5e8] sm:$0xff]
      %v692 = vld [vmem:[%s1 + $0x5f0] sm:$0xff]
      %v693 = vld [vmem:[%s1 + $0x5f8] sm:$0xff]
      %v694 = vld [vmem:[%s1 + $0x600] sm:$0xff]
      %v695 = vld [vmem:[%s1 + $0x608] sm:$0xff]
      %v696 = vld [vmem:[%s1 + $0x610] sm:$0xff]
      %v697 = vld [vmem:[%s1 + $0x618] sm:$0xff]
      %v698 = vld [vmem:[%s1 + $0x620] sm:$0xff]
      %v699 = vld [vmem:[%s1 + $0x628] sm:$0xff]
      %v700 = vld [vmem:[%s1 + $0x630] sm:$0xff]
      %v701 = vld [vmem:[%s1 + $0x638] sm:$0xff]
      %v702 = vld [vmem:[%s1 + $0x640] sm:$0xff]
      %v703 = vld [vmem:[%s1 + $0x648] sm:$0xff]
      %v704 = vld [vmem:[%s1 + $0x650] sm:$0xff]
      %v705 = vld [vmem:[%s1 + $0x658] sm:$0xff]
      %v706 = vld [vmem:[%s1 + $0x660] sm:$0xff]
      %v707 = vld [vmem:[%s1 + $0x668] sm:$0xff]
      %v708 = vld [vmem:[%s1 + $0x670] sm:$0xff]
      %v709 = vld [vmem:[%s1 + $0x678] sm:$0xff]
      %v710 = vld [vmem:[%s1 + $0x680] sm:$0xff]
      %v711 = vld [vmem:[%s1 + $0x688] sm:$0xff]
      %v712 = vld [vmem:[%s1 + $0x690] sm:$0xff]
      %v713 = vld [vmem:[%s1 + $0x698] sm:$0xff]
      %v714 = vld [vmem:[%s1 + $0x6a0] sm:$0xff]
      %v715 = vld [vmem:[%s1 + $0x6a8] sm:$0xff]
      %v716 = vld [vmem:[%s1 + $0x6b0] sm:$0xff]
      %v717 = vld [vmem:[%s1 + $0x6b8] sm:$0xff]
      %v718 = vld [vmem:[%s1 + $0x6c0] sm:$0xff]
      %v719 = vld [vmem:[%s1 + $0x6c8] sm:$0xff]
      %v720 = vld [vmem:[%s1 + $0x6d0] sm:$0xff]
      %v721 = vld [vmem:[%s1 + $0x6d8] sm:$0xff]
      %v722 = vld [vmem:[%s1 + $0x6e0] sm:$0xff]
      %v723 = vld [vmem:[%s1 + $0x6e8] sm:$0xff]
      %v724 = vld [vmem:[%s1 + $0x6f0] sm:$0xff]
      %v725 = vld [vmem:[%s1 + $0x6f8] sm:$0xff]
      %v726 = vld [vmem:[%s2] sm:$0x3]
      %v728 = vlaneseq
      %v729 = vshrl.u32 %v728, 7
      %v730 = vsub.s32 0, %v729
      %v731 = vrot.slane %v726, %v730
      %v732 = vlaneseq
      %v733 = vshrl.u32 %v732, 7
      %v734 = vsub.s32 1, %v733
      %v735 = vrot.slane %v726, %v734
      %738 = vmatprep.subr.mxu0 %v533
      %739 = vmatpush1.msra.mxu0 %v532
      %740 = vmatprep.subr.mxu0 %v531
      %741 = vmatpush1.msra.mxu0 %v530
      %742 = vmatprep.subr.mxu0 %v529
      %743 = vmatpush1.msra.mxu0 %v528
      %744 = vmatprep.subr.mxu0 %v527
      %745 = vmatpush1.msra.mxu0 %v526
      %746 = vmatprep.subr.mxu0 %v525
      %747 = vmatpush1.msra.mxu0 %v524
      %748 = vmatprep.subr.mxu0 %v523
      %749 = vmatpush1.msra.mxu0 %v522
      %750 = vmatprep.subr.mxu0 %v521
      %751 = vmatpush1.msra.mxu0 %v520
      %752 = vmatprep.subr.mxu0 %v519
      %753 = vmatpush1.msra.mxu0 %v518
      %754 = vmatprep.subr.mxu0 %v517
      %755 = vmatpush1.msra.mxu0 %v516
      %756 = vmatprep.subr.mxu0 %v515
      %757 = vmatpush1.msra.mxu0 %v514
      %758 = vmatprep.subr.mxu0 %v513
      %759 = vmatpush1.msra.mxu0 %v512
      %760 = vmatprep.subr.mxu0 %v511
      %761 = vmatpush1.msra.mxu0 %v510
      %762 = vmatprep.subr.mxu0 %v509
      %763 = vmatpush1.msra.mxu0 %v508
      %764 = vmatprep.subr.mxu0 %v507
      %765 = vmatpush1.msra.mxu0 %v506
      %766 = vmatprep.subr.mxu0 %v505
      %767 = vmatpush1.msra.mxu0 %v504
      %768 = vmatprep.subr.mxu0 %v503
      %769 = vmatpush1.msra.mxu0 %v502
      %770 = vmatprep.subr.mxu0 %v565
      %771 = vmatpush2.msra.mxu0 %v564
      %772 = vmatprep.subr.mxu0 %v563
      %773 = vmatpush2.msra.mxu0 %v562
      %774 = vmatprep.subr.mxu0 %v561
      %775 = vmatpush2.msra.mxu0 %v560
      %776 = vmatprep.subr.mxu0 %v559
      %777 = vmatpush2.msra.mxu0 %v558
      %778 = vmatprep.subr.mxu0 %v557
      %779 = vmatpush2.msra.mxu0 %v556
      %780 = vmatprep.subr.mxu0 %v555
      %781 = vmatpush2.msra.mxu0 %v554
      %782 = vmatprep.subr.mxu0 %v553
      %783 = vmatpush2.msra.mxu0 %v552
      %784 = vmatprep.subr.mxu0 %v551
      %785 = vmatpush2.msra.mxu0 %v550
      %786 = vmatprep.subr.mxu0 %v549
      %787 = vmatpush2.msra.mxu0 %v548
      %788 = vmatprep.subr.mxu0 %v547
      %789 = vmatpush2.msra.mxu0 %v546
      %790 = vmatprep.subr.mxu0 %v545
      %791 = vmatpush2.msra.mxu0 %v544
      %792 = vmatprep.subr.mxu0 %v543
      %793 = vmatpush2.msra.mxu0 %v542
      %794 = vmatprep.subr.mxu0 %v541
      %795 = vmatpush2.msra.mxu0 %v540
      %796 = vmatprep.subr.mxu0 %v539
      %797 = vmatpush2.msra.mxu0 %v538
      %798 = vmatprep.subr.mxu0 %v537
      %799 = vmatpush2.msra.mxu0 %v536
      %800 = vmatprep.subr.mxu0 %v535
      %801 = vmatpush2.msra.mxu0 %v534
      %802 = vmatprep.mubr.f32.mxu0 %v391
      %803 = vmatmul.mubr.f32.gmra.mxu0 %v390
      %v804 = vpop.f32.mrf.mxu0
      %v805 = vadd.f32 %v731, %v804
      %v806 = vpop.f32.mrf.mxu0
      %v807 = vadd.f32 %v735, %v806
      %808 = vmatprep.mubr.f32.mxu0 %v398
      %809 = vmatmul.mubr.f32.gmra.mxu0 %v397
      %v810 = vpop.f32.mrf.mxu0
      %v811 = vadd.f32 %v731, %v810
      %v812 = vpop.f32.mrf.mxu0
      %v813 = vadd.f32 %v735, %v812
      %814 = vmatprep.mubr.f32.mxu0 %v405
      %815 = vmatmul.mubr.f32.gmra.mxu0 %v404
      %v816 = vpop.f32.mrf.mxu0
      %v817 = vadd.f32 %v731, %v816
      %v818 = vpop.f32.mrf.mxu0
      %v819 = vadd.f32 %v735, %v818
      %820 = vmatprep.mubr.f32.mxu0 %v412
      %821 = vmatmul.mubr.f32.gmra.mxu0 %v411
      %v822 = vpop.f32.mrf.mxu0
      %v823 = vadd.f32 %v731, %v822
      %v824 = vpop.f32.mrf.mxu0
      %v825 = vadd.f32 %v735, %v824
      %826 = vmatprep.mubr.f32.mxu0 %v419
      %827 = vmatmul.mubr.f32.gmra.mxu0 %v418
      %v828 = vpop.f32.mrf.mxu0
      %v829 = vadd.f32 %v731, %v828
      %v830 = vpop.f32.mrf.mxu0
      %v831 = vadd.f32 %v735, %v830
      %832 = vmatprep.mubr.f32.mxu0 %v426
      %833 = vmatmul.mubr.f32.gmra.mxu0 %v425
      %v834 = vpop.f32.mrf.mxu0
      %v835 = vadd.f32 %v731, %v834
      %v836 = vpop.f32.mrf.mxu0
      %v837 = vadd.f32 %v735, %v836
      %838 = vmatprep.mubr.f32.mxu0 %v433
      %839 = vmatmul.mubr.f32.gmra.mxu0 %v432
      %v840 = vpop.f32.mrf.mxu0
      %v841 = vadd.f32 %v731, %v840
      %v842 = vpop.f32.mrf.mxu0
      %v843 = vadd.f32 %v735, %v842
      %844 = vmatprep.mubr.f32.mxu0 %v440
      %845 = vmatmul.mubr.f32.gmra.mxu0 %v439
      %v846 = vpop.f32.mrf.mxu0
      %v847 = vadd.f32 %v731, %v846
      %v848 = vpop.f32.mrf.mxu0
      %v849 = vadd.f32 %v735, %v848
      %850 = vmatprep.mubr.f32.mxu0 %v447
      %851 = vmatmul.mubr.f32.gmra.mxu0 %v446
      %v852 = vpop.f32.mrf.mxu0
      %v853 = vadd.f32 %v731, %v852
      %v854 = vpop.f32.mrf.mxu0
      %v855 = vadd.f32 %v735, %v854
      %856 = vmatprep.mubr.f32.mxu0 %v454
      %857 = vmatmul.mubr.f32.gmra.mxu0 %v453
      %v858 = vpop.f32.mrf.mxu0
      %v859 = vadd.f32 %v731, %v858
      %v860 = vpop.f32.mrf.mxu0
      %v861 = vadd.f32 %v735, %v860
      %862 = vmatprep.mubr.f32.mxu0 %v461
      %863 = vmatmul.mubr.f32.gmra.mxu0 %v460
      %v864 = vpop.f32.mrf.mxu0
      %v865 = vadd.f32 %v731, %v864
      %v866 = vpop.f32.mrf.mxu0
      %v867 = vadd.f32 %v735, %v866
      %868 = vmatprep.mubr.f32.mxu0 %v468
      %869 = vmatmul.mubr.f32.gmra.mxu0 %v467
      %v870 = vpop.f32.mrf.mxu0
      %v871 = vadd.f32 %v731, %v870
      %v872 = vpop.f32.mrf.mxu0
      %v873 = vadd.f32 %v735, %v872
      %874 = vmatprep.mubr.f32.mxu0 %v475
      %875 = vmatmul.mubr.f32.gmra.mxu0 %v474
      %v876 = vpop.f32.mrf.mxu0
      %v877 = vadd.f32 %v731, %v876
      %v878 = vpop.f32.mrf.mxu0
      %v879 = vadd.f32 %v735, %v878
      %880 = vmatprep.mubr.f32.mxu0 %v482
      %881 = vmatmul.mubr.f32.gmra.mxu0 %v481
      %v882 = vpop.f32.mrf.mxu0
      %v883 = vadd.f32 %v731, %v882
      %v884 = vpop.f32.mrf.mxu0
      %v885 = vadd.f32 %v735, %v884
      %886 = vmatprep.mubr.f32.mxu0 %v489
      %887 = vmatmul.mubr.f32.gmra.mxu0 %v488
      %v888 = vpop.f32.mrf.mxu0
      %v889 = vadd.f32 %v731, %v888
      %v890 = vpop.f32.mrf.mxu0
      %v891 = vadd.f32 %v735, %v890
      %892 = vmatprep.mubr.f32.mxu0 %v496
      %893 = vmatmul.mubr.f32.gmra.mxu0 %v495
      %v894 = vpop.f32.mrf.mxu0
      %v895 = vadd.f32 %v731, %v894
      %v896 = vpop.f32.mrf.mxu0
      %v897 = vadd.f32 %v735, %v896
      %898 = vdwg.mxu0
      %899 = vmatprep.subr.mxu0 %v597
      %900 = vmatpush1.msra.mxu0 %v596
      %901 = vmatprep.subr.mxu0 %v595
      %902 = vmatpush1.msra.mxu0 %v594
      %903 = vmatprep.subr.mxu0 %v593
      %904 = vmatpush1.msra.mxu0 %v592
      %905 = vmatprep.subr.mxu0 %v591
      %906 = vmatpush1.msra.mxu0 %v590
      %907 = vmatprep.subr.mxu0 %v589
      %908 = vmatpush1.msra.mxu0 %v588
      %909 = vmatprep.subr.mxu0 %v587
      %910 = vmatpush1.msra.mxu0 %v586
      %911 = vmatprep.subr.mxu0 %v585
      %912 = vmatpush1.msra.mxu0 %v584
      %913 = vmatprep.subr.mxu0 %v583
      %914 = vmatpush1.msra.mxu0 %v582
      %915 = vmatprep.subr.mxu0 %v581
      %916 = vmatpush1.msra.mxu0 %v580
      %917 = vmatprep.subr.mxu0 %v579
      %918 = vmatpush1.msra.mxu0 %v578
      %919 = vmatprep.subr.mxu0 %v577
      %920 = vmatpush1.msra.mxu0 %v576
      %921 = vmatprep.subr.mxu0 %v575
      %922 = vmatpush1.msra.mxu0 %v574
      %923 = vmatprep.subr.mxu0 %v573
      %924 = vmatpush1.msra.mxu0 %v572
      %925 = vmatprep.subr.mxu0 %v571
      %926 = vmatpush1.msra.mxu0 %v570
      %927 = vmatprep.subr.mxu0 %v569
      %928 = vmatpush1.msra.mxu0 %v568
      %929 = vmatprep.subr.mxu0 %v567
      %930 = vmatpush1.msra.mxu0 %v566
      %931 = vmatprep.subr.mxu0 %v629
      %932 = vmatpush2.msra.mxu0 %v628
      %933 = vmatprep.subr.mxu0 %v627
      %934 = vmatpush2.msra.mxu0 %v626
      %935 = vmatprep.subr.mxu0 %v625
      %936 = vmatpush2.msra.mxu0 %v624
      %937 = vmatprep.subr.mxu0 %v623
      %938 = vmatpush2.msra.mxu0 %v622
      %939 = vmatprep.subr.mxu0 %v621
      %940 = vmatpush2.msra.mxu0 %v620
      %941 = vmatprep.subr.mxu0 %v619
      %942 = vmatpush2.msra.mxu0 %v618
      %943 = vmatprep.subr.mxu0 %v617
      %944 = vmatpush2.msra.mxu0 %v616
      %945 = vmatprep.subr.mxu0 %v615
      %946 = vmatpush2.msra.mxu0 %v614
      %947 = vmatprep.subr.mxu0 %v613
      %948 = vmatpush2.msra.mxu0 %v612
      %949 = vmatprep.subr.mxu0 %v611
      %950 = vmatpush2.msra.mxu0 %v610
      %951 = vmatprep.subr.mxu0 %v609
      %952 = vmatpush2.msra.mxu0 %v608
      %953 = vmatprep.subr.mxu0 %v607
      %954 = vmatpush2.msra.mxu0 %v606
      %955 = vmatprep.subr.mxu0 %v605
      %956 = vmatpush2.msra.mxu0 %v604
      %957 = vmatprep.subr.mxu0 %v603
      %958 = vmatpush2.msra.mxu0 %v602
      %959 = vmatprep.subr.mxu0 %v601
      %960 = vmatpush2.msra.mxu0 %v600
      %961 = vmatprep.subr.mxu0 %v599
      %962 = vmatpush2.msra.mxu0 %v598
      %963 = vmatprep.mubr.f32.mxu0 %v393
      %964 = vmatmul.mubr.f32.gmra.mxu0 %v392
      %v965 = vpop.f32.mrf.mxu0
      %v966 = vadd.f32 %v805, %v965
      %v967 = vpop.f32.mrf.mxu0
      %v968 = vadd.f32 %v807, %v967
      %969 = vmatprep.mubr.f32.mxu0 %v400
      %970 = vmatmul.mubr.f32.gmra.mxu0 %v399
      %v971 = vpop.f32.mrf.mxu0
      %v972 = vadd.f32 %v811, %v971
      %v973 = vpop.f32.mrf.mxu0
      %v974 = vadd.f32 %v813, %v973
      %975 = vmatprep.mubr.f32.mxu0 %v407
      %976 = vmatmul.mubr.f32.gmra.mxu0 %v406
      %v977 = vpop.f32.mrf.mxu0
      %v978 = vadd.f32 %v817, %v977
      %v979 = vpop.f32.mrf.mxu0
      %v980 = vadd.f32 %v819, %v979
      %981 = vmatprep.mubr.f32.mxu0 %v414
      %982 = vmatmul.mubr.f32.gmra.mxu0 %v413
      %v983 = vpop.f32.mrf.mxu0
      %v984 = vadd.f32 %v823, %v983
      %v985 = vpop.f32.mrf.mxu0
      %v986 = vadd.f32 %v825, %v985
      %987 = vmatprep.mubr.f32.mxu0 %v421
      %988 = vmatmul.mubr.f32.gmra.mxu0 %v420
      %v989 = vpop.f32.mrf.mxu0
      %v990 = vadd.f32 %v829, %v989
      %v991 = vpop.f32.mrf.mxu0
      %v992 = vadd.f32 %v831, %v991
      %993 = vmatprep.mubr.f32.mxu0 %v428
      %994 = vmatmul.mubr.f32.gmra.mxu0 %v427
      %v995 = vpop.f32.mrf.mxu0
      %v996 = vadd.f32 %v835, %v995
      %v997 = vpop.f32.mrf.mxu0
      %v998 = vadd.f32 %v837, %v997
      %999 = vmatprep.mubr.f32.mxu0 %v435
      %1000 = vmatmul.mubr.f32.gmra.mxu0 %v434
      %v1001 = vpop.f32.mrf.mxu0
      %v1002 = vadd.f32 %v841, %v1001
      %v1003 = vpop.f32.mrf.mxu0
      %v1004 = vadd.f32 %v843, %v1003
      %1005 = vmatprep.mubr.f32.mxu0 %v442
      %1006 = vmatmul.mubr.f32.gmra.mxu0 %v441
      %v1007 = vpop.f32.mrf.mxu0
      %v1008 = vadd.f32 %v847, %v1007
      %v1009 = vpop.f32.mrf.mxu0
      %v1010 = vadd.f32 %v849, %v1009
      %1011 = vmatprep.mubr.f32.mxu0 %v449
      %1012 = vmatmul.mubr.f32.gmra.mxu0 %v448
      %v1013 = vpop.f32.mrf.mxu0
      %v1014 = vadd.f32 %v853, %v1013
      %v1015 = vpop.f32.mrf.mxu0
      %v1016 = vadd.f32 %v855, %v1015
      %1017 = vmatprep.mubr.f32.mxu0 %v456
      %1018 = vmatmul.mubr.f32.gmra.mxu0 %v455
      %v1019 = vpop.f32.mrf.mxu0
      %v1020 = vadd.f32 %v859, %v1019
      %v1021 = vpop.f32.mrf.mxu0
      %v1022 = vadd.f32 %v861, %v1021
      %1023 = vmatprep.mubr.f32.mxu0 %v463
      %1024 = vmatmul.mubr.f32.gmra.mxu0 %v462
      %v1025 = vpop.f32.mrf.mxu0
      %v1026 = vadd.f32 %v865, %v1025
      %v1027 = vpop.f32.mrf.mxu0
      %v1028 = vadd.f32 %v867, %v1027
      %1029 = vmatprep.mubr.f32.mxu0 %v470
      %1030 = vmatmul.mubr.f32.gmra.mxu0 %v469
      %v1031 = vpop.f32.mrf.mxu0
      %v1032 = vadd.f32 %v871, %v1031
      %v1033 = vpop.f32.mrf.mxu0
      %v1034 = vadd.f32 %v873, %v1033
      %1035 = vmatprep.mubr.f32.mxu0 %v477
      %1036 = vmatmul.mubr.f32.gmra.mxu0 %v476
      %v1037 = vpop.f32.mrf.mxu0
      %v1038 = vadd.f32 %v877, %v1037
      %v1039 = vpop.f32.mrf.mxu0
      %v1040 = vadd.f32 %v879, %v1039
      %1041 = vmatprep.mubr.f32.mxu0 %v484
      %1042 = vmatmul.mubr.f32.gmra.mxu0 %v483
      %v1043 = vpop.f32.mrf.mxu0
      %v1044 = vadd.f32 %v883, %v1043
      %v1045 = vpop.f32.mrf.mxu0
      %v1046 = vadd.f32 %v885, %v1045
      %1047 = vmatprep.mubr.f32.mxu0 %v491
      %1048 = vmatmul.mubr.f32.gmra.mxu0 %v490
      %v1049 = vpop.f32.mrf.mxu0
      %v1050 = vadd.f32 %v889, %v1049
      %v1051 = vpop.f32.mrf.mxu0
      %v1052 = vadd.f32 %v891, %v1051
      %1053 = vmatprep.mubr.f32.mxu0 %v498
      %1054 = vmatmul.mubr.f32.gmra.mxu0 %v497
      %v1055 = vpop.f32.mrf.mxu0
      %v1056 = vadd.f32 %v895, %v1055
      %v1057 = vpop.f32.mrf.mxu0
      %v1058 = vadd.f32 %v897, %v1057
      %1059 = vdwg.mxu0
      %1060 = vmatprep.subr.mxu0 %v661
      %1061 = vmatpush1.msra.mxu0 %v660
      %1062 = vmatprep.subr.mxu0 %v659
      %1063 = vmatpush1.msra.mxu0 %v658
      %1064 = vmatprep.subr.mxu0 %v657
      %1065 = vmatpush1.msra.mxu0 %v656
      %1066 = vmatprep.subr.mxu0 %v655
      %1067 = vmatpush1.msra.mxu0 %v654
      %1068 = vmatprep.subr.mxu0 %v653
      %1069 = vmatpush1.msra.mxu0 %v652
      %1070 = vmatprep.subr.mxu0 %v651
      %1071 = vmatpush1.msra.mxu0 %v650
      %1072 = vmatprep.subr.mxu0 %v649
      %1073 = vmatpush1.msra.mxu0 %v648
      %1074 = vmatprep.subr.mxu0 %v647
      %1075 = vmatpush1.msra.mxu0 %v646
      %1076 = vmatprep.subr.mxu0 %v645
      %1077 = vmatpush1.msra.mxu0 %v644
      %1078 = vmatprep.subr.mxu0 %v643
      %1079 = vmatpush1.msra.mxu0 %v642
      %1080 = vmatprep.subr.mxu0 %v641
      %1081 = vmatpush1.msra.mxu0 %v640
      %1082 = vmatprep.subr.mxu0 %v639
      %1083 = vmatpush1.msra.mxu0 %v638
      %1084 = vmatprep.subr.mxu0 %v637
      %1085 = vmatpush1.msra.mxu0 %v636
      %1086 = vmatprep.subr.mxu0 %v635
      %1087 = vmatpush1.msra.mxu0 %v634
      %1088 = vmatprep.subr.mxu0 %v633
      %1089 = vmatpush1.msra.mxu0 %v632
      %1090 = vmatprep.subr.mxu0 %v631
      %1091 = vmatpush1.msra.mxu0 %v630
      %1092 = vmatprep.subr.mxu0 %v693
      %1093 = vmatpush2.msra.mxu0 %v692
      %1094 = vmatprep.subr.mxu0 %v691
      %1095 = vmatpush2.msra.mxu0 %v690
      %1096 = vmatprep.subr.mxu0 %v689
      %1097 = vmatpush2.msra.mxu0 %v688
      %1098 = vmatprep.subr.mxu0 %v687
      %1099 = vmatpush2.msra.mxu0 %v686
      %1100 = vmatprep.subr.mxu0 %v685
      %1101 = vmatpush2.msra.mxu0 %v684
      %1102 = vmatprep.subr.mxu0 %v683
      %1103 = vmatpush2.msra.mxu0 %v682
      %1104 = vmatprep.subr.mxu0 %v681
      %1105 = vmatpush2.msra.mxu0 %v680
      %1106 = vmatprep.subr.mxu0 %v679
      %1107 = vmatpush2.msra.mxu0 %v678
      %1108 = vmatprep.subr.mxu0 %v677
      %1109 = vmatpush2.msra.mxu0 %v676
      %1110 = vmatprep.subr.mxu0 %v675
      %1111 = vmatpush2.msra.mxu0 %v674
      %1112 = vmatprep.subr.mxu0 %v673
      %1113 = vmatpush2.msra.mxu0 %v672
      %1114 = vmatprep.subr.mxu0 %v671
      %1115 = vmatpush2.msra.mxu0 %v670
      %1116 = vmatprep.subr.mxu0 %v669
      %1117 = vmatpush2.msra.mxu0 %v668
      %1118 = vmatprep.subr.mxu0 %v667
      %1119 = vmatpush2.msra.mxu0 %v666
      %1120 = vmatprep.subr.mxu0 %v665
      %1121 = vmatpush2.msra.mxu0 %v664
      %1122 = vmatprep.subr.mxu0 %v663
      %1123 = vmatpush2.msra.mxu0 %v662
      %1124 = vmatprep.mubr.f32.mxu0 %v395
      %1125 = vmatmul.mubr.f32.gmra.mxu0 %v394
      %v1126 = vpop.f32.mrf.mxu0
      %v1127 = vadd.f32 %v966, %v1126
      %v1128 = vpop.f32.mrf.mxu0
      %v1129 = vadd.f32 %v968, %v1128
      %1130 = vmatprep.mubr.f32.mxu0 %v402
      %1131 = vmatmul.mubr.f32.gmra.mxu0 %v401
      %v1132 = vpop.f32.mrf.mxu0
      %v1133 = vadd.f32 %v972, %v1132
      %v1134 = vpop.f32.mrf.mxu0
      %v1135 = vadd.f32 %v974, %v1134
      %1136 = vmatprep.mubr.f32.mxu0 %v409
      %1137 = vmatmul.mubr.f32.gmra.mxu0 %v408
      %v1138 = vpop.f32.mrf.mxu0
      %v1139 = vadd.f32 %v978, %v1138
      %v1140 = vpop.f32.mrf.mxu0
      %v1141 = vadd.f32 %v980, %v1140
      %1142 = vmatprep.mubr.f32.mxu0 %v416
      %1143 = vmatmul.mubr.f32.gmra.mxu0 %v415
      %v1144 = vpop.f32.mrf.mxu0
      %v1145 = vadd.f32 %v984, %v1144
      %v1146 = vpop.f32.mrf.mxu0
      %v1147 = vadd.f32 %v986, %v1146
      %1148 = vmatprep.mubr.f32.mxu0 %v423
      %1149 = vmatmul.mubr.f32.gmra.mxu0 %v422
      %v1150 = vpop.f32.mrf.mxu0
      %v1151 = vadd.f32 %v990, %v1150
      %v1152 = vpop.f32.mrf.mxu0
      %v1153 = vadd.f32 %v992, %v1152
      %1154 = vmatprep.mubr.f32.mxu0 %v430
      %1155 = vmatmul.mubr.f32.gmra.mxu0 %v429
      %v1156 = vpop.f32.mrf.mxu0
      %v1157 = vadd.f32 %v996, %v1156
      %v1158 = vpop.f32.mrf.mxu0
      %v1159 = vadd.f32 %v998, %v1158
      %1160 = vmatprep.mubr.f32.mxu0 %v437
      %1161 = vmatmul.mubr.f32.gmra.mxu0 %v436
      %v1162 = vpop.f32.mrf.mxu0
      %v1163 = vadd.f32 %v1002, %v1162
      %v1164 = vpop.f32.mrf.mxu0
      %v1165 = vadd.f32 %v1004, %v1164
      %1166 = vmatprep.mubr.f32.mxu0 %v444
      %1167 = vmatmul.mubr.f32.gmra.mxu0 %v443
      %v1168 = vpop.f32.mrf.mxu0
      %v1169 = vadd.f32 %v1008, %v1168
      %v1170 = vpop.f32.mrf.mxu0
      %v1171 = vadd.f32 %v1010, %v1170
      %1172 = vmatprep.mubr.f32.mxu0 %v451
      %1173 = vmatmul.mubr.f32.gmra.mxu0 %v450
      %v1174 = vpop.f32.mrf.mxu0
      %v1175 = vadd.f32 %v1014, %v1174
      %v1176 = vpop.f32.mrf.mxu0
      %v1177 = vadd.f32 %v1016, %v1176
      %1178 = vmatprep.mubr.f32.mxu0 %v458
      %1179 = vmatmul.mubr.f32.gmra.mxu0 %v457
      %v1180 = vpop.f32.mrf.mxu0
      %v1181 = vadd.f32 %v1020, %v1180
      %v1182 = vpop.f32.mrf.mxu0
      %v1183 = vadd.f32 %v1022, %v1182
      %1184 = vmatprep.mubr.f32.mxu0 %v465
      %1185 = vmatmul.mubr.f32.gmra.mxu0 %v464
      %v1186 = vpop.f32.mrf.mxu0
      %v1187 = vadd.f32 %v1026, %v1186
      %v1188 = vpop.f32.mrf.mxu0
      %v1189 = vadd.f32 %v1028, %v1188
      %1190 = vmatprep.mubr.f32.mxu0 %v472
      %1191 = vmatmul.mubr.f32.gmra.mxu0 %v471
      %v1192 = vpop.f32.mrf.mxu0
      %v1193 = vadd.f32 %v1032, %v1192
      %v1194 = vpop.f32.mrf.mxu0
      %v1195 = vadd.f32 %v1034, %v1194
      %1196 = vmatprep.mubr.f32.mxu0 %v479
      %1197 = vmatmul.mubr.f32.gmra.mxu0 %v478
      %v1198 = vpop.f32.mrf.mxu0
      %v1199 = vadd.f32 %v1038, %v1198
      %v1200 = vpop.f32.mrf.mxu0
      %v1201 = vadd.f32 %v1040, %v1200
      %1202 = vmatprep.mubr.f32.mxu0 %v486
      %1203 = vmatmul.mubr.f32.gmra.mxu0 %v485
      %v1204 = vpop.f32.mrf.mxu0
      %v1205 = vadd.f32 %v1044, %v1204
      %v1206 = vpop.f32.mrf.mxu0
      %v1207 = vadd.f32 %v1046, %v1206
      %1208 = vmatprep.mubr.f32.mxu0 %v493
      %1209 = vmatmul.mubr.f32.gmra.mxu0 %v492
      %v1210 = vpop.f32.mrf.mxu0
      %v1211 = vadd.f32 %v1050, %v1210
      %v1212 = vpop.f32.mrf.mxu0
      %v1213 = vadd.f32 %v1052, %v1212
      %1214 = vmatprep.mubr.f32.mxu0 %v500
      %1215 = vmatmul.mubr.f32.gmra.mxu0 %v499
      %v1216 = vpop.f32.mrf.mxu0
      %v1217 = vadd.f32 %v1056, %v1216
      %v1218 = vpop.f32.mrf.mxu0
      %v1219 = vadd.f32 %v1058, %v1218
      %1220 = vdwg.mxu0
      %1221 = vmatprep.subr.mxu0 %v725
      %1222 = vmatpush1.msra.mxu0 %v724
      %1223 = vmatprep.subr.mxu0 %v723
      %1224 = vmatpush1.msra.mxu0 %v722
      %1225 = vmatprep.subr.mxu0 %v721
      %1226 = vmatpush1.msra.mxu0 %v720
      %1227 = vmatprep.subr.mxu0 %v719
      %1228 = vmatpush1.msra.mxu0 %v718
      %1229 = vmatprep.subr.mxu0 %v717
      %1230 = vmatpush1.msra.mxu0 %v716
      %1231 = vmatprep.subr.mxu0 %v715
      %1232 = vmatpush1.msra.mxu0 %v714
      %1233 = vmatprep.subr.mxu0 %v713
      %1234 = vmatpush1.msra.mxu0 %v712
      %1235 = vmatprep.subr.mxu0 %v711
      %1236 = vmatpush1.msra.mxu0 %v710
      %1237 = vmatprep.subr.mxu0 %v709
      %1238 = vmatpush1.msra.mxu0 %v708
      %1239 = vmatprep.subr.mxu0 %v707
      %1240 = vmatpush1.msra.mxu0 %v706
      %1241 = vmatprep.subr.mxu0 %v705
      %1242 = vmatpush1.msra.mxu0 %v704
      %1243 = vmatprep.subr.mxu0 %v703
      %1244 = vmatpush1.msra.mxu0 %v702
      %1245 = vmatprep.subr.mxu0 %v701
      %1246 = vmatpush1.msra.mxu0 %v700
      %1247 = vmatprep.subr.mxu0 %v699
      %1248 = vmatpush1.msra.mxu0 %v698
      %1249 = vmatprep.subr.mxu0 %v697
      %1250 = vmatpush1.msra.mxu0 %v696
      %1251 = vmatprep.subr.mxu0 %v695
      %1252 = vmatpush1.msra.mxu0 %v694
      %1253 = vmatprep.subr.mxu0 0.0
      %1254 = vmatpush2.msra.mxu0 0.0
      %1255 = vmatprep.subr.mxu0 0.0
      %1256 = vmatpush2.msra.mxu0 0.0
      %1257 = vmatprep.subr.mxu0 0.0
      %1258 = vmatpush2.msra.mxu0 0.0
      %1259 = vmatprep.subr.mxu0 0.0
      %1260 = vmatpush2.msra.mxu0 0.0
      %1261 = vmatprep.subr.mxu0 0.0
      %1262 = vmatpush2.msra.mxu0 0.0
      %1263 = vmatprep.subr.mxu0 0.0
      %1264 = vmatpush2.msra.mxu0 0.0
      %1265 = vmatprep.subr.mxu0 0.0
      %1266 = vmatpush2.msra.mxu0 0.0
      %1267 = vmatprep.subr.mxu0 0.0
      %1268 = vmatpush2.msra.mxu0 0.0
      %1269 = vmatprep.subr.mxu0 0.0
      %1270 = vmatpush2.msra.mxu0 0.0
      %1271 = vmatprep.subr.mxu0 0.0
      %1272 = vmatpush2.msra.mxu0 0.0
      %1273 = vmatprep.subr.mxu0 0.0
      %1274 = vmatpush2.msra.mxu0 0.0
      %1275 = vmatprep.subr.mxu0 0.0
      %1276 = vmatpush2.msra.mxu0 0.0
      %1277 = vmatprep.subr.mxu0 0.0
      %1278 = vmatpush2.msra.mxu0 0.0
      %1279 = vmatprep.subr.mxu0 0.0
      %1280 = vmatpush2.msra.mxu0 0.0
      %1281 = vmatprep.subr.mxu0 0.0
      %1282 = vmatpush2.msra.mxu0 0.0
      %1283 = vmatprep.subr.mxu0 0.0
      %1284 = vmatpush2.msra.mxu0 0.0
      %1285 = vmatprep.mubr.f32.mxu0 0.0
      %1286 = vmatmul.mubr.f32.gmra.mxu0 %v396
      %v1287 = vpop.f32.mrf.mxu0
      %v1288 = vadd.f32 %v1127, %v1287
      %v1289 = vpop.f32.mrf.mxu0
      %v1290 = vadd.f32 %v1129, %v1289
      %1291 = vmatprep.mubr.f32.mxu0 0.0
      %1292 = vmatmul.mubr.f32.gmra.mxu0 %v403
      %v1293 = vpop.f32.mrf.mxu0
      %v1294 = vadd.f32 %v1133, %v1293
      %v1295 = vpop.f32.mrf.mxu0
      %v1296 = vadd.f32 %v1135, %v1295
      %1297 = vmatprep.mubr.f32.mxu0 0.0
      %1298 = vmatmul.mubr.f32.gmra.mxu0 %v410
      %v1299 = vpop.f32.mrf.mxu0
      %v1300 = vadd.f32 %v1139, %v1299
      %v1301 = vpop.f32.mrf.mxu0
      %v1302 = vadd.f32 %v1141, %v1301
      %1303 = vmatprep.mubr.f32.mxu0 0.0
      %1304 = vmatmul.mubr.f32.gmra.mxu0 %v417
      %v1305 = vpop.f32.mrf.mxu0
      %v1306 = vadd.f32 %v1145, %v1305
      %v1307 = vpop.f32.mrf.mxu0
      %v1308 = vadd.f32 %v1147, %v1307
      %1309 = vmatprep.mubr.f32.mxu0 0.0
      %1310 = vmatmul.mubr.f32.gmra.mxu0 %v424
      %v1311 = vpop.f32.mrf.mxu0
      %v1312 = vadd.f32 %v1151, %v1311
      %v1313 = vpop.f32.mrf.mxu0
      %v1314 = vadd.f32 %v1153, %v1313
      %1315 = vmatprep.mubr.f32.mxu0 0.0
      %1316 = vmatmul.mubr.f32.gmra.mxu0 %v431
      %v1317 = vpop.f32.mrf.mxu0
      %v1318 = vadd.f32 %v1157, %v1317
      %v1319 = vpop.f32.mrf.mxu0
      %v1320 = vadd.f32 %v1159, %v1319
      %1321 = vmatprep.mubr.f32.mxu0 0.0
      %1322 = vmatmul.mubr.f32.gmra.mxu0 %v438
      %v1323 = vpop.f32.mrf.mxu0
      %v1324 = vadd.f32 %v1163, %v1323
      %v1325 = vpop.f32.mrf.mxu0
      %v1326 = vadd.f32 %v1165, %v1325
      %1327 = vmatprep.mubr.f32.mxu0 0.0
      %1328 = vmatmul.mubr.f32.gmra.mxu0 %v445
      %v1329 = vpop.f32.mrf.mxu0
      %v1330 = vadd.f32 %v1169, %v1329
      %v1331 = vpop.f32.mrf.mxu0
      %v1332 = vadd.f32 %v1171, %v1331
      %1333 = vmatprep.mubr.f32.mxu0 0.0
      %1334 = vmatmul.mubr.f32.gmra.mxu0 %v452
      %v1335 = vpop.f32.mrf.mxu0
      %v1336 = vadd.f32 %v1175, %v1335
      %v1337 = vpop.f32.mrf.mxu0
      %v1338 = vadd.f32 %v1177, %v1337
      %1339 = vmatprep.mubr.f32.mxu0 0.0
      %1340 = vmatmul.mubr.f32.gmra.mxu0 %v459
      %v1341 = vpop.f32.mrf.mxu0
      %v1342 = vadd.f32 %v1181, %v1341
      %v1343 = vpop.f32.mrf.mxu0
      %v1344 = vadd.f32 %v1183, %v1343
      %1345 = vmatprep.mubr.f32.mxu0 0.0
      %1346 = vmatmul.mubr.f32.gmra.mxu0 %v466
      %v1347 = vpop.f32.mrf.mxu0
      %v1348 = vadd.f32 %v1187, %v1347
      %v1349 = vpop.f32.mrf.mxu0
      %v1350 = vadd.f32 %v1189, %v1349
      %1351 = vmatprep.mubr.f32.mxu0 0.0
      %1352 = vmatmul.mubr.f32.gmra.mxu0 %v473
      %v1353 = vpop.f32.mrf.mxu0
      %v1354 = vadd.f32 %v1193, %v1353
      %v1355 = vpop.f32.mrf.mxu0
      %v1356 = vadd.f32 %v1195, %v1355
      %1357 = vmatprep.mubr.f32.mxu0 0.0
      %1358 = vmatmul.mubr.f32.gmra.mxu0 %v480
      %v1359 = vpop.f32.mrf.mxu0
      %v1360 = vadd.f32 %v1199, %v1359
      %v1361 = vpop.f32.mrf.mxu0
      %v1362 = vadd.f32 %v1201, %v1361
      %1363 = vmatprep.mubr.f32.mxu0 0.0
      %1364 = vmatmul.mubr.f32.gmra.mxu0 %v487
      %v1365 = vpop.f32.mrf.mxu0
      %v1366 = vadd.f32 %v1205, %v1365
      %v1367 = vpop.f32.mrf.mxu0
      %v1368 = vadd.f32 %v1207, %v1367
      %1369 = vmatprep.mubr.f32.mxu0 0.0
      %1370 = vmatmul.mubr.f32.gmra.mxu0 %v494
      %v1371 = vpop.f32.mrf.mxu0
      %v1372 = vadd.f32 %v1211, %v1371
      %v1373 = vpop.f32.mrf.mxu0
      %v1374 = vadd.f32 %v1213, %v1373
      %1375 = vmatprep.mubr.f32.mxu0 0.0
      %1376 = vmatmul.mubr.f32.gmra.mxu0 %v501
      %v1377 = vpop.f32.mrf.mxu0
      %v1378 = vadd.f32 %v1217, %v1377
      %v1379 = vpop.f32.mrf.mxu0
      %v1380 = vadd.f32 %v1219, %v1379
      %1381 = vdwg.mxu0
      %v1382 = vmax.f32 %v1288, 0.0
      %v1383 = vmax.f32 %v1290, 0.0
      %v1384 = vmax.f32 %v1294, 0.0
      %v1385 = vmax.f32 %v1296, 0.0
      %v1386 = vmax.f32 %v1300, 0.0
      %v1387 = vmax.f32 %v1302, 0.0
      %v1388 = vmax.f32 %v1306, 0.0
      %v1389 = vmax.f32 %v1308, 0.0
      %v1390 = vmax.f32 %v1312, 0.0
      %v1391 = vmax.f32 %v1314, 0.0
      %v1392 = vmax.f32 %v1318, 0.0
      %v1393 = vmax.f32 %v1320, 0.0
      %v1394 = vmax.f32 %v1324, 0.0
      %v1395 = vmax.f32 %v1326, 0.0
      %v1396 = vmax.f32 %v1330, 0.0
      %v1397 = vmax.f32 %v1332, 0.0
      %v1398 = vmax.f32 %v1336, 0.0
      %v1399 = vmax.f32 %v1338, 0.0
      %v1400 = vmax.f32 %v1342, 0.0
      %v1401 = vmax.f32 %v1344, 0.0
      %v1402 = vmax.f32 %v1348, 0.0
      %v1403 = vmax.f32 %v1350, 0.0
      %v1404 = vmax.f32 %v1354, 0.0
      %v1405 = vmax.f32 %v1356, 0.0
      %v1406 = vmax.f32 %v1360, 0.0
      %v1407 = vmax.f32 %v1362, 0.0
      %v1408 = vmax.f32 %v1366, 0.0
      %v1409 = vmax.f32 %v1368, 0.0
      %v1410 = vmax.f32 %v1372, 0.0
      %v1411 = vmax.f32 %v1374, 0.0
      %v1412 = vmax.f32 %v1378, 0.0
      %v1413 = vmax.f32 %v1380, 0.0
      %v1414 = vld [vmem:[%s3] sm:$0xff]
      %v1415 = vld [vmem:[%s3 + $0x8] sm:$0xff]
      %v1416 = vld [vmem:[%s3 + $0x10] sm:$0xff]
      %v1417 = vld [vmem:[%s3 + $0x18] sm:$0xff]
      %v1418 = vld [vmem:[%s3 + $0x20] sm:$0xff]
      %v1419 = vld [vmem:[%s3 + $0x28] sm:$0xff]
      %v1420 = vld [vmem:[%s3 + $0x30] sm:$0xff]
      %v1421 = vld [vmem:[%s3 + $0x38] sm:$0xff]
      %v1422 = vld [vmem:[%s3 + $0x40] sm:$0xff]
      %v1423 = vld [vmem:[%s3 + $0x48] sm:$0xff]
      %v1424 = vld [vmem:[%s3 + $0x50] sm:$0xff]
      %v1425 = vld [vmem:[%s3 + $0x58] sm:$0xff]
      %v1426 = vld [vmem:[%s3 + $0x60] sm:$0xff]
      %v1427 = vld [vmem:[%s3 + $0x68] sm:$0xff]
      %v1428 = vld [vmem:[%s3 + $0x70] sm:$0xff]
      %v1429 = vld [vmem:[%s3 + $0x78] sm:$0xff]
      %v1430 = vld [vmem:[%s3 + $0x80] sm:$0xff]
      %v1431 = vld [vmem:[%s3 + $0x88] sm:$0xff]
      %v1432 = vld [vmem:[%s3 + $0x90] sm:$0xff]
      %v1433 = vld [vmem:[%s3 + $0x98] sm:$0xff]
      %v1434 = vld [vmem:[%s3 + $0xa0] sm:$0xff]
      %v1435 = vld [vmem:[%s3 + $0xa8] sm:$0xff]
      %v1436 = vld [vmem:[%s3 + $0xb0] sm:$0xff]
      %v1437 = vld [vmem:[%s3 + $0xb8] sm:$0xff]
      %v1438 = vld [vmem:[%s3 + $0xc0] sm:$0xff]
      %v1439 = vld [vmem:[%s4] sm:$0x1]
      %v1441 = vlaneseq
      %v1442 = vshrl.u32 %v1441, 7
      %v1443 = vsub.s32 0, %v1442
      %v1444 = vrot.slane %v1439, %v1443
      %vm1446 = vcmask 588800
      %v1448 = vsel %vm1446, %v1383, 0
      %v1451 = vsel %vm1446, %v1385, 0
      %v1454 = vsel %vm1446, %v1387, 0
      %v1457 = vsel %vm1446, %v1389, 0
      %v1460 = vsel %vm1446, %v1391, 0
      %v1463 = vsel %vm1446, %v1393, 0
      %v1466 = vsel %vm1446, %v1395, 0
      %v1469 = vsel %vm1446, %v1397, 0
      %v1472 = vsel %vm1446, %v1399, 0
      %v1475 = vsel %vm1446, %v1401, 0
      %v1478 = vsel %vm1446, %v1403, 0
      %v1481 = vsel %vm1446, %v1405, 0
      %v1484 = vsel %vm1446, %v1407, 0
      %v1487 = vsel %vm1446, %v1409, 0
      %v1490 = vsel %vm1446, %v1411, 0
      %v1493 = vsel %vm1446, %v1413, 0
      %1495 = vmatprep.subr.mxu0 0.0
      %1496 = vmatpush1.msra.mxu0 %v1429
      %1497 = vmatprep.subr.mxu0 0.0
      %1498 = vmatpush1.msra.mxu0 %v1428
      %1499 = vmatprep.subr.mxu0 0.0
      %1500 = vmatpush1.msra.mxu0 %v1427
      %1501 = vmatprep.subr.mxu0 0.0
      %1502 = vmatpush1.msra.mxu0 %v1426
      %1503 = vmatprep.subr.mxu0 0.0
      %1504 = vmatpush1.msra.mxu0 %v1425
      %1505 = vmatprep.subr.mxu0 0.0
      %1506 = vmatpush1.msra.mxu0 %v1424
      %1507 = vmatprep.subr.mxu0 0.0
      %1508 = vmatpush1.msra.mxu0 %v1423
      %1509 = vmatprep.subr.mxu0 0.0
      %1510 = vmatpush1.msra.mxu0 %v1422
      %1511 = vmatprep.subr.mxu0 0.0
      %1512 = vmatpush1.msra.mxu0 %v1421
      %1513 = vmatprep.subr.mxu0 0.0
      %1514 = vmatpush1.msra.mxu0 %v1420
      %1515 = vmatprep.subr.mxu0 0.0
      %1516 = vmatpush1.msra.mxu0 %v1419
      %1517 = vmatprep.subr.mxu0 0.0
      %1518 = vmatpush1.msra.mxu0 %v1418
      %1519 = vmatprep.subr.mxu0 0.0
      %1520 = vmatpush1.msra.mxu0 %v1417
      %1521 = vmatprep.subr.mxu0 0.0
      %1522 = vmatpush1.msra.mxu0 %v1416
      %1523 = vmatprep.subr.mxu0 0.0
      %1524 = vmatpush1.msra.mxu0 %v1415
      %1525 = vmatprep.subr.mxu0 0.0
      %1526 = vmatpush1.msra.mxu0 %v1414
      %1527 = vmatprep.subr.mxu0 0.0
      %1528 = vmatpush2.msra.mxu0 0.0
      %1529 = vmatprep.subr.mxu0 0.0
      %1530 = vmatpush2.msra.mxu0 0.0
      %1531 = vmatprep.subr.mxu0 0.0
      %1532 = vmatpush2.msra.mxu0 0.0
      %1533 = vmatprep.subr.mxu0 0.0
      %1534 = vmatpush2.msra.mxu0 0.0
      %1535 = vmatprep.subr.mxu0 0.0
      %1536 = vmatpush2.msra.mxu0 0.0
      %1537 = vmatprep.subr.mxu0 0.0
      %1538 = vmatpush2.msra.mxu0 0.0
      %1539 = vmatprep.subr.mxu0 0.0
      %1540 = vmatpush2.msra.mxu0 0.0
      %1541 = vmatprep.subr.mxu0 0.0
      %1542 = vmatpush2.msra.mxu0 %v1438
      %1543 = vmatprep.subr.mxu0 0.0
      %1544 = vmatpush2.msra.mxu0 %v1437
      %1545 = vmatprep.subr.mxu0 0.0
      %1546 = vmatpush2.msra.mxu0 %v1436
      %1547 = vmatprep.subr.mxu0 0.0
      %1548 = vmatpush2.msra.mxu0 %v1435
      %1549 = vmatprep.subr.mxu0 0.0
      %1550 = vmatpush2.msra.mxu0 %v1434
      %1551 = vmatprep.subr.mxu0 0.0
      %1552 = vmatpush2.msra.mxu0 %v1433
      %1553 = vmatprep.subr.mxu0 0.0
      %1554 = vmatpush2.msra.mxu0 %v1432
      %1555 = vmatprep.subr.mxu0 0.0
      %1556 = vmatpush2.msra.mxu0 %v1431
      %1557 = vmatprep.subr.mxu0 0.0
      %1558 = vmatpush2.msra.mxu0 %v1430
      %1559 = vmatprep.mubr.f32.mxu0 %v1448
      %1560 = vmatmul.mubr.f32.gmra.mxu0 %v1382
      %v1561 = vpop.f32.mrf.mxu0
      %v1562 = vadd.f32 %v1444, %v1561
      %v1563 = vpop.f32.mrf.mxu0
      %1564 = vmatprep.mubr.f32.mxu0 %v1451
      %1565 = vmatmul.mubr.f32.gmra.mxu0 %v1384
      %v1566 = vpop.f32.mrf.mxu0
      %v1567 = vadd.f32 %v1444, %v1566
      %v1568 = vpop.f32.mrf.mxu0
      %1569 = vmatprep.mubr.f32.mxu0 %v1454
      %1570 = vmatmul.mubr.f32.gmra.mxu0 %v1386
      %v1571 = vpop.f32.mrf.mxu0
      %v1572 = vadd.f32 %v1444, %v1571
      %v1573 = vpop.f32.mrf.mxu0
      %1574 = vmatprep.mubr.f32.mxu0 %v1457
      %1575 = vmatmul.mubr.f32.gmra.mxu0 %v1388
      %v1576 = vpop.f32.mrf.mxu0
      %v1577 = vadd.f32 %v1444, %v1576
      %v1578 = vpop.f32.mrf.mxu0
      %1579 = vmatprep.mubr.f32.mxu0 %v1460
      %1580 = vmatmul.mubr.f32.gmra.mxu0 %v1390
      %v1581 = vpop.f32.mrf.mxu0
      %v1582 = vadd.f32 %v1444, %v1581
      %v1583 = vpop.f32.mrf.mxu0
      %1584 = vmatprep.mubr.f32.mxu0 %v1463
      %1585 = vmatmul.mubr.f32.gmra.mxu0 %v1392
      %v1586 = vpop.f32.mrf.mxu0
      %v1587 = vadd.f32 %v1444, %v1586
      %v1588 = vpop.f32.mrf.mxu0
      %1589 = vmatprep.mubr.f32.mxu0 %v1466
      %1590 = vmatmul.mubr.f32.gmra.mxu0 %v1394
      %v1591 = vpop.f32.mrf.mxu0
      %v1592 = vadd.f32 %v1444, %v1591
      %v1593 = vpop.f32.mrf.mxu0
      %1594 = vmatprep.mubr.f32.mxu0 %v1469
      %1595 = vmatmul.mubr.f32.gmra.mxu0 %v1396
      %v1596 = vpop.f32.mrf.mxu0
      %v1597 = vadd.f32 %v1444, %v1596
      %v1598 = vpop.f32.mrf.mxu0
      %1599 = vmatprep.mubr.f32.mxu0 %v1472
      %1600 = vmatmul.mubr.f32.gmra.mxu0 %v1398
      %v1601 = vpop.f32.mrf.mxu0
      %v1602 = vadd.f32 %v1444, %v1601
      %v1603 = vpop.f32.mrf.mxu0
      %1604 = vmatprep.mubr.f32.mxu0 %v1475
      %1605 = vmatmul.mubr.f32.gmra.mxu0 %v1400
      %v1606 = vpop.f32.mrf.mxu0
      %v1607 = vadd.f32 %v1444, %v1606
      %v1608 = vpop.f32.mrf.mxu0
      %1609 = vmatprep.mubr.f32.mxu0 %v1478
      %1610 = vmatmul.mubr.f32.gmra.mxu0 %v1402
      %v1611 = vpop.f32.mrf.mxu0
      %v1612 = vadd.f32 %v1444, %v1611
      %v1613 = vpop.f32.mrf.mxu0
      %1614 = vmatprep.mubr.f32.mxu0 %v1481
      %1615 = vmatmul.mubr.f32.gmra.mxu0 %v1404
      %v1616 = vpop.f32.mrf.mxu0
      %v1617 = vadd.f32 %v1444, %v1616
      %v1618 = vpop.f32.mrf.mxu0
      %1619 = vmatprep.mubr.f32.mxu0 %v1484
      %1620 = vmatmul.mubr.f32.gmra.mxu0 %v1406
      %v1621 = vpop.f32.mrf.mxu0
      %v1622 = vadd.f32 %v1444, %v1621
      %v1623 = vpop.f32.mrf.mxu0
      %1624 = vmatprep.mubr.f32.mxu0 %v1487
      %1625 = vmatmul.mubr.f32.gmra.mxu0 %v1408
      %v1626 = vpop.f32.mrf.mxu0
      %v1627 = vadd.f32 %v1444, %v1626
      %v1628 = vpop.f32.mrf.mxu0
      %1629 = vmatprep.mubr.f32.mxu0 %v1490
      %1630 = vmatmul.mubr.f32.gmra.mxu0 %v1410
      %v1631 = vpop.f32.mrf.mxu0
      %v1632 = vadd.f32 %v1444, %v1631
      %v1633 = vpop.f32.mrf.mxu0
      %1634 = vmatprep.mubr.f32.mxu0 %v1493
      %1635 = vmatmul.mubr.f32.gmra.mxu0 %v1412
      %v1636 = vpop.f32.mrf.mxu0
      %v1637 = vadd.f32 %v1444, %v1636
      %v1638 = vpop.f32.mrf.mxu0
      %1639 = vdwg.mxu0
      %v1640 = vld [vmem:[%s381] sm:$0xff]
      %v1641 = vld [vmem:[%s381 + $0x8] sm:$0xff]
      %v1642 = vld [vmem:[%s381 + $0x10] sm:$0xff]
      %v1643 = vld [vmem:[%s381 + $0x18] sm:$0xff]
      %v1644 = vld [vmem:[%s381 + $0x20] sm:$0xff]
      %v1645 = vld [vmem:[%s381 + $0x28] sm:$0xff]
      %v1646 = vld [vmem:[%s381 + $0x30] sm:$0xff]
      %v1647 = vld [vmem:[%s381 + $0x38] sm:$0xff]
      %v1648 = vld [vmem:[%s381 + $0x40] sm:$0xff]
      %v1649 = vld [vmem:[%s381 + $0x48] sm:$0xff]
      %v1650 = vld [vmem:[%s381 + $0x50] sm:$0xff]
      %v1651 = vld [vmem:[%s381 + $0x58] sm:$0xff]
      %v1652 = vld [vmem:[%s381 + $0x60] sm:$0xff]
      %v1653 = vld [vmem:[%s381 + $0x68] sm:$0xff]
      %v1654 = vld [vmem:[%s381 + $0x70] sm:$0xff]
      %v1655 = vld [vmem:[%s381 + $0x78] sm:$0xff]
      %1672 = vrot.lane.b32.xlu0 %v1640, 20
      %v1673 = vpop.permute.xlu0 %1672
      %1674 = vrot.lane.b32.xlu0 %v1641, 20
      %v1675 = vpop.permute.xlu0 %1674
      %1676 = vrot.lane.b32.xlu0 %v1642, 20
      %v1677 = vpop.permute.xlu0 %1676
      %1678 = vrot.lane.b32.xlu0 %v1643, 20
      %v1679 = vpop.permute.xlu0 %1678
      %1680 = vrot.lane.b32.xlu0 %v1644, 20
      %v1681 = vpop.permute.xlu0 %1680
      %1682 = vrot.lane.b32.xlu0 %v1645, 20
      %v1683 = vpop.permute.xlu0 %1682
      %1684 = vrot.lane.b32.xlu0 %v1646, 20
      %v1685 = vpop.permute.xlu0 %1684
      %1686 = vrot.lane.b32.xlu0 %v1647, 20
      %v1687 = vpop.permute.xlu0 %1686
      %1688 = vrot.lane.b32.xlu0 %v1648, 20
      %v1689 = vpop.permute.xlu0 %1688
      %1690 = vrot.lane.b32.xlu0 %v1649, 20
      %v1691 = vpop.permute.xlu0 %1690
      %1692 = vrot.lane.b32.xlu0 %v1650, 20
      %v1693 = vpop.permute.xlu0 %1692
      %1694 = vrot.lane.b32.xlu0 %v1651, 20
      %v1695 = vpop.permute.xlu0 %1694
      %1696 = vrot.lane.b32.xlu0 %v1652, 20
      %v1697 = vpop.permute.xlu0 %1696
      %1698 = vrot.lane.b32.xlu0 %v1653, 20
      %v1699 = vpop.permute.xlu0 %1698
      %1700 = vrot.lane.b32.xlu0 %v1654, 20
      %v1701 = vpop.permute.xlu0 %1700
      %1702 = vrot.lane.b32.xlu0 %v1655, 20
      %v1703 = vpop.permute.xlu0 %1702
      %v1720 = vmul.f32 %v1562, %v1673
      %v1721 = vmul.f32 %v1567, %v1675
      %v1722 = vmul.f32 %v1572, %v1677
      %v1723 = vmul.f32 %v1577, %v1679
      %v1724 = vmul.f32 %v1582, %v1681
      %v1725 = vmul.f32 %v1587, %v1683
      %v1726 = vmul.f32 %v1592, %v1685
      %v1727 = vmul.f32 %v1597, %v1687
      %v1728 = vmul.f32 %v1602, %v1689
      %v1729 = vmul.f32 %v1607, %v1691
      %v1730 = vmul.f32 %v1612, %v1693
      %v1731 = vmul.f32 %v1617, %v1695
      %v1732 = vmul.f32 %v1622, %v1697
      %v1733 = vmul.f32 %v1627, %v1699
      %v1734 = vmul.f32 %v1632, %v1701
      %v1735 = vmul.f32 %v1637, %v1703
      %1752 = vrot.lane.b32.xlu0 %v1720, 108
      %v1753 = vpop.permute.xlu0 %1752
      %1754 = vrot.lane.b32.xlu0 %v1721, 108
      %v1755 = vpop.permute.xlu0 %1754
      %1756 = vrot.lane.b32.xlu0 %v1722, 108
      %v1757 = vpop.permute.xlu0 %1756
      %1758 = vrot.lane.b32.xlu0 %v1723, 108
      %v1759 = vpop.permute.xlu0 %1758
      %1760 = vrot.lane.b32.xlu0 %v1724, 108
      %v1761 = vpop.permute.xlu0 %1760
      %1762 = vrot.lane.b32.xlu0 %v1725, 108
      %v1763 = vpop.permute.xlu0 %1762
      %1764 = vrot.lane.b32.xlu0 %v1726, 108
      %v1765 = vpop.permute.xlu0 %1764
      %1766 = vrot.lane.b32.xlu0 %v1727, 108
      %v1767 = vpop.permute.xlu0 %1766
      %1768 = vrot.lane.b32.xlu0 %v1728, 108
      %v1769 = vpop.permute.xlu0 %1768
      %1770 = vrot.lane.b32.xlu0 %v1729, 108
      %v1771 = vpop.permute.xlu0 %1770
      %1772 = vrot.lane.b32.xlu0 %v1730, 108
      %v1773 = vpop.permute.xlu0 %1772
      %1774 = vrot.lane.b32.xlu0 %v1731, 108
      %v1775 = vpop.permute.xlu0 %1774
      %1776 = vrot.lane.b32.xlu0 %v1732, 108
      %v1777 = vpop.permute.xlu0 %1776
      %1778 = vrot.lane.b32.xlu0 %v1733, 108
      %v1779 = vpop.permute.xlu0 %1778
      %1780 = vrot.lane.b32.xlu0 %v1734, 108
      %v1781 = vpop.permute.xlu0 %1780
      %1782 = vrot.lane.b32.xlu0 %v1735, 108
      %v1783 = vpop.permute.xlu0 %1782
      %v1800 = vadd.f32 %v1562, %v1753
      %v1801 = vadd.f32 %v1567, %v1755
      %v1802 = vadd.f32 %v1572, %v1757
      %v1803 = vadd.f32 %v1577, %v1759
      %v1804 = vadd.f32 %v1582, %v1761
      %v1805 = vadd.f32 %v1587, %v1763
      %v1806 = vadd.f32 %v1592, %v1765
      %v1807 = vadd.f32 %v1597, %v1767
      %v1808 = vadd.f32 %v1602, %v1769
      %v1809 = vadd.f32 %v1607, %v1771
      %v1810 = vadd.f32 %v1612, %v1773
      %v1811 = vadd.f32 %v1617, %v1775
      %v1812 = vadd.f32 %v1622, %v1777
      %v1813 = vadd.f32 %v1627, %v1779
      %v1814 = vadd.f32 %v1632, %v1781
      %v1815 = vadd.f32 %v1637, %v1783
      %v1816 = vld [vmem:[%s5] sm:$0xff]
      %v1817 = vld [vmem:[%s5 + $0x8] sm:$0xff]
      %v1818 = vld [vmem:[%s5 + $0x10] sm:$0xff]
      %v1819 = vld [vmem:[%s5 + $0x18] sm:$0xff]
      %v1820 = vld [vmem:[%s5 + $0x20] sm:$0xf]
      %v1821 = vld [vmem:[%s5 + $0x28] sm:$0xf]
      %v1822 = vld [vmem:[%s6] sm:$0x3]
      %v1824 = vlaneseq
      %v1825 = vshrl.u32 %v1824, 7
      %v1826 = vsub.s32 0, %v1825
      %v1827 = vrot.slane %v1822, %v1826
      %v1828 = vlaneseq
      %v1829 = vshrl.u32 %v1828, 7
      %v1830 = vsub.s32 1, %v1829
      %v1831 = vrot.slane %v1822, %v1830
      %vm1834 = vcmask 162816
      %v1836 = vsel %vm1834, %v1800, 0
      %v1839 = vsel %vm1834, %v1801, 0
      %v1842 = vsel %vm1834, %v1802, 0
      %v1845 = vsel %vm1834, %v1803, 0
      %v1848 = vsel %vm1834, %v1804, 0
      %v1851 = vsel %vm1834, %v1805, 0
      %v1854 = vsel %vm1834, %v1806, 0
      %v1857 = vsel %vm1834, %v1807, 0
      %v1860 = vsel %vm1834, %v1808, 0
      %v1863 = vsel %vm1834, %v1809, 0
      %v1866 = vsel %vm1834, %v1810, 0
      %v1869 = vsel %vm1834, %v1811, 0
      %v1872 = vsel %vm1834, %v1812, 0
      %v1875 = vsel %vm1834, %v1813, 0
      %v1878 = vsel %vm1834, %v1814, 0
      %v1881 = vsel %vm1834, %v1815, 0
      %vm1883 = vcmask 1043456
      %v1885 = vsel %vm1883, %v1820, 0
      %v1888 = vsel %vm1883, %v1821, 0
      %1890 = vmatprep.subr.mxu0 0.0
      %1891 = vmatpush1.msra.mxu0 0.0
      %1892 = vmatprep.subr.mxu0 0.0
      %1893 = vmatpush1.msra.mxu0 0.0
      %1894 = vmatprep.subr.mxu0 0.0
      %1895 = vmatpush1.msra.mxu0 0.0
      %1896 = vmatprep.subr.mxu0 0.0
      %1897 = vmatpush1.msra.mxu0 0.0
      %1898 = vmatprep.subr.mxu0 0.0
      %1899 = vmatpush1.msra.mxu0 0.0
      %1900 = vmatprep.subr.mxu0 0.0
      %1901 = vmatpush1.msra.mxu0 0.0
      %1902 = vmatprep.subr.mxu0 0.0
      %1903 = vmatpush1.msra.mxu0 0.0
      %1904 = vmatprep.subr.mxu0 0.0
      %1905 = vmatpush1.msra.mxu0 0.0
      %1906 = vmatprep.subr.mxu0 0.0
      %1907 = vmatpush1.msra.mxu0 0.0
      %1908 = vmatprep.subr.mxu0 0.0
      %1909 = vmatpush1.msra.mxu0 0.0
      %1910 = vmatprep.subr.mxu0 0.0
      %1911 = vmatpush1.msra.mxu0 0.0
      %1912 = vmatprep.subr.mxu0 0.0
      %1913 = vmatpush1.msra.mxu0 0.0
      %1914 = vmatprep.subr.mxu0 0.0
      %1915 = vmatpush1.msra.mxu0 0.0
      %1916 = vmatprep.subr.mxu0 %v1888
      %1917 = vmatpush1.msra.mxu0 %v1885
      %1918 = vmatprep.subr.mxu0 %v1819
      %1919 = vmatpush1.msra.mxu0 %v1818
      %1920 = vmatprep.subr.mxu0 %v1817
      %1921 = vmatpush1.msra.mxu0 %v1816
      %1922 = vmatprep.subr.mxu0 0.0
      %1923 = vmatpush2.msra.mxu0 0.0
      %1924 = vmatprep.subr.mxu0 0.0
      %1925 = vmatpush2.msra.mxu0 0.0
      %1926 = vmatprep.subr.mxu0 0.0
      %1927 = vmatpush2.msra.mxu0 0.0
      %1928 = vmatprep.subr.mxu0 0.0
      %1929 = vmatpush2.msra.mxu0 0.0
      %1930 = vmatprep.subr.mxu0 0.0
      %1931 = vmatpush2.msra.mxu0 0.0
      %1932 = vmatprep.subr.mxu0 0.0
      %1933 = vmatpush2.msra.mxu0 0.0
      %1934 = vmatprep.subr.mxu0 0.0
      %1935 = vmatpush2.msra.mxu0 0.0
      %1936 = vmatprep.subr.mxu0 0.0
      %1937 = vmatpush2.msra.mxu0 0.0
      %1938 = vmatprep.subr.mxu0 0.0
      %1939 = vmatpush2.msra.mxu0 0.0
      %1940 = vmatprep.subr.mxu0 0.0
      %1941 = vmatpush2.msra.mxu0 0.0
      %1942 = vmatprep.subr.mxu0 0.0
      %1943 = vmatpush2.msra.mxu0 0.0
      %1944 = vmatprep.subr.mxu0 0.0
      %1945 = vmatpush2.msra.mxu0 0.0
      %1946 = vmatprep.subr.mxu0 0.0
      %1947 = vmatpush2.msra.mxu0 0.0
      %1948 = vmatprep.subr.mxu0 0.0
      %1949 = vmatpush2.msra.mxu0 0.0
      %1950 = vmatprep.subr.mxu0 0.0
      %1951 = vmatpush2.msra.mxu0 0.0
      %1952 = vmatprep.subr.mxu0 0.0
      %1953 = vmatpush2.msra.mxu0 0.0
      %1954 = vmatprep.mubr.f32.mxu0 0.0
      %1955 = vmatmul.mubr.f32.gmra.mxu0 %v1836
      %v1956 = vpop.f32.mrf.mxu0
      %v1957 = vadd.f32 %v1827, %v1956
      %v1958 = vpop.f32.mrf.mxu0
      %v1959 = vadd.f32 %v1831, %v1958
      %1960 = vmatprep.mubr.f32.mxu0 0.0
      %1961 = vmatmul.mubr.f32.gmra.mxu0 %v1839
      %v1962 = vpop.f32.mrf.mxu0
      %v1963 = vadd.f32 %v1827, %v1962
      %v1964 = vpop.f32.mrf.mxu0
      %v1965 = vadd.f32 %v1831, %v1964
      %1966 = vmatprep.mubr.f32.mxu0 0.0
      %1967 = vmatmul.mubr.f32.gmra.mxu0 %v1842
      %v1968 = vpop.f32.mrf.mxu0
      %v1969 = vadd.f32 %v1827, %v1968
      %v1970 = vpop.f32.mrf.mxu0
      %v1971 = vadd.f32 %v1831, %v1970
      %1972 = vmatprep.mubr.f32.mxu0 0.0
      %1973 = vmatmul.mubr.f32.gmra.mxu0 %v1845
      %v1974 = vpop.f32.mrf.mxu0
      %v1975 = vadd.f32 %v1827, %v1974
      %v1976 = vpop.f32.mrf.mxu0
      %v1977 = vadd.f32 %v1831, %v1976
      %1978 = vmatprep.mubr.f32.mxu0 0.0
      %1979 = vmatmul.mubr.f32.gmra.mxu0 %v1848
      %v1980 = vpop.f32.mrf.mxu0
      %v1981 = vadd.f32 %v1827, %v1980
      %v1982 = vpop.f32.mrf.mxu0
      %v1983 = vadd.f32 %v1831, %v1982
      %1984 = vmatprep.mubr.f32.mxu0 0.0
      %1985 = vmatmul.mubr.f32.gmra.mxu0 %v1851
      %v1986 = vpop.f32.mrf.mxu0
      %v1987 = vadd.f32 %v1827, %v1986
      %v1988 = vpop.f32.mrf.mxu0
      %v1989 = vadd.f32 %v1831, %v1988
      %1990 = vmatprep.mubr.f32.mxu0 0.0
      %1991 = vmatmul.mubr.f32.gmra.mxu0 %v1854
      %v1992 = vpop.f32.mrf.mxu0
      %v1993 = vadd.f32 %v1827, %v1992
      %v1994 = vpop.f32.mrf.mxu0
      %v1995 = vadd.f32 %v1831, %v1994
      %1996 = vmatprep.mubr.f32.mxu0 0.0
      %1997 = vmatmul.mubr.f32.gmra.mxu0 %v1857
      %v1998 = vpop.f32.mrf.mxu0
      %v1999 = vadd.f32 %v1827, %v1998
      %v2000 = vpop.f32.mrf.mxu0
      %v2001 = vadd.f32 %v1831, %v2000
      %2002 = vmatprep.mubr.f32.mxu0 0.0
      %2003 = vmatmul.mubr.f32.gmra.mxu0 %v1860
      %v2004 = vpop.f32.mrf.mxu0
      %v2005 = vadd.f32 %v1827, %v2004
      %v2006 = vpop.f32.mrf.mxu0
      %v2007 = vadd.f32 %v1831, %v2006
      %2008 = vmatprep.mubr.f32.mxu0 0.0
      %2009 = vmatmul.mubr.f32.gmra.mxu0 %v1863
      %v2010 = vpop.f32.mrf.mxu0
      %v2011 = vadd.f32 %v1827, %v2010
      %v2012 = vpop.f32.mrf.mxu0
      %v2013 = vadd.f32 %v1831, %v2012
      %2014 = vmatprep.mubr.f32.mxu0 0.0
      %2015 = vmatmul.mubr.f32.gmra.mxu0 %v1866
      %v2016 = vpop.f32.mrf.mxu0
      %v2017 = vadd.f32 %v1827, %v2016
      %v2018 = vpop.f32.mrf.mxu0
      %v2019 = vadd.f32 %v1831, %v2018
      %2020 = vmatprep.mubr.f32.mxu0 0.0
      %2021 = vmatmul.mubr.f32.gmra.mxu0 %v1869
      %v2022 = vpop.f32.mrf.mxu0
      %v2023 = vadd.f32 %v1827, %v2022
      %v2024 = vpop.f32.mrf.mxu0
      %v2025 = vadd.f32 %v1831, %v2024
      %2026 = vmatprep.mubr.f32.mxu0 0.0
      %2027 = vmatmul.mubr.f32.gmra.mxu0 %v1872
      %v2028 = vpop.f32.mrf.mxu0
      %v2029 = vadd.f32 %v1827, %v2028
      %v2030 = vpop.f32.mrf.mxu0
      %v2031 = vadd.f32 %v1831, %v2030
      %2032 = vmatprep.mubr.f32.mxu0 0.0
      %2033 = vmatmul.mubr.f32.gmra.mxu0 %v1875
      %v2034 = vpop.f32.mrf.mxu0
      %v2035 = vadd.f32 %v1827, %v2034
      %v2036 = vpop.f32.mrf.mxu0
      %v2037 = vadd.f32 %v1831, %v2036
      %2038 = vmatprep.mubr.f32.mxu0 0.0
      %2039 = vmatmul.mubr.f32.gmra.mxu0 %v1878
      %v2040 = vpop.f32.mrf.mxu0
      %v2041 = vadd.f32 %v1827, %v2040
      %v2042 = vpop.f32.mrf.mxu0
      %v2043 = vadd.f32 %v1831, %v2042
      %2044 = vmatprep.mubr.f32.mxu0 0.0
      %2045 = vmatmul.mubr.f32.gmra.mxu0 %v1881
      %v2046 = vpop.f32.mrf.mxu0
      %v2047 = vadd.f32 %v1827, %v2046
      %v2048 = vpop.f32.mrf.mxu0
      %v2049 = vadd.f32 %v1831, %v2048
      %2050 = vdwg.mxu0
      %v2051 = vmax.f32 %v1957, 0.0
      %v2052 = vmax.f32 %v1959, 0.0
      %v2053 = vmax.f32 %v1963, 0.0
      %v2054 = vmax.f32 %v1965, 0.0
      %v2055 = vmax.f32 %v1969, 0.0
      %v2056 = vmax.f32 %v1971, 0.0
      %v2057 = vmax.f32 %v1975, 0.0
      %v2058 = vmax.f32 %v1977, 0.0
      %v2059 = vmax.f32 %v1981, 0.0
      %v2060 = vmax.f32 %v1983, 0.0
      %v2061 = vmax.f32 %v1987, 0.0
      %v2062 = vmax.f32 %v1989, 0.0
      %v2063 = vmax.f32 %v1993, 0.0
      %v2064 = vmax.f32 %v1995, 0.0
      %v2065 = vmax.f32 %v1999, 0.0
      %v2066 = vmax.f32 %v2001, 0.0
      %v2067 = vmax.f32 %v2005, 0.0
      %v2068 = vmax.f32 %v2007, 0.0
      %v2069 = vmax.f32 %v2011, 0.0
      %v2070 = vmax.f32 %v2013, 0.0
      %v2071 = vmax.f32 %v2017, 0.0
      %v2072 = vmax.f32 %v2019, 0.0
      %v2073 = vmax.f32 %v2023, 0.0
      %v2074 = vmax.f32 %v2025, 0.0
      %v2075 = vmax.f32 %v2029, 0.0
      %v2076 = vmax.f32 %v2031, 0.0
      %v2077 = vmax.f32 %v2035, 0.0
      %v2078 = vmax.f32 %v2037, 0.0
      %v2079 = vmax.f32 %v2041, 0.0
      %v2080 = vmax.f32 %v2043, 0.0
      %v2081 = vmax.f32 %v2047, 0.0
      %v2082 = vmax.f32 %v2049, 0.0
      %v2083 = vld [vmem:[%s7] sm:$0xff]
      %v2084 = vld [vmem:[%s7 + $0x8] sm:$0xff]
      %v2085 = vld [vmem:[%s7 + $0x10] sm:$0xff]
      %v2086 = vld [vmem:[%s7 + $0x18] sm:$0xff]
      %v2087 = vld [vmem:[%s7 + $0x20] sm:$0xff]
      %v2088 = vld [vmem:[%s7 + $0x28] sm:$0xff]
      %v2089 = vld [vmem:[%s7 + $0x30] sm:$0xff]
      %v2090 = vld [vmem:[%s7 + $0x38] sm:$0xff]
      %v2091 = vld [vmem:[%s7 + $0x40] sm:$0xff]
      %v2092 = vld [vmem:[%s7 + $0x48] sm:$0xff]
      %v2093 = vld [vmem:[%s7 + $0x50] sm:$0xff]
      %v2094 = vld [vmem:[%s7 + $0x58] sm:$0xff]
      %v2095 = vld [vmem:[%s7 + $0x60] sm:$0xff]
      %v2096 = vld [vmem:[%s7 + $0x68] sm:$0xff]
      %v2097 = vld [vmem:[%s7 + $0x70] sm:$0xff]
      %v2098 = vld [vmem:[%s7 + $0x78] sm:$0xff]
      %v2099 = vld [vmem:[%s7 + $0x80] sm:$0xff]
      %v2100 = vld [vmem:[%s7 + $0x88] sm:$0xff]
      %v2101 = vld [vmem:[%s7 + $0x90] sm:$0xff]
      %v2102 = vld [vmem:[%s7 + $0x98] sm:$0xff]
      %v2103 = vld [vmem:[%s7 + $0xa0] sm:$0xff]
      %v2104 = vld [vmem:[%s7 + $0xa8] sm:$0xff]
      %v2105 = vld [vmem:[%s7 + $0xb0] sm:$0xff]
      %v2106 = vld [vmem:[%s7 + $0xb8] sm:$0xff]
      %v2107 = vld [vmem:[%s7 + $0xc0] sm:$0xff]
      %v2108 = vld [vmem:[%s7 + $0xc8] sm:$0xff]
      %v2109 = vld [vmem:[%s7 + $0xd0] sm:$0xff]
      %v2110 = vld [vmem:[%s7 + $0xd8] sm:$0xff]
      %v2111 = vld [vmem:[%s7 + $0xe0] sm:$0xff]
      %v2112 = vld [vmem:[%s7 + $0xe8] sm:$0xff]
      %v2113 = vld [vmem:[%s7 + $0xf0] sm:$0xff]
      %v2114 = vld [vmem:[%s7 + $0xf8] sm:$0xff]
      %v2115 = vld [vmem:[%s7 + $0x100] sm:$0xff]
      %v2116 = vld [vmem:[%s7 + $0x108] sm:$0xff]
      %v2117 = vld [vmem:[%s7 + $0x110] sm:$0xff]
      %v2118 = vld [vmem:[%s7 + $0x118] sm:$0xff]
      %v2119 = vld [vmem:[%s7 + $0x120] sm:$0xff]
      %v2120 = vld [vmem:[%s7 + $0x128] sm:$0xff]
      %v2121 = vld [vmem:[%s7 + $0x130] sm:$0xff]
      %v2122 = vld [vmem:[%s7 + $0x138] sm:$0xff]
      %v2123 = vld [vmem:[%s7 + $0x140] sm:$0xff]
      %v2124 = vld [vmem:[%s7 + $0x148] sm:$0xff]
      %v2125 = vld [vmem:[%s7 + $0x150] sm:$0xff]
      %v2126 = vld [vmem:[%s7 + $0x158] sm:$0xff]
      %v2127 = vld [vmem:[%s7 + $0x160] sm:$0xff]
      %v2128 = vld [vmem:[%s7 + $0x168] sm:$0xff]
      %v2129 = vld [vmem:[%s7 + $0x170] sm:$0xff]
      %v2130 = vld [vmem:[%s7 + $0x178] sm:$0xff]
      %v2131 = vld [vmem:[%s7 + $0x180] sm:$0xff]
      %v2132 = vld [vmem:[%s7 + $0x188] sm:$0xff]
      %v2133 = vld [vmem:[%s7 + $0x190] sm:$0xff]
      %v2134 = vld [vmem:[%s7 + $0x198] sm:$0xff]
      %v2135 = vld [vmem:[%s7 + $0x1a0] sm:$0xff]
      %v2136 = vld [vmem:[%s7 + $0x1a8] sm:$0xff]
      %v2137 = vld [vmem:[%s7 + $0x1b0] sm:$0xff]
      %v2138 = vld [vmem:[%s7 + $0x1b8] sm:$0xff]
      %v2139 = vld [vmem:[%s7 + $0x1c0] sm:$0xff]
      %v2140 = vld [vmem:[%s7 + $0x1c8] sm:$0xff]
      %v2141 = vld [vmem:[%s7 + $0x1d0] sm:$0xff]
      %v2142 = vld [vmem:[%s7 + $0x1d8] sm:$0xff]
      %v2143 = vld [vmem:[%s7 + $0x1e0] sm:$0xff]
      %v2144 = vld [vmem:[%s7 + $0x1e8] sm:$0xff]
      %v2145 = vld [vmem:[%s7 + $0x1f0] sm:$0xff]
      %v2146 = vld [vmem:[%s7 + $0x1f8] sm:$0xff]
      %v2147 = vld [vmem:[%s7 + $0x200] sm:$0xff]
      %v2148 = vld [vmem:[%s7 + $0x208] sm:$0xff]
      %v2149 = vld [vmem:[%s7 + $0x210] sm:$0xff]
      %v2150 = vld [vmem:[%s7 + $0x218] sm:$0xff]
      %v2151 = vld [vmem:[%s7 + $0x220] sm:$0xff]
      %v2152 = vld [vmem:[%s7 + $0x228] sm:$0xff]
      %v2153 = vld [vmem:[%s7 + $0x230] sm:$0xff]
      %v2154 = vld [vmem:[%s7 + $0x238] sm:$0xff]
      %v2155 = vld [vmem:[%s7 + $0x240] sm:$0xff]
      %v2156 = vld [vmem:[%s7 + $0x248] sm:$0xff]
      %v2157 = vld [vmem:[%s7 + $0x250] sm:$0xff]
      %v2158 = vld [vmem:[%s7 + $0x258] sm:$0xff]
      %v2159 = vld [vmem:[%s7 + $0x260] sm:$0xff]
      %v2160 = vld [vmem:[%s7 + $0x268] sm:$0xff]
      %v2161 = vld [vmem:[%s7 + $0x270] sm:$0xff]
      %v2162 = vld [vmem:[%s7 + $0x278] sm:$0xff]
      %v2163 = vld [vmem:[%s7 + $0x280] sm:$0xff]
      %v2164 = vld [vmem:[%s7 + $0x288] sm:$0xff]
      %v2165 = vld [vmem:[%s7 + $0x290] sm:$0xff]
      %v2166 = vld [vmem:[%s7 + $0x298] sm:$0xff]
      %v2167 = vld [vmem:[%s7 + $0x2a0] sm:$0xff]
      %v2168 = vld [vmem:[%s7 + $0x2a8] sm:$0xff]
      %v2169 = vld [vmem:[%s7 + $0x2b0] sm:$0xff]
      %v2170 = vld [vmem:[%s7 + $0x2b8] sm:$0xff]
      %v2171 = vld [vmem:[%s7 + $0x2c0] sm:$0xff]
      %v2172 = vld [vmem:[%s7 + $0x2c8] sm:$0xff]
      %v2173 = vld [vmem:[%s7 + $0x2d0] sm:$0xff]
      %v2174 = vld [vmem:[%s7 + $0x2d8] sm:$0xff]
      %v2175 = vld [vmem:[%s7 + $0x2e0] sm:$0xff]
      %v2176 = vld [vmem:[%s7 + $0x2e8] sm:$0xff]
      %v2177 = vld [vmem:[%s7 + $0x2f0] sm:$0xff]
      %v2178 = vld [vmem:[%s7 + $0x2f8] sm:$0xff]
      %v2179 = vld [vmem:[%s7 + $0x300] sm:$0xff]
      %v2180 = vld [vmem:[%s7 + $0x308] sm:$0xff]
      %v2181 = vld [vmem:[%s7 + $0x310] sm:$0xff]
      %v2182 = vld [vmem:[%s7 + $0x318] sm:$0xff]
      %v2183 = vld [vmem:[%s7 + $0x320] sm:$0xff]
      %v2184 = vld [vmem:[%s7 + $0x328] sm:$0xff]
      %v2185 = vld [vmem:[%s7 + $0x330] sm:$0xff]
      %v2186 = vld [vmem:[%s7 + $0x338] sm:$0xff]
      %v2187 = vld [vmem:[%s7 + $0x340] sm:$0xff]
      %v2188 = vld [vmem:[%s7 + $0x348] sm:$0xff]
      %v2189 = vld [vmem:[%s7 + $0x350] sm:$0xff]
      %v2190 = vld [vmem:[%s7 + $0x358] sm:$0xff]
      %v2191 = vld [vmem:[%s7 + $0x360] sm:$0xff]
      %v2192 = vld [vmem:[%s7 + $0x368] sm:$0xff]
      %v2193 = vld [vmem:[%s7 + $0x370] sm:$0xff]
      %v2194 = vld [vmem:[%s7 + $0x378] sm:$0xff]
      %v2195 = vld [vmem:[%s7 + $0x380] sm:$0xff]
      %v2196 = vld [vmem:[%s7 + $0x388] sm:$0xff]
      %v2197 = vld [vmem:[%s7 + $0x390] sm:$0xff]
      %v2198 = vld [vmem:[%s7 + $0x398] sm:$0xff]
      %v2199 = vld [vmem:[%s7 + $0x3a0] sm:$0xff]
      %v2200 = vld [vmem:[%s7 + $0x3a8] sm:$0xff]
      %v2201 = vld [vmem:[%s7 + $0x3b0] sm:$0xff]
      %v2202 = vld [vmem:[%s7 + $0x3b8] sm:$0xff]
      %v2203 = vld [vmem:[%s7 + $0x3c0] sm:$0xff]
      %v2204 = vld [vmem:[%s7 + $0x3c8] sm:$0xff]
      %v2205 = vld [vmem:[%s7 + $0x3d0] sm:$0xff]
      %v2206 = vld [vmem:[%s7 + $0x3d8] sm:$0xff]
      %v2207 = vld [vmem:[%s7 + $0x3e0] sm:$0xff]
      %v2208 = vld [vmem:[%s7 + $0x3e8] sm:$0xff]
      %v2209 = vld [vmem:[%s7 + $0x3f0] sm:$0xff]
      %v2210 = vld [vmem:[%s7 + $0x3f8] sm:$0xff]
      %v2211 = vld [vmem:[%s7 + $0x400] sm:$0xff]
      %v2212 = vld [vmem:[%s7 + $0x408] sm:$0xff]
      %v2213 = vld [vmem:[%s7 + $0x410] sm:$0xff]
      %v2214 = vld [vmem:[%s7 + $0x418] sm:$0xff]
      %v2215 = vld [vmem:[%s7 + $0x420] sm:$0xff]
      %v2216 = vld [vmem:[%s7 + $0x428] sm:$0xff]
      %v2217 = vld [vmem:[%s7 + $0x430] sm:$0xff]
      %v2218 = vld [vmem:[%s7 + $0x438] sm:$0xff]
      %v2219 = vld [vmem:[%s7 + $0x440] sm:$0xff]
      %v2220 = vld [vmem:[%s7 + $0x448] sm:$0xff]
      %v2221 = vld [vmem:[%s7 + $0x450] sm:$0xff]
      %v2222 = vld [vmem:[%s7 + $0x458] sm:$0xff]
      %v2223 = vld [vmem:[%s7 + $0x460] sm:$0xff]
      %v2224 = vld [vmem:[%s7 + $0x468] sm:$0xff]
      %v2225 = vld [vmem:[%s7 + $0x470] sm:$0xff]
      %v2226 = vld [vmem:[%s7 + $0x478] sm:$0xff]
      %v2227 = vld [vmem:[%s7 + $0x480] sm:$0xff]
      %v2228 = vld [vmem:[%s7 + $0x488] sm:$0xff]
      %v2229 = vld [vmem:[%s7 + $0x490] sm:$0xff]
      %v2230 = vld [vmem:[%s7 + $0x498] sm:$0xff]
      %v2231 = vld [vmem:[%s7 + $0x4a0] sm:$0xff]
      %v2232 = vld [vmem:[%s7 + $0x4a8] sm:$0xff]
      %v2233 = vld [vmem:[%s7 + $0x4b0] sm:$0xff]
      %v2234 = vld [vmem:[%s7 + $0x4b8] sm:$0xff]
      %v2235 = vld [vmem:[%s7 + $0x4c0] sm:$0xff]
      %v2236 = vld [vmem:[%s7 + $0x4c8] sm:$0xff]
      %v2237 = vld [vmem:[%s7 + $0x4d0] sm:$0xff]
      %v2238 = vld [vmem:[%s7 + $0x4d8] sm:$0xff]
      %v2239 = vld [vmem:[%s7 + $0x4e0] sm:$0xff]
      %v2240 = vld [vmem:[%s7 + $0x4e8] sm:$0xff]
      %v2241 = vld [vmem:[%s7 + $0x4f0] sm:$0xff]
      %v2242 = vld [vmem:[%s7 + $0x4f8] sm:$0xff]
      %v2243 = vld [vmem:[%s7 + $0x500] sm:$0xff]
      %v2244 = vld [vmem:[%s7 + $0x508] sm:$0xff]
      %v2245 = vld [vmem:[%s7 + $0x510] sm:$0xff]
      %v2246 = vld [vmem:[%s7 + $0x518] sm:$0xff]
      %v2247 = vld [vmem:[%s7 + $0x520] sm:$0xff]
      %v2248 = vld [vmem:[%s7 + $0x528] sm:$0xff]
      %v2249 = vld [vmem:[%s7 + $0x530] sm:$0xff]
      %v2250 = vld [vmem:[%s7 + $0x538] sm:$0xff]
      %v2251 = vld [vmem:[%s7 + $0x540] sm:$0xff]
      %v2252 = vld [vmem:[%s7 + $0x548] sm:$0xff]
      %v2253 = vld [vmem:[%s7 + $0x550] sm:$0xff]
      %v2254 = vld [vmem:[%s7 + $0x558] sm:$0xff]
      %v2255 = vld [vmem:[%s7 + $0x560] sm:$0xff]
      %v2256 = vld [vmem:[%s7 + $0x568] sm:$0xff]
      %v2257 = vld [vmem:[%s7 + $0x570] sm:$0xff]
      %v2258 = vld [vmem:[%s8] sm:$0xff]
      %v2260 = vlaneseq
      %v2261 = vshrl.u32 %v2260, 7
      %v2262 = vsub.s32 0, %v2261
      %v2263 = vrot.slane %v2258, %v2262
      %v2264 = vlaneseq
      %v2265 = vshrl.u32 %v2264, 7
      %v2266 = vsub.s32 1, %v2265
      %v2267 = vrot.slane %v2258, %v2266
      %v2268 = vlaneseq
      %v2269 = vshrl.u32 %v2268, 7
      %v2270 = vsub.s32 2, %v2269
      %v2271 = vrot.slane %v2258, %v2270
      %v2272 = vlaneseq
      %v2273 = vshrl.u32 %v2272, 7
      %v2274 = vsub.s32 3, %v2273
      %v2275 = vrot.slane %v2258, %v2274
      %v2276 = vlaneseq
      %v2277 = vshrl.u32 %v2276, 7
      %v2278 = vsub.s32 4, %v2277
      %v2279 = vrot.slane %v2258, %v2278
      %v2280 = vlaneseq
      %v2281 = vshrl.u32 %v2280, 7
      %v2282 = vsub.s32 5, %v2281
      %v2283 = vrot.slane %v2258, %v2282
      %v2284 = vlaneseq
      %v2285 = vshrl.u32 %v2284, 7
      %v2286 = vsub.s32 6, %v2285
      %v2287 = vrot.slane %v2258, %v2286
      %v2296 = vsel %vm1446, %v2052, 0
      %v2299 = vsel %vm1446, %v2054, 0
      %v2302 = vsel %vm1446, %v2056, 0
      %v2305 = vsel %vm1446, %v2058, 0
      %v2308 = vsel %vm1446, %v2060, 0
      %v2311 = vsel %vm1446, %v2062, 0
      %v2314 = vsel %vm1446, %v2064, 0
      %v2317 = vsel %vm1446, %v2066, 0
      %v2320 = vsel %vm1446, %v2068, 0
      %v2323 = vsel %vm1446, %v2070, 0
      %v2326 = vsel %vm1446, %v2072, 0
      %v2329 = vsel %vm1446, %v2074, 0
      %v2332 = vsel %vm1446, %v2076, 0
      %v2335 = vsel %vm1446, %v2078, 0
      %v2338 = vsel %vm1446, %v2080, 0
      %v2341 = vsel %vm1446, %v2082, 0
      %2343 = vmatprep.subr.mxu0 %v2189
      %2344 = vmatpush1.msra.mxu0 %v2188
      %2345 = vmatprep.subr.mxu0 %v2182
      %2346 = vmatpush1.msra.mxu0 %v2181
      %2347 = vmatprep.subr.mxu0 %v2175
      %2348 = vmatpush1.msra.mxu0 %v2174
      %2349 = vmatprep.subr.mxu0 %v2168
      %2350 = vmatpush1.msra.mxu0 %v2167
      %2351 = vmatprep.subr.mxu0 %v2161
      %2352 = vmatpush1.msra.mxu0 %v2160
      %2353 = vmatprep.subr.mxu0 %v2154
      %2354 = vmatpush1.msra.mxu0 %v2153
      %2355 = vmatprep.subr.mxu0 %v2147
      %2356 = vmatpush1.msra.mxu0 %v2146
      %2357 = vmatprep.subr.mxu0 %v2140
      %2358 = vmatpush1.msra.mxu0 %v2139
      %2359 = vmatprep.subr.mxu0 %v2133
      %2360 = vmatpush1.msra.mxu0 %v2132
      %2361 = vmatprep.subr.mxu0 %v2126
      %2362 = vmatpush1.msra.mxu0 %v2125
      %2363 = vmatprep.subr.mxu0 %v2119
      %2364 = vmatpush1.msra.mxu0 %v2118
      %2365 = vmatprep.subr.mxu0 %v2112
      %2366 = vmatpush1.msra.mxu0 %v2111
      %2367 = vmatprep.subr.mxu0 %v2105
      %2368 = vmatpush1.msra.mxu0 %v2104
      %2369 = vmatprep.subr.mxu0 %v2098
      %2370 = vmatpush1.msra.mxu0 %v2097
      %2371 = vmatprep.subr.mxu0 %v2091
      %2372 = vmatpush1.msra.mxu0 %v2090
      %2373 = vmatprep.subr.mxu0 %v2084
      %2374 = vmatpush1.msra.mxu0 %v2083
      %2375 = vmatprep.subr.mxu0 0.0
      %2376 = vmatpush2.msra.mxu0 0.0
      %2377 = vmatprep.subr.mxu0 0.0
      %2378 = vmatpush2.msra.mxu0 0.0
      %2379 = vmatprep.subr.mxu0 0.0
      %2380 = vmatpush2.msra.mxu0 0.0
      %2381 = vmatprep.subr.mxu0 0.0
      %2382 = vmatpush2.msra.mxu0 0.0
      %2383 = vmatprep.subr.mxu0 0.0
      %2384 = vmatpush2.msra.mxu0 0.0
      %2385 = vmatprep.subr.mxu0 0.0
      %2386 = vmatpush2.msra.mxu0 0.0
      %2387 = vmatprep.subr.mxu0 0.0
      %2388 = vmatpush2.msra.mxu0 0.0
      %2389 = vmatprep.subr.mxu0 %v2252
      %2390 = vmatpush2.msra.mxu0 %v2251
      %2391 = vmatprep.subr.mxu0 %v2245
      %2392 = vmatpush2.msra.mxu0 %v2244
      %2393 = vmatprep.subr.mxu0 %v2238
      %2394 = vmatpush2.msra.mxu0 %v2237
      %2395 = vmatprep.subr.mxu0 %v2231
      %2396 = vmatpush2.msra.mxu0 %v2230
      %2397 = vmatprep.subr.mxu0 %v2224
      %2398 = vmatpush2.msra.mxu0 %v2223
      %2399 = vmatprep.subr.mxu0 %v2217
      %2400 = vmatpush2.msra.mxu0 %v2216
      %2401 = vmatprep.subr.mxu0 %v2210
      %2402 = vmatpush2.msra.mxu0 %v2209
      %2403 = vmatprep.subr.mxu0 %v2203
      %2404 = vmatpush2.msra.mxu0 %v2202
      %2405 = vmatprep.subr.mxu0 %v2196
      %2406 = vmatpush2.msra.mxu0 %v2195
      %2407 = vmatprep.mubr.f32.mxu0 %v2296
      %2408 = vmatmul.mubr.f32.gmra.mxu0 %v2051
      %v2409 = vpop.f32.mrf.mxu0
      %v2410 = vadd.f32 %v2263, %v2409
      %v2411 = vpop.f32.mrf.mxu0
      %v2412 = vadd.f32 %v2267, %v2411
      %2413 = vmatprep.mubr.f32.mxu0 %v2299
      %2414 = vmatmul.mubr.f32.gmra.mxu0 %v2053
      %v2415 = vpop.f32.mrf.mxu0
      %v2416 = vadd.f32 %v2263, %v2415
      %v2417 = vpop.f32.mrf.mxu0
      %v2418 = vadd.f32 %v2267, %v2417
      %2419 = vmatprep.mubr.f32.mxu0 %v2302
      %2420 = vmatmul.mubr.f32.gmra.mxu0 %v2055
      %v2421 = vpop.f32.mrf.mxu0
      %v2422 = vadd.f32 %v2263, %v2421
      %v2423 = vpop.f32.mrf.mxu0
      %v2424 = vadd.f32 %v2267, %v2423
      %2425 = vmatprep.mubr.f32.mxu0 %v2305
      %2426 = vmatmul.mubr.f32.gmra.mxu0 %v2057
      %v2427 = vpop.f32.mrf.mxu0
      %v2428 = vadd.f32 %v2263, %v2427
      %v2429 = vpop.f32.mrf.mxu0
      %v2430 = vadd.f32 %v2267, %v2429
      %2431 = vmatprep.mubr.f32.mxu0 %v2308
      %2432 = vmatmul.mubr.f32.gmra.mxu0 %v2059
      %v2433 = vpop.f32.mrf.mxu0
      %v2434 = vadd.f32 %v2263, %v2433
      %v2435 = vpop.f32.mrf.mxu0
      %v2436 = vadd.f32 %v2267, %v2435
      %2437 = vmatprep.mubr.f32.mxu0 %v2311
      %2438 = vmatmul.mubr.f32.gmra.mxu0 %v2061
      %v2439 = vpop.f32.mrf.mxu0
      %v2440 = vadd.f32 %v2263, %v2439
      %v2441 = vpop.f32.mrf.mxu0
      %v2442 = vadd.f32 %v2267, %v2441
      %2443 = vmatprep.mubr.f32.mxu0 %v2314
      %2444 = vmatmul.mubr.f32.gmra.mxu0 %v2063
      %v2445 = vpop.f32.mrf.mxu0
      %v2446 = vadd.f32 %v2263, %v2445
      %v2447 = vpop.f32.mrf.mxu0
      %v2448 = vadd.f32 %v2267, %v2447
      %2449 = vmatprep.mubr.f32.mxu0 %v2317
      %2450 = vmatmul.mubr.f32.gmra.mxu0 %v2065
      %v2451 = vpop.f32.mrf.mxu0
      %v2452 = vadd.f32 %v2263, %v2451
      %v2453 = vpop.f32.mrf.mxu0
      %v2454 = vadd.f32 %v2267, %v2453
      %2455 = vmatprep.mubr.f32.mxu0 %v2320
      %2456 = vmatmul.mubr.f32.gmra.mxu0 %v2067
      %v2457 = vpop.f32.mrf.mxu0
      %v2458 = vadd.f32 %v2263, %v2457
      %v2459 = vpop.f32.mrf.mxu0
      %v2460 = vadd.f32 %v2267, %v2459
      %2461 = vmatprep.mubr.f32.mxu0 %v2323
      %2462 = vmatmul.mubr.f32.gmra.mxu0 %v2069
      %v2463 = vpop.f32.mrf.mxu0
      %v2464 = vadd.f32 %v2263, %v2463
      %v2465 = vpop.f32.mrf.mxu0
      %v2466 = vadd.f32 %v2267, %v2465
      %2467 = vmatprep.mubr.f32.mxu0 %v2326
      %2468 = vmatmul.mubr.f32.gmra.mxu0 %v2071
      %v2469 = vpop.f32.mrf.mxu0
      %v2470 = vadd.f32 %v2263, %v2469
      %v2471 = vpop.f32.mrf.mxu0
      %v2472 = vadd.f32 %v2267, %v2471
      %2473 = vmatprep.mubr.f32.mxu0 %v2329
      %2474 = vmatmul.mubr.f32.gmra.mxu0 %v2073
      %v2475 = vpop.f32.mrf.mxu0
      %v2476 = vadd.f32 %v2263, %v2475
      %v2477 = vpop.f32.mrf.mxu0
      %v2478 = vadd.f32 %v2267, %v2477
      %2479 = vmatprep.mubr.f32.mxu0 %v2332
      %2480 = vmatmul.mubr.f32.gmra.mxu0 %v2075
      %v2481 = vpop.f32.mrf.mxu0
      %v2482 = vadd.f32 %v2263, %v2481
      %v2483 = vpop.f32.mrf.mxu0
      %v2484 = vadd.f32 %v2267, %v2483
      %2485 = vmatprep.mubr.f32.mxu0 %v2335
      %2486 = vmatmul.mubr.f32.gmra.mxu0 %v2077
      %v2487 = vpop.f32.mrf.mxu0
      %v2488 = vadd.f32 %v2263, %v2487
      %v2489 = vpop.f32.mrf.mxu0
      %v2490 = vadd.f32 %v2267, %v2489
      %2491 = vmatprep.mubr.f32.mxu0 %v2338
      %2492 = vmatmul.mubr.f32.gmra.mxu0 %v2079
      %v2493 = vpop.f32.mrf.mxu0
      %v2494 = vadd.f32 %v2263, %v2493
      %v2495 = vpop.f32.mrf.mxu0
      %v2496 = vadd.f32 %v2267, %v2495
      %2497 = vmatprep.mubr.f32.mxu0 %v2341
      %2498 = vmatmul.mubr.f32.gmra.mxu0 %v2081
      %v2499 = vpop.f32.mrf.mxu0
      %v2500 = vadd.f32 %v2263, %v2499
      %v2501 = vpop.f32.mrf.mxu0
      %v2502 = vadd.f32 %v2267, %v2501
      %2503 = vdwg.mxu0
      %2504 = vmatprep.subr.mxu0 %v2191
      %2505 = vmatpush1.msra.mxu0 %v2190
      %2506 = vmatprep.subr.mxu0 %v2184
      %2507 = vmatpush1.msra.mxu0 %v2183
      %2508 = vmatprep.subr.mxu0 %v2177
      %2509 = vmatpush1.msra.mxu0 %v2176
      %2510 = vmatprep.subr.mxu0 %v2170
      %2511 = vmatpush1.msra.mxu0 %v2169
      %2512 = vmatprep.subr.mxu0 %v2163
      %2513 = vmatpush1.msra.mxu0 %v2162
      %2514 = vmatprep.subr.mxu0 %v2156
      %2515 = vmatpush1.msra.mxu0 %v2155
      %2516 = vmatprep.subr.mxu0 %v2149
      %2517 = vmatpush1.msra.mxu0 %v2148
      %2518 = vmatprep.subr.mxu0 %v2142
      %2519 = vmatpush1.msra.mxu0 %v2141
      %2520 = vmatprep.subr.mxu0 %v2135
      %2521 = vmatpush1.msra.mxu0 %v2134
      %2522 = vmatprep.subr.mxu0 %v2128
      %2523 = vmatpush1.msra.mxu0 %v2127
      %2524 = vmatprep.subr.mxu0 %v2121
      %2525 = vmatpush1.msra.mxu0 %v2120
      %2526 = vmatprep.subr.mxu0 %v2114
      %2527 = vmatpush1.msra.mxu0 %v2113
      %2528 = vmatprep.subr.mxu0 %v2107
      %2529 = vmatpush1.msra.mxu0 %v2106
      %2530 = vmatprep.subr.mxu0 %v2100
      %2531 = vmatpush1.msra.mxu0 %v2099
      %2532 = vmatprep.subr.mxu0 %v2093
      %2533 = vmatpush1.msra.mxu0 %v2092
      %2534 = vmatprep.subr.mxu0 %v2086
      %2535 = vmatpush1.msra.mxu0 %v2085
      %2536 = vmatprep.subr.mxu0 0.0
      %2537 = vmatpush2.msra.mxu0 0.0
      %2538 = vmatprep.subr.mxu0 0.0
      %2539 = vmatpush2.msra.mxu0 0.0
      %2540 = vmatprep.subr.mxu0 0.0
      %2541 = vmatpush2.msra.mxu0 0.0
      %2542 = vmatprep.subr.mxu0 0.0
      %2543 = vmatpush2.msra.mxu0 0.0
      %2544 = vmatprep.subr.mxu0 0.0
      %2545 = vmatpush2.msra.mxu0 0.0
      %2546 = vmatprep.subr.mxu0 0.0
      %2547 = vmatpush2.msra.mxu0 0.0
      %2548 = vmatprep.subr.mxu0 0.0
      %2549 = vmatpush2.msra.mxu0 0.0
      %2550 = vmatprep.subr.mxu0 %v2254
      %2551 = vmatpush2.msra.mxu0 %v2253
      %2552 = vmatprep.subr.mxu0 %v2247
      %2553 = vmatpush2.msra.mxu0 %v2246
      %2554 = vmatprep.subr.mxu0 %v2240
      %2555 = vmatpush2.msra.mxu0 %v2239
      %2556 = vmatprep.subr.mxu0 %v2233
      %2557 = vmatpush2.msra.mxu0 %v2232
      %2558 = vmatprep.subr.mxu0 %v2226
      %2559 = vmatpush2.msra.mxu0 %v2225
      %2560 = vmatprep.subr.mxu0 %v2219
      %2561 = vmatpush2.msra.mxu0 %v2218
      %2562 = vmatprep.subr.mxu0 %v2212
      %2563 = vmatpush2.msra.mxu0 %v2211
      %2564 = vmatprep.subr.mxu0 %v2205
      %2565 = vmatpush2.msra.mxu0 %v2204
      %2566 = vmatprep.subr.mxu0 %v2198
      %2567 = vmatpush2.msra.mxu0 %v2197
      %2568 = vmatprep.mubr.f32.mxu0 %v2296
      %2569 = vmatmul.mubr.f32.gmra.mxu0 %v2051
      %v2570 = vpop.f32.mrf.mxu0
      %v2571 = vadd.f32 %v2271, %v2570
      %v2572 = vpop.f32.mrf.mxu0
      %v2573 = vadd.f32 %v2275, %v2572
      %2574 = vmatprep.mubr.f32.mxu0 %v2299
      %2575 = vmatmul.mubr.f32.gmra.mxu0 %v2053
      %v2576 = vpop.f32.mrf.mxu0
      %v2577 = vadd.f32 %v2271, %v2576
      %v2578 = vpop.f32.mrf.mxu0
      %v2579 = vadd.f32 %v2275, %v2578
      %2580 = vmatprep.mubr.f32.mxu0 %v2302
      %2581 = vmatmul.mubr.f32.gmra.mxu0 %v2055
      %v2582 = vpop.f32.mrf.mxu0
      %v2583 = vadd.f32 %v2271, %v2582
      %v2584 = vpop.f32.mrf.mxu0
      %v2585 = vadd.f32 %v2275, %v2584
      %2586 = vmatprep.mubr.f32.mxu0 %v2305
      %2587 = vmatmul.mubr.f32.gmra.mxu0 %v2057
      %v2588 = vpop.f32.mrf.mxu0
      %v2589 = vadd.f32 %v2271, %v2588
      %v2590 = vpop.f32.mrf.mxu0
      %v2591 = vadd.f32 %v2275, %v2590
      %2592 = vmatprep.mubr.f32.mxu0 %v2308
      %2593 = vmatmul.mubr.f32.gmra.mxu0 %v2059
      %v2594 = vpop.f32.mrf.mxu0
      %v2595 = vadd.f32 %v2271, %v2594
      %v2596 = vpop.f32.mrf.mxu0
      %v2597 = vadd.f32 %v2275, %v2596
      %2598 = vmatprep.mubr.f32.mxu0 %v2311
      %2599 = vmatmul.mubr.f32.gmra.mxu0 %v2061
      %v2600 = vpop.f32.mrf.mxu0
      %v2601 = vadd.f32 %v2271, %v2600
      %v2602 = vpop.f32.mrf.mxu0
      %v2603 = vadd.f32 %v2275, %v2602
      %2604 = vmatprep.mubr.f32.mxu0 %v2314
      %2605 = vmatmul.mubr.f32.gmra.mxu0 %v2063
      %v2606 = vpop.f32.mrf.mxu0
      %v2607 = vadd.f32 %v2271, %v2606
      %v2608 = vpop.f32.mrf.mxu0
      %v2609 = vadd.f32 %v2275, %v2608
      %2610 = vmatprep.mubr.f32.mxu0 %v2317
      %2611 = vmatmul.mubr.f32.gmra.mxu0 %v2065
      %v2612 = vpop.f32.mrf.mxu0
      %v2613 = vadd.f32 %v2271, %v2612
      %v2614 = vpop.f32.mrf.mxu0
      %v2615 = vadd.f32 %v2275, %v2614
      %2616 = vmatprep.mubr.f32.mxu0 %v2320
      %2617 = vmatmul.mubr.f32.gmra.mxu0 %v2067
      %v2618 = vpop.f32.mrf.mxu0
      %v2619 = vadd.f32 %v2271, %v2618
      %v2620 = vpop.f32.mrf.mxu0
      %v2621 = vadd.f32 %v2275, %v2620
      %2622 = vmatprep.mubr.f32.mxu0 %v2323
      %2623 = vmatmul.mubr.f32.gmra.mxu0 %v2069
      %v2624 = vpop.f32.mrf.mxu0
      %v2625 = vadd.f32 %v2271, %v2624
      %v2626 = vpop.f32.mrf.mxu0
      %v2627 = vadd.f32 %v2275, %v2626
      %2628 = vmatprep.mubr.f32.mxu0 %v2326
      %2629 = vmatmul.mubr.f32.gmra.mxu0 %v2071
      %v2630 = vpop.f32.mrf.mxu0
      %v2631 = vadd.f32 %v2271, %v2630
      %v2632 = vpop.f32.mrf.mxu0
      %v2633 = vadd.f32 %v2275, %v2632
      %2634 = vmatprep.mubr.f32.mxu0 %v2329
      %2635 = vmatmul.mubr.f32.gmra.mxu0 %v2073
      %v2636 = vpop.f32.mrf.mxu0
      %v2637 = vadd.f32 %v2271, %v2636
      %v2638 = vpop.f32.mrf.mxu0
      %v2639 = vadd.f32 %v2275, %v2638
      %2640 = vmatprep.mubr.f32.mxu0 %v2332
      %2641 = vmatmul.mubr.f32.gmra.mxu0 %v2075
      %v2642 = vpop.f32.mrf.mxu0
      %v2643 = vadd.f32 %v2271, %v2642
      %v2644 = vpop.f32.mrf.mxu0
      %v2645 = vadd.f32 %v2275, %v2644
      %2646 = vmatprep.mubr.f32.mxu0 %v2335
      %2647 = vmatmul.mubr.f32.gmra.mxu0 %v2077
      %v2648 = vpop.f32.mrf.mxu0
      %v2649 = vadd.f32 %v2271, %v2648
      %v2650 = vpop.f32.mrf.mxu0
      %v2651 = vadd.f32 %v2275, %v2650
      %2652 = vmatprep.mubr.f32.mxu0 %v2338
      %2653 = vmatmul.mubr.f32.gmra.mxu0 %v2079
      %v2654 = vpop.f32.mrf.mxu0
      %v2655 = vadd.f32 %v2271, %v2654
      %v2656 = vpop.f32.mrf.mxu0
      %v2657 = vadd.f32 %v2275, %v2656
      %2658 = vmatprep.mubr.f32.mxu0 %v2341
      %2659 = vmatmul.mubr.f32.gmra.mxu0 %v2081
      %v2660 = vpop.f32.mrf.mxu0
      %v2661 = vadd.f32 %v2271, %v2660
      %v2662 = vpop.f32.mrf.mxu0
      %v2663 = vadd.f32 %v2275, %v2662
      %2664 = vdwg.mxu0
      %2665 = vmatprep.subr.mxu0 %v2193
      %2666 = vmatpush1.msra.mxu0 %v2192
      %2667 = vmatprep.subr.mxu0 %v2186
      %2668 = vmatpush1.msra.mxu0 %v2185
      %2669 = vmatprep.subr.mxu0 %v2179
      %2670 = vmatpush1.msra.mxu0 %v2178
      %2671 = vmatprep.subr.mxu0 %v2172
      %2672 = vmatpush1.msra.mxu0 %v2171
      %2673 = vmatprep.subr.mxu0 %v2165
      %2674 = vmatpush1.msra.mxu0 %v2164
      %2675 = vmatprep.subr.mxu0 %v2158
      %2676 = vmatpush1.msra.mxu0 %v2157
      %2677 = vmatprep.subr.mxu0 %v2151
      %2678 = vmatpush1.msra.mxu0 %v2150
      %2679 = vmatprep.subr.mxu0 %v2144
      %2680 = vmatpush1.msra.mxu0 %v2143
      %2681 = vmatprep.subr.mxu0 %v2137
      %2682 = vmatpush1.msra.mxu0 %v2136
      %2683 = vmatprep.subr.mxu0 %v2130
      %2684 = vmatpush1.msra.mxu0 %v2129
      %2685 = vmatprep.subr.mxu0 %v2123
      %2686 = vmatpush1.msra.mxu0 %v2122
      %2687 = vmatprep.subr.mxu0 %v2116
      %2688 = vmatpush1.msra.mxu0 %v2115
      %2689 = vmatprep.subr.mxu0 %v2109
      %2690 = vmatpush1.msra.mxu0 %v2108
      %2691 = vmatprep.subr.mxu0 %v2102
      %2692 = vmatpush1.msra.mxu0 %v2101
      %2693 = vmatprep.subr.mxu0 %v2095
      %2694 = vmatpush1.msra.mxu0 %v2094
      %2695 = vmatprep.subr.mxu0 %v2088
      %2696 = vmatpush1.msra.mxu0 %v2087
      %2697 = vmatprep.subr.mxu0 0.0
      %2698 = vmatpush2.msra.mxu0 0.0
      %2699 = vmatprep.subr.mxu0 0.0
      %2700 = vmatpush2.msra.mxu0 0.0
      %2701 = vmatprep.subr.mxu0 0.0
      %2702 = vmatpush2.msra.mxu0 0.0
      %2703 = vmatprep.subr.mxu0 0.0
      %2704 = vmatpush2.msra.mxu0 0.0
      %2705 = vmatprep.subr.mxu0 0.0
      %2706 = vmatpush2.msra.mxu0 0.0
      %2707 = vmatprep.subr.mxu0 0.0
      %2708 = vmatpush2.msra.mxu0 0.0
      %2709 = vmatprep.subr.mxu0 0.0
      %2710 = vmatpush2.msra.mxu0 0.0
      %2711 = vmatprep.subr.mxu0 %v2256
      %2712 = vmatpush2.msra.mxu0 %v2255
      %2713 = vmatprep.subr.mxu0 %v2249
      %2714 = vmatpush2.msra.mxu0 %v2248
      %2715 = vmatprep.subr.mxu0 %v2242
      %2716 = vmatpush2.msra.mxu0 %v2241
      %2717 = vmatprep.subr.mxu0 %v2235
      %2718 = vmatpush2.msra.mxu0 %v2234
      %2719 = vmatprep.subr.mxu0 %v2228
      %2720 = vmatpush2.msra.mxu0 %v2227
      %2721 = vmatprep.subr.mxu0 %v2221
      %2722 = vmatpush2.msra.mxu0 %v2220
      %2723 = vmatprep.subr.mxu0 %v2214
      %2724 = vmatpush2.msra.mxu0 %v2213
      %2725 = vmatprep.subr.mxu0 %v2207
      %2726 = vmatpush2.msra.mxu0 %v2206
      %2727 = vmatprep.subr.mxu0 %v2200
      %2728 = vmatpush2.msra.mxu0 %v2199
      %2729 = vmatprep.mubr.f32.mxu0 %v2296
      %2730 = vmatmul.mubr.f32.gmra.mxu0 %v2051
      %v2731 = vpop.f32.mrf.mxu0
      %v2732 = vadd.f32 %v2279, %v2731
      %v2733 = vpop.f32.mrf.mxu0
      %v2734 = vadd.f32 %v2283, %v2733
      %2735 = vmatprep.mubr.f32.mxu0 %v2299
      %2736 = vmatmul.mubr.f32.gmra.mxu0 %v2053
      %v2737 = vpop.f32.mrf.mxu0
      %v2738 = vadd.f32 %v2279, %v2737
      %v2739 = vpop.f32.mrf.mxu0
      %v2740 = vadd.f32 %v2283, %v2739
      %2741 = vmatprep.mubr.f32.mxu0 %v2302
      %2742 = vmatmul.mubr.f32.gmra.mxu0 %v2055
      %v2743 = vpop.f32.mrf.mxu0
      %v2744 = vadd.f32 %v2279, %v2743
      %v2745 = vpop.f32.mrf.mxu0
      %v2746 = vadd.f32 %v2283, %v2745
      %2747 = vmatprep.mubr.f32.mxu0 %v2305
      %2748 = vmatmul.mubr.f32.gmra.mxu0 %v2057
      %v2749 = vpop.f32.mrf.mxu0
      %v2750 = vadd.f32 %v2279, %v2749
      %v2751 = vpop.f32.mrf.mxu0
      %v2752 = vadd.f32 %v2283, %v2751
      %2753 = vmatprep.mubr.f32.mxu0 %v2308
      %2754 = vmatmul.mubr.f32.gmra.mxu0 %v2059
      %v2755 = vpop.f32.mrf.mxu0
      %v2756 = vadd.f32 %v2279, %v2755
      %v2757 = vpop.f32.mrf.mxu0
      %v2758 = vadd.f32 %v2283, %v2757
      %2759 = vmatprep.mubr.f32.mxu0 %v2311
      %2760 = vmatmul.mubr.f32.gmra.mxu0 %v2061
      %v2761 = vpop.f32.mrf.mxu0
      %v2762 = vadd.f32 %v2279, %v2761
      %v2763 = vpop.f32.mrf.mxu0
      %v2764 = vadd.f32 %v2283, %v2763
      %2765 = vmatprep.mubr.f32.mxu0 %v2314
      %2766 = vmatmul.mubr.f32.gmra.mxu0 %v2063
      %v2767 = vpop.f32.mrf.mxu0
      %v2768 = vadd.f32 %v2279, %v2767
      %v2769 = vpop.f32.mrf.mxu0
      %v2770 = vadd.f32 %v2283, %v2769
      %2771 = vmatprep.mubr.f32.mxu0 %v2317
      %2772 = vmatmul.mubr.f32.gmra.mxu0 %v2065
      %v2773 = vpop.f32.mrf.mxu0
      %v2774 = vadd.f32 %v2279, %v2773
      %v2775 = vpop.f32.mrf.mxu0
      %v2776 = vadd.f32 %v2283, %v2775
      %2777 = vmatprep.mubr.f32.mxu0 %v2320
      %2778 = vmatmul.mubr.f32.gmra.mxu0 %v2067
      %v2779 = vpop.f32.mrf.mxu0
      %v2780 = vadd.f32 %v2279, %v2779
      %v2781 = vpop.f32.mrf.mxu0
      %v2782 = vadd.f32 %v2283, %v2781
      %2783 = vmatprep.mubr.f32.mxu0 %v2323
      %2784 = vmatmul.mubr.f32.gmra.mxu0 %v2069
      %v2785 = vpop.f32.mrf.mxu0
      %v2786 = vadd.f32 %v2279, %v2785
      %v2787 = vpop.f32.mrf.mxu0
      %v2788 = vadd.f32 %v2283, %v2787
      %2789 = vmatprep.mubr.f32.mxu0 %v2326
      %2790 = vmatmul.mubr.f32.gmra.mxu0 %v2071
      %v2791 = vpop.f32.mrf.mxu0
      %v2792 = vadd.f32 %v2279, %v2791
      %v2793 = vpop.f32.mrf.mxu0
      %v2794 = vadd.f32 %v2283, %v2793
      %2795 = vmatprep.mubr.f32.mxu0 %v2329
      %2796 = vmatmul.mubr.f32.gmra.mxu0 %v2073
      %v2797 = vpop.f32.mrf.mxu0
      %v2798 = vadd.f32 %v2279, %v2797
      %v2799 = vpop.f32.mrf.mxu0
      %v2800 = vadd.f32 %v2283, %v2799
      %2801 = vmatprep.mubr.f32.mxu0 %v2332
      %2802 = vmatmul.mubr.f32.gmra.mxu0 %v2075
      %v2803 = vpop.f32.mrf.mxu0
      %v2804 = vadd.f32 %v2279, %v2803
      %v2805 = vpop.f32.mrf.mxu0
      %v2806 = vadd.f32 %v2283, %v2805
      %2807 = vmatprep.mubr.f32.mxu0 %v2335
      %2808 = vmatmul.mubr.f32.gmra.mxu0 %v2077
      %v2809 = vpop.f32.mrf.mxu0
      %v2810 = vadd.f32 %v2279, %v2809
      %v2811 = vpop.f32.mrf.mxu0
      %v2812 = vadd.f32 %v2283, %v2811
      %2813 = vmatprep.mubr.f32.mxu0 %v2338
      %2814 = vmatmul.mubr.f32.gmra.mxu0 %v2079
      %v2815 = vpop.f32.mrf.mxu0
      %v2816 = vadd.f32 %v2279, %v2815
      %v2817 = vpop.f32.mrf.mxu0
      %v2818 = vadd.f32 %v2283, %v2817
      %2819 = vmatprep.mubr.f32.mxu0 %v2341
      %2820 = vmatmul.mubr.f32.gmra.mxu0 %v2081
      %v2821 = vpop.f32.mrf.mxu0
      %v2822 = vadd.f32 %v2279, %v2821
      %v2823 = vpop.f32.mrf.mxu0
      %v2824 = vadd.f32 %v2283, %v2823
      %2825 = vdwg.mxu0
      %2826 = vmatprep.subr.mxu0 0.0
      %2827 = vmatpush1.msra.mxu0 %v2194
      %2828 = vmatprep.subr.mxu0 0.0
      %2829 = vmatpush1.msra.mxu0 %v2187
      %2830 = vmatprep.subr.mxu0 0.0
      %2831 = vmatpush1.msra.mxu0 %v2180
      %2832 = vmatprep.subr.mxu0 0.0
      %2833 = vmatpush1.msra.mxu0 %v2173
      %2834 = vmatprep.subr.mxu0 0.0
      %2835 = vmatpush1.msra.mxu0 %v2166
      %2836 = vmatprep.subr.mxu0 0.0
      %2837 = vmatpush1.msra.mxu0 %v2159
      %2838 = vmatprep.subr.mxu0 0.0
      %2839 = vmatpush1.msra.mxu0 %v2152
      %2840 = vmatprep.subr.mxu0 0.0
      %2841 = vmatpush1.msra.mxu0 %v2145
      %2842 = vmatprep.subr.mxu0 0.0
      %2843 = vmatpush1.msra.mxu0 %v2138
      %2844 = vmatprep.subr.mxu0 0.0
      %2845 = vmatpush1.msra.mxu0 %v2131
      %2846 = vmatprep.subr.mxu0 0.0
      %2847 = vmatpush1.msra.mxu0 %v2124
      %2848 = vmatprep.subr.mxu0 0.0
      %2849 = vmatpush1.msra.mxu0 %v2117
      %2850 = vmatprep.subr.mxu0 0.0
      %2851 = vmatpush1.msra.mxu0 %v2110
      %2852 = vmatprep.subr.mxu0 0.0
      %2853 = vmatpush1.msra.mxu0 %v2103
      %2854 = vmatprep.subr.mxu0 0.0
      %2855 = vmatpush1.msra.mxu0 %v2096
      %2856 = vmatprep.subr.mxu0 0.0
      %2857 = vmatpush1.msra.mxu0 %v2089
      %2858 = vmatprep.subr.mxu0 0.0
      %2859 = vmatpush2.msra.mxu0 0.0
      %2860 = vmatprep.subr.mxu0 0.0
      %2861 = vmatpush2.msra.mxu0 0.0
      %2862 = vmatprep.subr.mxu0 0.0
      %2863 = vmatpush2.msra.mxu0 0.0
      %2864 = vmatprep.subr.mxu0 0.0
      %2865 = vmatpush2.msra.mxu0 0.0
      %2866 = vmatprep.subr.mxu0 0.0
      %2867 = vmatpush2.msra.mxu0 0.0
      %2868 = vmatprep.subr.mxu0 0.0
      %2869 = vmatpush2.msra.mxu0 0.0
      %2870 = vmatprep.subr.mxu0 0.0
      %2871 = vmatpush2.msra.mxu0 0.0
      %2872 = vmatprep.subr.mxu0 0.0
      %2873 = vmatpush2.msra.mxu0 %v2257
      %2874 = vmatprep.subr.mxu0 0.0
      %2875 = vmatpush2.msra.mxu0 %v2250
      %2876 = vmatprep.subr.mxu0 0.0
      %2877 = vmatpush2.msra.mxu0 %v2243
      %2878 = vmatprep.subr.mxu0 0.0
      %2879 = vmatpush2.msra.mxu0 %v2236
      %2880 = vmatprep.subr.mxu0 0.0
      %2881 = vmatpush2.msra.mxu0 %v2229
      %2882 = vmatprep.subr.mxu0 0.0
      %2883 = vmatpush2.msra.mxu0 %v2222
      %2884 = vmatprep.subr.mxu0 0.0
      %2885 = vmatpush2.msra.mxu0 %v2215
      %2886 = vmatprep.subr.mxu0 0.0
      %2887 = vmatpush2.msra.mxu0 %v2208
      %2888 = vmatprep.subr.mxu0 0.0
      %2889 = vmatpush2.msra.mxu0 %v2201
      %2890 = vmatprep.mubr.f32.mxu0 %v2296
      %2891 = vmatmul.mubr.f32.gmra.mxu0 %v2051
      %v2892 = vpop.f32.mrf.mxu0
      %v2893 = vadd.f32 %v2287, %v2892
      %v2894 = vpop.f32.mrf.mxu0
      %2895 = vmatprep.mubr.f32.mxu0 %v2299
      %2896 = vmatmul.mubr.f32.gmra.mxu0 %v2053
      %v2897 = vpop.f32.mrf.mxu0
      %v2898 = vadd.f32 %v2287, %v2897
      %v2899 = vpop.f32.mrf.mxu0
      %2900 = vmatprep.mubr.f32.mxu0 %v2302
      %2901 = vmatmul.mubr.f32.gmra.mxu0 %v2055
      %v2902 = vpop.f32.mrf.mxu0
      %v2903 = vadd.f32 %v2287, %v2902
      %v2904 = vpop.f32.mrf.mxu0
      %2905 = vmatprep.mubr.f32.mxu0 %v2305
      %2906 = vmatmul.mubr.f32.gmra.mxu0 %v2057
      %v2907 = vpop.f32.mrf.mxu0
      %v2908 = vadd.f32 %v2287, %v2907
      %v2909 = vpop.f32.mrf.mxu0
      %2910 = vmatprep.mubr.f32.mxu0 %v2308
      %2911 = vmatmul.mubr.f32.gmra.mxu0 %v2059
      %v2912 = vpop.f32.mrf.mxu0
      %v2913 = vadd.f32 %v2287, %v2912
      %v2914 = vpop.f32.mrf.mxu0
      %2915 = vmatprep.mubr.f32.mxu0 %v2311
      %2916 = vmatmul.mubr.f32.gmra.mxu0 %v2061
      %v2917 = vpop.f32.mrf.mxu0
      %v2918 = vadd.f32 %v2287, %v2917
      %v2919 = vpop.f32.mrf.mxu0
      %2920 = vmatprep.mubr.f32.mxu0 %v2314
      %2921 = vmatmul.mubr.f32.gmra.mxu0 %v2063
      %v2922 = vpop.f32.mrf.mxu0
      %v2923 = vadd.f32 %v2287, %v2922
      %v2924 = vpop.f32.mrf.mxu0
      %2925 = vmatprep.mubr.f32.mxu0 %v2317
      %2926 = vmatmul.mubr.f32.gmra.mxu0 %v2065
      %v2927 = vpop.f32.mrf.mxu0
      %v2928 = vadd.f32 %v2287, %v2927
      %v2929 = vpop.f32.mrf.mxu0
      %2930 = vmatprep.mubr.f32.mxu0 %v2320
      %2931 = vmatmul.mubr.f32.gmra.mxu0 %v2067
      %v2932 = vpop.f32.mrf.mxu0
      %v2933 = vadd.f32 %v2287, %v2932
      %v2934 = vpop.f32.mrf.mxu0
      %2935 = vmatprep.mubr.f32.mxu0 %v2323
      %2936 = vmatmul.mubr.f32.gmra.mxu0 %v2069
      %v2937 = vpop.f32.mrf.mxu0
      %v2938 = vadd.f32 %v2287, %v2937
      %v2939 = vpop.f32.mrf.mxu0
      %2940 = vmatprep.mubr.f32.mxu0 %v2326
      %2941 = vmatmul.mubr.f32.gmra.mxu0 %v2071
      %v2942 = vpop.f32.mrf.mxu0
      %v2943 = vadd.f32 %v2287, %v2942
      %v2944 = vpop.f32.mrf.mxu0
      %2945 = vmatprep.mubr.f32.mxu0 %v2329
      %2946 = vmatmul.mubr.f32.gmra.mxu0 %v2073
      %v2947 = vpop.f32.mrf.mxu0
      %v2948 = vadd.f32 %v2287, %v2947
      %v2949 = vpop.f32.mrf.mxu0
      %2950 = vmatprep.mubr.f32.mxu0 %v2332
      %2951 = vmatmul.mubr.f32.gmra.mxu0 %v2075
      %v2952 = vpop.f32.mrf.mxu0
      %v2953 = vadd.f32 %v2287, %v2952
      %v2954 = vpop.f32.mrf.mxu0
      %2955 = vmatprep.mubr.f32.mxu0 %v2335
      %2956 = vmatmul.mubr.f32.gmra.mxu0 %v2077
      %v2957 = vpop.f32.mrf.mxu0
      %v2958 = vadd.f32 %v2287, %v2957
      %v2959 = vpop.f32.mrf.mxu0
      %2960 = vmatprep.mubr.f32.mxu0 %v2338
      %2961 = vmatmul.mubr.f32.gmra.mxu0 %v2079
      %v2962 = vpop.f32.mrf.mxu0
      %v2963 = vadd.f32 %v2287, %v2962
      %v2964 = vpop.f32.mrf.mxu0
      %2965 = vmatprep.mubr.f32.mxu0 %v2341
      %2966 = vmatmul.mubr.f32.gmra.mxu0 %v2081
      %v2967 = vpop.f32.mrf.mxu0
      %v2968 = vadd.f32 %v2287, %v2967
      %v2969 = vpop.f32.mrf.mxu0
      %2970 = vdwg.mxu0
      %v2971 = vxor.u32 %v2410, 2147483648
      %v2972 = vxor.u32 %v2412, 2147483648
      %v2973 = vxor.u32 %v2571, 2147483648
      %v2974 = vxor.u32 %v2573, 2147483648
      %v2975 = vxor.u32 %v2732, 2147483648
      %v2976 = vxor.u32 %v2734, 2147483648
      %v2977 = vxor.u32 %v2893, 2147483648
      %v2978 = vxor.u32 %v2416, 2147483648
      %v2979 = vxor.u32 %v2418, 2147483648
      %v2980 = vxor.u32 %v2577, 2147483648
      %v2981 = vxor.u32 %v2579, 2147483648
      %v2982 = vxor.u32 %v2738, 2147483648
      %v2983 = vxor.u32 %v2740, 2147483648
      %v2984 = vxor.u32 %v2898, 2147483648
      %v2985 = vxor.u32 %v2422, 2147483648
      %v2986 = vxor.u32 %v2424, 2147483648
      %v2987 = vxor.u32 %v2583, 2147483648
      %v2988 = vxor.u32 %v2585, 2147483648
      %v2989 = vxor.u32 %v2744, 2147483648
      %v2990 = vxor.u32 %v2746, 2147483648
      %v2991 = vxor.u32 %v2903, 2147483648
      %v2992 = vxor.u32 %v2428, 2147483648
      %v2993 = vxor.u32 %v2430, 2147483648
      %v2994 = vxor.u32 %v2589, 2147483648
      %v2995 = vxor.u32 %v2591, 2147483648
      %v2996 = vxor.u32 %v2750, 2147483648
      %v2997 = vxor.u32 %v2752, 2147483648
      %v2998 = vxor.u32 %v2908, 2147483648
      %v2999 = vxor.u32 %v2434, 2147483648
      %v3000 = vxor.u32 %v2436, 2147483648
      %v3001 = vxor.u32 %v2595, 2147483648
      %v3002 = vxor.u32 %v2597, 2147483648
      %v3003 = vxor.u32 %v2756, 2147483648
      %v3004 = vxor.u32 %v2758, 2147483648
      %v3005 = vxor.u32 %v2913, 2147483648
      %v3006 = vxor.u32 %v2440, 2147483648
      %v3007 = vxor.u32 %v2442, 2147483648
      %v3008 = vxor.u32 %v2601, 2147483648
      %v3009 = vxor.u32 %v2603, 2147483648
      %v3010 = vxor.u32 %v2762, 2147483648
      %v3011 = vxor.u32 %v2764, 2147483648
      %v3012 = vxor.u32 %v2918, 2147483648
      %v3013 = vxor.u32 %v2446, 2147483648
      %v3014 = vxor.u32 %v2448, 2147483648
      %v3015 = vxor.u32 %v2607, 2147483648
      %v3016 = vxor.u32 %v2609, 2147483648
      %v3017 = vxor.u32 %v2768, 2147483648
      %v3018 = vxor.u32 %v2770, 2147483648
      %v3019 = vxor.u32 %v2923, 2147483648
      %v3020 = vxor.u32 %v2452, 2147483648
      %v3021 = vxor.u32 %v2454, 2147483648
      %v3022 = vxor.u32 %v2613, 2147483648
      %v3023 = vxor.u32 %v2615, 2147483648
      %v3024 = vxor.u32 %v2774, 2147483648
      %v3025 = vxor.u32 %v2776, 2147483648
      %v3026 = vxor.u32 %v2928, 2147483648
      %v3027 = vxor.u32 %v2458, 2147483648
      %v3028 = vxor.u32 %v2460, 2147483648
      %v3029 = vxor.u32 %v2619, 2147483648
      %v3030 = vxor.u32 %v2621, 2147483648
      %v3031 = vxor.u32 %v2780, 2147483648
      %v3032 = vxor.u32 %v2782, 2147483648
      %v3033 = vxor.u32 %v2933, 2147483648
      %v3034 = vxor.u32 %v2464, 2147483648
      %v3035 = vxor.u32 %v2466, 2147483648
      %v3036 = vxor.u32 %v2625, 2147483648
      %v3037 = vxor.u32 %v2627, 2147483648
      %v3038 = vxor.u32 %v2786, 2147483648
      %v3039 = vxor.u32 %v2788, 2147483648
      %v3040 = vxor.u32 %v2938, 2147483648
      %v3041 = vxor.u32 %v2470, 2147483648
      %v3042 = vxor.u32 %v2472, 2147483648
      %v3043 = vxor.u32 %v2631, 2147483648
      %v3044 = vxor.u32 %v2633, 2147483648
      %v3045 = vxor.u32 %v2792, 2147483648
      %v3046 = vxor.u32 %v2794, 2147483648
      %v3047 = vxor.u32 %v2943, 2147483648
      %v3048 = vxor.u32 %v2476, 2147483648
      %v3049 = vxor.u32 %v2478, 2147483648
      %v3050 = vxor.u32 %v2637, 2147483648
      %v3051 = vxor.u32 %v2639, 2147483648
      %v3052 = vxor.u32 %v2798, 2147483648
      %v3053 = vxor.u32 %v2800, 2147483648
      %v3054 = vxor.u32 %v2948, 2147483648
      %v3055 = vxor.u32 %v2482, 2147483648
      %v3056 = vxor.u32 %v2484, 2147483648
      %v3057 = vxor.u32 %v2643, 2147483648
      %v3058 = vxor.u32 %v2645, 2147483648
      %v3059 = vxor.u32 %v2804, 2147483648
      %v3060 = vxor.u32 %v2806, 2147483648
      %v3061 = vxor.u32 %v2953, 2147483648
      %v3062 = vxor.u32 %v2488, 2147483648
      %v3063 = vxor.u32 %v2490, 2147483648
      %v3064 = vxor.u32 %v2649, 2147483648
      %v3065 = vxor.u32 %v2651, 2147483648
      %v3066 = vxor.u32 %v2810, 2147483648
      %v3067 = vxor.u32 %v2812, 2147483648
      %v3068 = vxor.u32 %v2958, 2147483648
      %v3069 = vxor.u32 %v2494, 2147483648
      %v3070 = vxor.u32 %v2496, 2147483648
      %v3071 = vxor.u32 %v2655, 2147483648
      %v3072 = vxor.u32 %v2657, 2147483648
      %v3073 = vxor.u32 %v2816, 2147483648
      %v3074 = vxor.u32 %v2818, 2147483648
      %v3075 = vxor.u32 %v2963, 2147483648
      %v3076 = vxor.u32 %v2500, 2147483648
      %v3077 = vxor.u32 %v2502, 2147483648
      %v3078 = vxor.u32 %v2661, 2147483648
      %v3079 = vxor.u32 %v2663, 2147483648
      %v3080 = vxor.u32 %v2822, 2147483648
      %v3081 = vxor.u32 %v2824, 2147483648
      %v3082 = vxor.u32 %v2968, 2147483648
      %v3083 = vmul.f32 %v2971, 1.442695
      %v3084 = vpow.pop %v3083
      %v3085 = vmul.f32 %v2972, 1.442695
      %v3086 = vpow.pop %v3085
      %v3087 = vmul.f32 %v2973, 1.442695
      %v3088 = vpow.pop %v3087
      %v3089 = vmul.f32 %v2974, 1.442695
      %v3090 = vpow.pop %v3089
      %v3091 = vmul.f32 %v2975, 1.442695
      %v3092 = vpow.pop %v3091
      %v3093 = vmul.f32 %v2976, 1.442695
      %v3094 = vpow.pop %v3093
      %v3095 = vmul.f32 %v2977, 1.442695
      %v3096 = vpow.pop %v3095
      %v3097 = vmul.f32 %v2978, 1.442695
      %v3098 = vpow.pop %v3097
      %v3099 = vmul.f32 %v2979, 1.442695
      %v3100 = vpow.pop %v3099
      %v3101 = vmul.f32 %v2980, 1.442695
      %v3102 = vpow.pop %v3101
      %v3103 = vmul.f32 %v2981, 1.442695
      %v3104 = vpow.pop %v3103
      %v3105 = vmul.f32 %v2982, 1.442695
      %v3106 = vpow.pop %v3105
      %v3107 = vmul.f32 %v2983, 1.442695
      %v3108 = vpow.pop %v3107
      %v3109 = vmul.f32 %v2984, 1.442695
      %v3110 = vpow.pop %v3109
      %v3111 = vmul.f32 %v2985, 1.442695
      %v3112 = vpow.pop %v3111
      %v3113 = vmul.f32 %v2986, 1.442695
      %v3114 = vpow.pop %v3113
      %v3115 = vmul.f32 %v2987, 1.442695
      %v3116 = vpow.pop %v3115
      %v3117 = vmul.f32 %v2988, 1.442695
      %v3118 = vpow.pop %v3117
      %v3119 = vmul.f32 %v2989, 1.442695
      %v3120 = vpow.pop %v3119
      %v3121 = vmul.f32 %v2990, 1.442695
      %v3122 = vpow.pop %v3121
      %v3123 = vmul.f32 %v2991, 1.442695
      %v3124 = vpow.pop %v3123
      %v3125 = vmul.f32 %v2992, 1.442695
      %v3126 = vpow.pop %v3125
      %v3127 = vmul.f32 %v2993, 1.442695
      %v3128 = vpow.pop %v3127
      %v3129 = vmul.f32 %v2994, 1.442695
      %v3130 = vpow.pop %v3129
      %v3131 = vmul.f32 %v2995, 1.442695
      %v3132 = vpow.pop %v3131
      %v3133 = vmul.f32 %v2996, 1.442695
      %v3134 = vpow.pop %v3133
      %v3135 = vmul.f32 %v2997, 1.442695
      %v3136 = vpow.pop %v3135
      %v3137 = vmul.f32 %v2998, 1.442695
      %v3138 = vpow.pop %v3137
      %v3139 = vmul.f32 %v2999, 1.442695
      %v3140 = vpow.pop %v3139
      %v3141 = vmul.f32 %v3000, 1.442695
      %v3142 = vpow.pop %v3141
      %v3143 = vmul.f32 %v3001, 1.442695
      %v3144 = vpow.pop %v3143
      %v3145 = vmul.f32 %v3002, 1.442695
      %v3146 = vpow.pop %v3145
      %v3147 = vmul.f32 %v3003, 1.442695
      %v3148 = vpow.pop %v3147
      %v3149 = vmul.f32 %v3004, 1.442695
      %v3150 = vpow.pop %v3149
      %v3151 = vmul.f32 %v3005, 1.442695
      %v3152 = vpow.pop %v3151
      %v3153 = vmul.f32 %v3006, 1.442695
      %v3154 = vpow.pop %v3153
      %v3155 = vmul.f32 %v3007, 1.442695
      %v3156 = vpow.pop %v3155
      %v3157 = vmul.f32 %v3008, 1.442695
      %v3158 = vpow.pop %v3157
      %v3159 = vmul.f32 %v3009, 1.442695
      %v3160 = vpow.pop %v3159
      %v3161 = vmul.f32 %v3010, 1.442695
      %v3162 = vpow.pop %v3161
      %v3163 = vmul.f32 %v3011, 1.442695
      %v3164 = vpow.pop %v3163
      %v3165 = vmul.f32 %v3012, 1.442695
      %v3166 = vpow.pop %v3165
      %v3167 = vmul.f32 %v3013, 1.442695
      %v3168 = vpow.pop %v3167
      %v3169 = vmul.f32 %v3014, 1.442695
      %v3170 = vpow.pop %v3169
      %v3171 = vmul.f32 %v3015, 1.442695
      %v3172 = vpow.pop %v3171
      %v3173 = vmul.f32 %v3016, 1.442695
      %v3174 = vpow.pop %v3173
      %v3175 = vmul.f32 %v3017, 1.442695
      %v3176 = vpow.pop %v3175
      %v3177 = vmul.f32 %v3018, 1.442695
      %v3178 = vpow.pop %v3177
      %v3179 = vmul.f32 %v3019, 1.442695
      %v3180 = vpow.pop %v3179
      %v3181 = vmul.f32 %v3020, 1.442695
      %v3182 = vpow.pop %v3181
      %v3183 = vmul.f32 %v3021, 1.442695
      %v3184 = vpow.pop %v3183
      %v3185 = vmul.f32 %v3022, 1.442695
      %v3186 = vpow.pop %v3185
      %v3187 = vmul.f32 %v3023, 1.442695
      %v3188 = vpow.pop %v3187
      %v3189 = vmul.f32 %v3024, 1.442695
      %v3190 = vpow.pop %v3189
      %v3191 = vmul.f32 %v3025, 1.442695
      %v3192 = vpow.pop %v3191
      %v3193 = vmul.f32 %v3026, 1.442695
      %v3194 = vpow.pop %v3193
      %v3195 = vmul.f32 %v3027, 1.442695
      %v3196 = vpow.pop %v3195
      %v3197 = vmul.f32 %v3028, 1.442695
      %v3198 = vpow.pop %v3197
      %v3199 = vmul.f32 %v3029, 1.442695
      %v3200 = vpow.pop %v3199
      %v3201 = vmul.f32 %v3030, 1.442695
      %v3202 = vpow.pop %v3201
      %v3203 = vmul.f32 %v3031, 1.442695
      %v3204 = vpow.pop %v3203
      %v3205 = vmul.f32 %v3032, 1.442695
      %v3206 = vpow.pop %v3205
      %v3207 = vmul.f32 %v3033, 1.442695
      %v3208 = vpow.pop %v3207
      %v3209 = vmul.f32 %v3034, 1.442695
      %v3210 = vpow.pop %v3209
      %v3211 = vmul.f32 %v3035, 1.442695
      %v3212 = vpow.pop %v3211
      %v3213 = vmul.f32 %v3036, 1.442695
      %v3214 = vpow.pop %v3213
      %v3215 = vmul.f32 %v3037, 1.442695
      %v3216 = vpow.pop %v3215
      %v3217 = vmul.f32 %v3038, 1.442695
      %v3218 = vpow.pop %v3217
      %v3219 = vmul.f32 %v3039, 1.442695
      %v3220 = vpow.pop %v3219
      %v3221 = vmul.f32 %v3040, 1.442695
      %v3222 = vpow.pop %v3221
      %v3223 = vmul.f32 %v3041, 1.442695
      %v3224 = vpow.pop %v3223
      %v3225 = vmul.f32 %v3042, 1.442695
      %v3226 = vpow.pop %v3225
      %v3227 = vmul.f32 %v3043, 1.442695
      %v3228 = vpow.pop %v3227
      %v3229 = vmul.f32 %v3044, 1.442695
      %v3230 = vpow.pop %v3229
      %v3231 = vmul.f32 %v3045, 1.442695
      %v3232 = vpow.pop %v3231
      %v3233 = vmul.f32 %v3046, 1.442695
      %v3234 = vpow.pop %v3233
      %v3235 = vmul.f32 %v3047, 1.442695
      %v3236 = vpow.pop %v3235
      %v3237 = vmul.f32 %v3048, 1.442695
      %v3238 = vpow.pop %v3237
      %v3239 = vmul.f32 %v3049, 1.442695
      %v3240 = vpow.pop %v3239
      %v3241 = vmul.f32 %v3050, 1.442695
      %v3242 = vpow.pop %v3241
      %v3243 = vmul.f32 %v3051, 1.442695
      %v3244 = vpow.pop %v3243
      %v3245 = vmul.f32 %v3052, 1.442695
      %v3246 = vpow.pop %v3245
      %v3247 = vmul.f32 %v3053, 1.442695
      %v3248 = vpow.pop %v3247
      %v3249 = vmul.f32 %v3054, 1.442695
      %v3250 = vpow.pop %v3249
      %v3251 = vmul.f32 %v3055, 1.442695
      %v3252 = vpow.pop %v3251
      %v3253 = vmul.f32 %v3056, 1.442695
      %v3254 = vpow.pop %v3253
      %v3255 = vmul.f32 %v3057, 1.442695
      %v3256 = vpow.pop %v3255
      %v3257 = vmul.f32 %v3058, 1.442695
      %v3258 = vpow.pop %v3257
      %v3259 = vmul.f32 %v3059, 1.442695
      %v3260 = vpow.pop %v3259
      %v3261 = vmul.f32 %v3060, 1.442695
      %v3262 = vpow.pop %v3261
      %v3263 = vmul.f32 %v3061, 1.442695
      %v3264 = vpow.pop %v3263
      %v3265 = vmul.f32 %v3062, 1.442695
      %v3266 = vpow.pop %v3265
      %v3267 = vmul.f32 %v3063, 1.442695
      %v3268 = vpow.pop %v3267
      %v3269 = vmul.f32 %v3064, 1.442695
      %v3270 = vpow.pop %v3269
      %v3271 = vmul.f32 %v3065, 1.442695
      %v3272 = vpow.pop %v3271
      %v3273 = vmul.f32 %v3066, 1.442695
      %v3274 = vpow.pop %v3273
      %v3275 = vmul.f32 %v3067, 1.442695
      %v3276 = vpow.pop %v3275
      %v3277 = vmul.f32 %v3068, 1.442695
      %v3278 = vpow.pop %v3277
      %v3279 = vmul.f32 %v3069, 1.442695
      %v3280 = vpow.pop %v3279
      %v3281 = vmul.f32 %v3070, 1.442695
      %v3282 = vpow.pop %v3281
      %v3283 = vmul.f32 %v3071, 1.442695
      %v3284 = vpow.pop %v3283
      %v3285 = vmul.f32 %v3072, 1.442695
      %v3286 = vpow.pop %v3285
      %v3287 = vmul.f32 %v3073, 1.442695
      %v3288 = vpow.pop %v3287
      %v3289 = vmul.f32 %v3074, 1.442695
      %v3290 = vpow.pop %v3289
      %v3291 = vmul.f32 %v3075, 1.442695
      %v3292 = vpow.pop %v3291
      %v3293 = vmul.f32 %v3076, 1.442695
      %v3294 = vpow.pop %v3293
      %v3295 = vmul.f32 %v3077, 1.442695
      %v3296 = vpow.pop %v3295
      %v3297 = vmul.f32 %v3078, 1.442695
      %v3298 = vpow.pop %v3297
      %v3299 = vmul.f32 %v3079, 1.442695
      %v3300 = vpow.pop %v3299
      %v3301 = vmul.f32 %v3080, 1.442695
      %v3302 = vpow.pop %v3301
      %v3303 = vmul.f32 %v3081, 1.442695
      %v3304 = vpow.pop %v3303
      %v3305 = vmul.f32 %v3082, 1.442695
      %v3306 = vpow.pop %v3305
      %v3307 = vadd.f32 %v3084, 1.0
      %v3308 = vadd.f32 %v3086, 1.0
      %v3309 = vadd.f32 %v3088, 1.0
      %v3310 = vadd.f32 %v3090, 1.0
      %v3311 = vadd.f32 %v3092, 1.0
      %v3312 = vadd.f32 %v3094, 1.0
      %v3313 = vadd.f32 %v3096, 1.0
      %v3314 = vadd.f32 %v3098, 1.0
      %v3315 = vadd.f32 %v3100, 1.0
      %v3316 = vadd.f32 %v3102, 1.0
      %v3317 = vadd.f32 %v3104, 1.0
      %v3318 = vadd.f32 %v3106, 1.0
      %v3319 = vadd.f32 %v3108, 1.0
      %v3320 = vadd.f32 %v3110, 1.0
      %v3321 = vadd.f32 %v3112, 1.0
      %v3322 = vadd.f32 %v3114, 1.0
      %v3323 = vadd.f32 %v3116, 1.0
      %v3324 = vadd.f32 %v3118, 1.0
      %v3325 = vadd.f32 %v3120, 1.0
      %v3326 = vadd.f32 %v3122, 1.0
      %v3327 = vadd.f32 %v3124, 1.0
      %v3328 = vadd.f32 %v3126, 1.0
      %v3329 = vadd.f32 %v3128, 1.0
      %v3330 = vadd.f32 %v3130, 1.0
      %v3331 = vadd.f32 %v3132, 1.0
      %v3332 = vadd.f32 %v3134, 1.0
      %v3333 = vadd.f32 %v3136, 1.0
      %v3334 = vadd.f32 %v3138, 1.0
      %v3335 = vadd.f32 %v3140, 1.0
      %v3336 = vadd.f32 %v3142, 1.0
      %v3337 = vadd.f32 %v3144, 1.0
      %v3338 = vadd.f32 %v3146, 1.0
      %v3339 = vadd.f32 %v3148, 1.0
      %v3340 = vadd.f32 %v3150, 1.0
      %v3341 = vadd.f32 %v3152, 1.0
      %v3342 = vadd.f32 %v3154, 1.0
      %v3343 = vadd.f32 %v3156, 1.0
      %v3344 = vadd.f32 %v3158, 1.0
      %v3345 = vadd.f32 %v3160, 1.0
      %v3346 = vadd.f32 %v3162, 1.0
      %v3347 = vadd.f32 %v3164, 1.0
      %v3348 = vadd.f32 %v3166, 1.0
      %v3349 = vadd.f32 %v3168, 1.0
      %v3350 = vadd.f32 %v3170, 1.0
      %v3351 = vadd.f32 %v3172, 1.0
      %v3352 = vadd.f32 %v3174, 1.0
      %v3353 = vadd.f32 %v3176, 1.0
      %v3354 = vadd.f32 %v3178, 1.0
      %v3355 = vadd.f32 %v3180, 1.0
      %v3356 = vadd.f32 %v3182, 1.0
      %v3357 = vadd.f32 %v3184, 1.0
      %v3358 = vadd.f32 %v3186, 1.0
      %v3359 = vadd.f32 %v3188, 1.0
      %v3360 = vadd.f32 %v3190, 1.0
      %v3361 = vadd.f32 %v3192, 1.0
      %v3362 = vadd.f32 %v3194, 1.0
      %v3363 = vadd.f32 %v3196, 1.0
      %v3364 = vadd.f32 %v3198, 1.0
      %v3365 = vadd.f32 %v3200, 1.0
      %v3366 = vadd.f32 %v3202, 1.0
      %v3367 = vadd.f32 %v3204, 1.0
      %v3368 = vadd.f32 %v3206, 1.0
      %v3369 = vadd.f32 %v3208, 1.0
      %v3370 = vadd.f32 %v3210, 1.0
      %v3371 = vadd.f32 %v3212, 1.0
      %v3372 = vadd.f32 %v3214, 1.0
      %v3373 = vadd.f32 %v3216, 1.0
      %v3374 = vadd.f32 %v3218, 1.0
      %v3375 = vadd.f32 %v3220, 1.0
      %v3376 = vadd.f32 %v3222, 1.0
      %v3377 = vadd.f32 %v3224, 1.0
      %v3378 = vadd.f32 %v3226, 1.0
      %v3379 = vadd.f32 %v3228, 1.0
      %v3380 = vadd.f32 %v3230, 1.0
      %v3381 = vadd.f32 %v3232, 1.0
      %v3382 = vadd.f32 %v3234, 1.0
      %v3383 = vadd.f32 %v3236, 1.0
      %v3384 = vadd.f32 %v3238, 1.0
      %v3385 = vadd.f32 %v3240, 1.0
      %v3386 = vadd.f32 %v3242, 1.0
      %v3387 = vadd.f32 %v3244, 1.0
      %v3388 = vadd.f32 %v3246, 1.0
      %v3389 = vadd.f32 %v3248, 1.0
      %v3390 = vadd.f32 %v3250, 1.0
      %v3391 = vadd.f32 %v3252, 1.0
      %v3392 = vadd.f32 %v3254, 1.0
      %v3393 = vadd.f32 %v3256, 1.0
      %v3394 = vadd.f32 %v3258, 1.0
      %v3395 = vadd.f32 %v3260, 1.0
      %v3396 = vadd.f32 %v3262, 1.0
      %v3397 = vadd.f32 %v3264, 1.0
      %v3398 = vadd.f32 %v3266, 1.0
      %v3399 = vadd.f32 %v3268, 1.0
      %v3400 = vadd.f32 %v3270, 1.0
      %v3401 = vadd.f32 %v3272, 1.0
      %v3402 = vadd.f32 %v3274, 1.0
      %v3403 = vadd.f32 %v3276, 1.0
      %v3404 = vadd.f32 %v3278, 1.0
      %v3405 = vadd.f32 %v3280, 1.0
      %v3406 = vadd.f32 %v3282, 1.0
      %v3407 = vadd.f32 %v3284, 1.0
      %v3408 = vadd.f32 %v3286, 1.0
      %v3409 = vadd.f32 %v3288, 1.0
      %v3410 = vadd.f32 %v3290, 1.0
      %v3411 = vadd.f32 %v3292, 1.0
      %v3412 = vadd.f32 %v3294, 1.0
      %v3413 = vadd.f32 %v3296, 1.0
      %v3414 = vadd.f32 %v3298, 1.0
      %v3415 = vadd.f32 %v3300, 1.0
      %v3416 = vadd.f32 %v3302, 1.0
      %v3417 = vadd.f32 %v3304, 1.0
      %v3418 = vadd.f32 %v3306, 1.0
      %v3419 = vrcp.pop %v3307
      %v3420 = vmul.f32 1.0, %v3419
      %v3421 = vrcp.pop %v3308
      %v3422 = vmul.f32 1.0, %v3421
      %v3423 = vrcp.pop %v3309
      %v3424 = vmul.f32 1.0, %v3423
      %v3425 = vrcp.pop %v3310
      %v3426 = vmul.f32 1.0, %v3425
      %v3427 = vrcp.pop %v3311
      %v3428 = vmul.f32 1.0, %v3427
      %v3429 = vrcp.pop %v3312
      %v3430 = vmul.f32 1.0, %v3429
      %v3431 = vrcp.pop %v3313
      %v3432 = vmul.f32 1.0, %v3431
      %v3433 = vrcp.pop %v3314
      %v3434 = vmul.f32 1.0, %v3433
      %v3435 = vrcp.pop %v3315
      %v3436 = vmul.f32 1.0, %v3435
      %v3437 = vrcp.pop %v3316
      %v3438 = vmul.f32 1.0, %v3437
      %v3439 = vrcp.pop %v3317
      %v3440 = vmul.f32 1.0, %v3439
      %v3441 = vrcp.pop %v3318
      %v3442 = vmul.f32 1.0, %v3441
      %v3443 = vrcp.pop %v3319
      %v3444 = vmul.f32 1.0, %v3443
      %v3445 = vrcp.pop %v3320
      %v3446 = vmul.f32 1.0, %v3445
      %v3447 = vrcp.pop %v3321
      %v3448 = vmul.f32 1.0, %v3447
      %v3449 = vrcp.pop %v3322
      %v3450 = vmul.f32 1.0, %v3449
      %v3451 = vrcp.pop %v3323
      %v3452 = vmul.f32 1.0, %v3451
      %v3453 = vrcp.pop %v3324
      %v3454 = vmul.f32 1.0, %v3453
      %v3455 = vrcp.pop %v3325
      %v3456 = vmul.f32 1.0, %v3455
      %v3457 = vrcp.pop %v3326
      %v3458 = vmul.f32 1.0, %v3457
      %v3459 = vrcp.pop %v3327
      %v3460 = vmul.f32 1.0, %v3459
      %v3461 = vrcp.pop %v3328
      %v3462 = vmul.f32 1.0, %v3461
      %v3463 = vrcp.pop %v3329
      %v3464 = vmul.f32 1.0, %v3463
      %v3465 = vrcp.pop %v3330
      %v3466 = vmul.f32 1.0, %v3465
      %v3467 = vrcp.pop %v3331
      %v3468 = vmul.f32 1.0, %v3467
      %v3469 = vrcp.pop %v3332
      %v3470 = vmul.f32 1.0, %v3469
      %v3471 = vrcp.pop %v3333
      %v3472 = vmul.f32 1.0, %v3471
      %v3473 = vrcp.pop %v3334
      %v3474 = vmul.f32 1.0, %v3473
      %v3475 = vrcp.pop %v3335
      %v3476 = vmul.f32 1.0, %v3475
      %v3477 = vrcp.pop %v3336
      %v3478 = vmul.f32 1.0, %v3477
      %v3479 = vrcp.pop %v3337
      %v3480 = vmul.f32 1.0, %v3479
      %v3481 = vrcp.pop %v3338
      %v3482 = vmul.f32 1.0, %v3481
      %v3483 = vrcp.pop %v3339
      %v3484 = vmul.f32 1.0, %v3483
      %v3485 = vrcp.pop %v3340
      %v3486 = vmul.f32 1.0, %v3485
      %v3487 = vrcp.pop %v3341
      %v3488 = vmul.f32 1.0, %v3487
      %v3489 = vrcp.pop %v3342
      %v3490 = vmul.f32 1.0, %v3489
      %v3491 = vrcp.pop %v3343
      %v3492 = vmul.f32 1.0, %v3491
      %v3493 = vrcp.pop %v3344
      %v3494 = vmul.f32 1.0, %v3493
      %v3495 = vrcp.pop %v3345
      %v3496 = vmul.f32 1.0, %v3495
      %v3497 = vrcp.pop %v3346
      %v3498 = vmul.f32 1.0, %v3497
      %v3499 = vrcp.pop %v3347
      %v3500 = vmul.f32 1.0, %v3499
      %v3501 = vrcp.pop %v3348
      %v3502 = vmul.f32 1.0, %v3501
      %v3503 = vrcp.pop %v3349
      %v3504 = vmul.f32 1.0, %v3503
      %v3505 = vrcp.pop %v3350
      %v3506 = vmul.f32 1.0, %v3505
      %v3507 = vrcp.pop %v3351
      %v3508 = vmul.f32 1.0, %v3507
      %v3509 = vrcp.pop %v3352
      %v3510 = vmul.f32 1.0, %v3509
      %v3511 = vrcp.pop %v3353
      %v3512 = vmul.f32 1.0, %v3511
      %v3513 = vrcp.pop %v3354
      %v3514 = vmul.f32 1.0, %v3513
      %v3515 = vrcp.pop %v3355
      %v3516 = vmul.f32 1.0, %v3515
      %v3517 = vrcp.pop %v3356
      %v3518 = vmul.f32 1.0, %v3517
      %v3519 = vrcp.pop %v3357
      %v3520 = vmul.f32 1.0, %v3519
      %v3521 = vrcp.pop %v3358
      %v3522 = vmul.f32 1.0, %v3521
      %v3523 = vrcp.pop %v3359
      %v3524 = vmul.f32 1.0, %v3523
      %v3525 = vrcp.pop %v3360
      %v3526 = vmul.f32 1.0, %v3525
      %v3527 = vrcp.pop %v3361
      %v3528 = vmul.f32 1.0, %v3527
      %v3529 = vrcp.pop %v3362
      %v3530 = vmul.f32 1.0, %v3529
      %v3531 = vrcp.pop %v3363
      %v3532 = vmul.f32 1.0, %v3531
      %v3533 = vrcp.pop %v3364
      %v3534 = vmul.f32 1.0, %v3533
      %v3535 = vrcp.pop %v3365
      %v3536 = vmul.f32 1.0, %v3535
      %v3537 = vrcp.pop %v3366
      %v3538 = vmul.f32 1.0, %v3537
      %v3539 = vrcp.pop %v3367
      %v3540 = vmul.f32 1.0, %v3539
      %v3541 = vrcp.pop %v3368
      %v3542 = vmul.f32 1.0, %v3541
      %v3543 = vrcp.pop %v3369
      %v3544 = vmul.f32 1.0, %v3543
      %v3545 = vrcp.pop %v3370
      %v3546 = vmul.f32 1.0, %v3545
      %v3547 = vrcp.pop %v3371
      %v3548 = vmul.f32 1.0, %v3547
      %v3549 = vrcp.pop %v3372
      %v3550 = vmul.f32 1.0, %v3549
      %v3551 = vrcp.pop %v3373
      %v3552 = vmul.f32 1.0, %v3551
      %v3553 = vrcp.pop %v3374
      %v3554 = vmul.f32 1.0, %v3553
      %v3555 = vrcp.pop %v3375
      %v3556 = vmul.f32 1.0, %v3555
      %v3557 = vrcp.pop %v3376
      %v3558 = vmul.f32 1.0, %v3557
      %v3559 = vrcp.pop %v3377
      %v3560 = vmul.f32 1.0, %v3559
      %v3561 = vrcp.pop %v3378
      %v3562 = vmul.f32 1.0, %v3561
      %v3563 = vrcp.pop %v3379
      %v3564 = vmul.f32 1.0, %v3563
      %v3565 = vrcp.pop %v3380
      %v3566 = vmul.f32 1.0, %v3565
      %v3567 = vrcp.pop %v3381
      %v3568 = vmul.f32 1.0, %v3567
      %v3569 = vrcp.pop %v3382
      %v3570 = vmul.f32 1.0, %v3569
      %v3571 = vrcp.pop %v3383
      %v3572 = vmul.f32 1.0, %v3571
      %v3573 = vrcp.pop %v3384
      %v3574 = vmul.f32 1.0, %v3573
      %v3575 = vrcp.pop %v3385
      %v3576 = vmul.f32 1.0, %v3575
      %v3577 = vrcp.pop %v3386
      %v3578 = vmul.f32 1.0, %v3577
      %v3579 = vrcp.pop %v3387
      %v3580 = vmul.f32 1.0, %v3579
      %v3581 = vrcp.pop %v3388
      %v3582 = vmul.f32 1.0, %v3581
      %v3583 = vrcp.pop %v3389
      %v3584 = vmul.f32 1.0, %v3583
      %v3585 = vrcp.pop %v3390
      %v3586 = vmul.f32 1.0, %v3585
      %v3587 = vrcp.pop %v3391
      %v3588 = vmul.f32 1.0, %v3587
      %v3589 = vrcp.pop %v3392
      %v3590 = vmul.f32 1.0, %v3589
      %v3591 = vrcp.pop %v3393
      %v3592 = vmul.f32 1.0, %v3591
      %v3593 = vrcp.pop %v3394
      %v3594 = vmul.f32 1.0, %v3593
      %v3595 = vrcp.pop %v3395
      %v3596 = vmul.f32 1.0, %v3595
      %v3597 = vrcp.pop %v3396
      %v3598 = vmul.f32 1.0, %v3597
      %v3599 = vrcp.pop %v3397
      %v3600 = vmul.f32 1.0, %v3599
      %v3601 = vrcp.pop %v3398
      %v3602 = vmul.f32 1.0, %v3601
      %v3603 = vrcp.pop %v3399
      %v3604 = vmul.f32 1.0, %v3603
      %v3605 = vrcp.pop %v3400
      %v3606 = vmul.f32 1.0, %v3605
      %v3607 = vrcp.pop %v3401
      %v3608 = vmul.f32 1.0, %v3607
      %v3609 = vrcp.pop %v3402
      %v3610 = vmul.f32 1.0, %v3609
      %v3611 = vrcp.pop %v3403
      %v3612 = vmul.f32 1.0, %v3611
      %v3613 = vrcp.pop %v3404
      %v3614 = vmul.f32 1.0, %v3613
      %v3615 = vrcp.pop %v3405
      %v3616 = vmul.f32 1.0, %v3615
      %v3617 = vrcp.pop %v3406
      %v3618 = vmul.f32 1.0, %v3617
      %v3619 = vrcp.pop %v3407
      %v3620 = vmul.f32 1.0, %v3619
      %v3621 = vrcp.pop %v3408
      %v3622 = vmul.f32 1.0, %v3621
      %v3623 = vrcp.pop %v3409
      %v3624 = vmul.f32 1.0, %v3623
      %v3625 = vrcp.pop %v3410
      %v3626 = vmul.f32 1.0, %v3625
      %v3627 = vrcp.pop %v3411
      %v3628 = vmul.f32 1.0, %v3627
      %v3629 = vrcp.pop %v3412
      %v3630 = vmul.f32 1.0, %v3629
      %v3631 = vrcp.pop %v3413
      %v3632 = vmul.f32 1.0, %v3631
      %v3633 = vrcp.pop %v3414
      %v3634 = vmul.f32 1.0, %v3633
      %v3635 = vrcp.pop %v3415
      %v3636 = vmul.f32 1.0, %v3635
      %v3637 = vrcp.pop %v3416
      %v3638 = vmul.f32 1.0, %v3637
      %v3639 = vrcp.pop %v3417
      %v3640 = vmul.f32 1.0, %v3639
      %v3641 = vrcp.pop %v3418
      %v3642 = vmul.f32 1.0, %v3641
      %3643 = vst [vmem:[%s388] sm:$0xff] %v3420
      %3644 = vst [vmem:[%s388 + $0x8] sm:$0xff] %v3422
      %3645 = vst [vmem:[%s388 + $0x10] sm:$0xff] %v3424
      %3646 = vst [vmem:[%s388 + $0x18] sm:$0xff] %v3426
      %3647 = vst [vmem:[%s388 + $0x20] sm:$0xff] %v3428
      %3648 = vst [vmem:[%s388 + $0x28] sm:$0xff] %v3430
      %3649 = vst [vmem:[%s388 + $0x30] sm:$0xff] %v3432
      %3650 = vst [vmem:[%s388 + $0x38] sm:$0xff] %v3434
      %3651 = vst [vmem:[%s388 + $0x40] sm:$0xff] %v3436
      %3652 = vst [vmem:[%s388 + $0x48] sm:$0xff] %v3438
      %3653 = vst [vmem:[%s388 + $0x50] sm:$0xff] %v3440
      %3654 = vst [vmem:[%s388 + $0x58] sm:$0xff] %v3442
      %3655 = vst [vmem:[%s388 + $0x60] sm:$0xff] %v3444
      %3656 = vst [vmem:[%s388 + $0x68] sm:$0xff] %v3446
      %3657 = vst [vmem:[%s388 + $0x70] sm:$0xff] %v3448
      %3658 = vst [vmem:[%s388 + $0x78] sm:$0xff] %v3450
      %3659 = vst [vmem:[%s388 + $0x80] sm:$0xff] %v3452
      %3660 = vst [vmem:[%s388 + $0x88] sm:$0xff] %v3454
      %3661 = vst [vmem:[%s388 + $0x90] sm:$0xff] %v3456
      %3662 = vst [vmem:[%s388 + $0x98] sm:$0xff] %v3458
      %3663 = vst [vmem:[%s388 + $0xa0] sm:$0xff] %v3460
      %3664 = vst [vmem:[%s388 + $0xa8] sm:$0xff] %v3462
      %3665 = vst [vmem:[%s388 + $0xb0] sm:$0xff] %v3464
      %3666 = vst [vmem:[%s388 + $0xb8] sm:$0xff] %v3466
      %3667 = vst [vmem:[%s388 + $0xc0] sm:$0xff] %v3468
      %3668 = vst [vmem:[%s388 + $0xc8] sm:$0xff] %v3470
      %3669 = vst [vmem:[%s388 + $0xd0] sm:$0xff] %v3472
      %3670 = vst [vmem:[%s388 + $0xd8] sm:$0xff] %v3474
      %3671 = vst [vmem:[%s388 + $0xe0] sm:$0xff] %v3476
      %3672 = vst [vmem:[%s388 + $0xe8] sm:$0xff] %v3478
      %3673 = vst [vmem:[%s388 + $0xf0] sm:$0xff] %v3480
      %3674 = vst [vmem:[%s388 + $0xf8] sm:$0xff] %v3482
      %3675 = vst [vmem:[%s388 + $0x100] sm:$0xff] %v3484
      %3676 = vst [vmem:[%s388 + $0x108] sm:$0xff] %v3486
      %3677 = vst [vmem:[%s388 + $0x110] sm:$0xff] %v3488
      %3678 = vst [vmem:[%s388 + $0x118] sm:$0xff] %v3490
      %3679 = vst [vmem:[%s388 + $0x120] sm:$0xff] %v3492
      %3680 = vst [vmem:[%s388 + $0x128] sm:$0xff] %v3494
      %3681 = vst [vmem:[%s388 + $0x130] sm:$0xff] %v3496
      %3682 = vst [vmem:[%s388 + $0x138] sm:$0xff] %v3498
      %3683 = vst [vmem:[%s388 + $0x140] sm:$0xff] %v3500
      %3684 = vst [vmem:[%s388 + $0x148] sm:$0xff] %v3502
      %3685 = vst [vmem:[%s388 + $0x150] sm:$0xff] %v3504
      %3686 = vst [vmem:[%s388 + $0x158] sm:$0xff] %v3506
      %3687 = vst [vmem:[%s388 + $0x160] sm:$0xff] %v3508
      %3688 = vst [vmem:[%s388 + $0x168] sm:$0xff] %v3510
      %3689 = vst [vmem:[%s388 + $0x170] sm:$0xff] %v3512
      %3690 = vst [vmem:[%s388 + $0x178] sm:$0xff] %v3514
      %3691 = vst [vmem:[%s388 + $0x180] sm:$0xff] %v3516
      %3692 = vst [vmem:[%s388 + $0x188] sm:$0xff] %v3518
      %3693 = vst [vmem:[%s388 + $0x190] sm:$0xff] %v3520
      %3694 = vst [vmem:[%s388 + $0x198] sm:$0xff] %v3522
      %3695 = vst [vmem:[%s388 + $0x1a0] sm:$0xff] %v3524
      %3696 = vst [vmem:[%s388 + $0x1a8] sm:$0xff] %v3526
      %3697 = vst [vmem:[%s388 + $0x1b0] sm:$0xff] %v3528
      %3698 = vst [vmem:[%s388 + $0x1b8] sm:$0xff] %v3530
      %3699 = vst [vmem:[%s388 + $0x1c0] sm:$0xff] %v3532
      %3700 = vst [vmem:[%s388 + $0x1c8] sm:$0xff] %v3534
      %3701 = vst [vmem:[%s388 + $0x1d0] sm:$0xff] %v3536
      %3702 = vst [vmem:[%s388 + $0x1d8] sm:$0xff] %v3538
      %3703 = vst [vmem:[%s388 + $0x1e0] sm:$0xff] %v3540
      %3704 = vst [vmem:[%s388 + $0x1e8] sm:$0xff] %v3542
      %3705 = vst [vmem:[%s388 + $0x1f0] sm:$0xff] %v3544
      %3706 = vst [vmem:[%s388 + $0x1f8] sm:$0xff] %v3546
      %3707 = vst [vmem:[%s388 + $0x200] sm:$0xff] %v3548
      %3708 = vst [vmem:[%s388 + $0x208] sm:$0xff] %v3550
      %3709 = vst [vmem:[%s388 + $0x210] sm:$0xff] %v3552
      %3710 = vst [vmem:[%s388 + $0x218] sm:$0xff] %v3554
      %3711 = vst [vmem:[%s388 + $0x220] sm:$0xff] %v3556
      %3712 = vst [vmem:[%s388 + $0x228] sm:$0xff] %v3558
      %3713 = vst [vmem:[%s388 + $0x230] sm:$0xff] %v3560
      %3714 = vst [vmem:[%s388 + $0x238] sm:$0xff] %v3562
      %3715 = vst [vmem:[%s388 + $0x240] sm:$0xff] %v3564
      %3716 = vst [vmem:[%s388 + $0x248] sm:$0xff] %v3566
      %3717 = vst [vmem:[%s388 + $0x250] sm:$0xff] %v3568
      %3718 = vst [vmem:[%s388 + $0x258] sm:$0xff] %v3570
      %3719 = vst [vmem:[%s388 + $0x260] sm:$0xff] %v3572
      %3720 = vst [vmem:[%s388 + $0x268] sm:$0xff] %v3574
      %3721 = vst [vmem:[%s388 + $0x270] sm:$0xff] %v3576
      %3722 = vst [vmem:[%s388 + $0x278] sm:$0xff] %v3578
      %3723 = vst [vmem:[%s388 + $0x280] sm:$0xff] %v3580
      %3724 = vst [vmem:[%s388 + $0x288] sm:$0xff] %v3582
      %3725 = vst [vmem:[%s388 + $0x290] sm:$0xff] %v3584
      %3726 = vst [vmem:[%s388 + $0x298] sm:$0xff] %v3586
      %3727 = vst [vmem:[%s388 + $0x2a0] sm:$0xff] %v3588
      %3728 = vst [vmem:[%s388 + $0x2a8] sm:$0xff] %v3590
      %3729 = vst [vmem:[%s388 + $0x2b0] sm:$0xff] %v3592
      %3730 = vst [vmem:[%s388 + $0x2b8] sm:$0xff] %v3594
      %3731 = vst [vmem:[%s388 + $0x2c0] sm:$0xff] %v3596
      %3732 = vst [vmem:[%s388 + $0x2c8] sm:$0xff] %v3598
      %3733 = vst [vmem:[%s388 + $0x2d0] sm:$0xff] %v3600
      %3734 = vst [vmem:[%s388 + $0x2d8] sm:$0xff] %v3602
      %3735 = vst [vmem:[%s388 + $0x2e0] sm:$0xff] %v3604
      %3736 = vst [vmem:[%s388 + $0x2e8] sm:$0xff] %v3606
      %3737 = vst [vmem:[%s388 + $0x2f0] sm:$0xff] %v3608
      %3738 = vst [vmem:[%s388 + $0x2f8] sm:$0xff] %v3610
      %3739 = vst [vmem:[%s388 + $0x300] sm:$0xff] %v3612
      %3740 = vst [vmem:[%s388 + $0x308] sm:$0xff] %v3614
      %3741 = vst [vmem:[%s388 + $0x310] sm:$0xff] %v3616
      %3742 = vst [vmem:[%s388 + $0x318] sm:$0xff] %v3618
      %3743 = vst [vmem:[%s388 + $0x320] sm:$0xff] %v3620
      %3744 = vst [vmem:[%s388 + $0x328] sm:$0xff] %v3622
      %3745 = vst [vmem:[%s388 + $0x330] sm:$0xff] %v3624
      %3746 = vst [vmem:[%s388 + $0x338] sm:$0xff] %v3626
      %3747 = vst [vmem:[%s388 + $0x340] sm:$0xff] %v3628
      %3748 = vst [vmem:[%s388 + $0x348] sm:$0xff] %v3630
      %3749 = vst [vmem:[%s388 + $0x350] sm:$0xff] %v3632
      %3750 = vst [vmem:[%s388 + $0x358] sm:$0xff] %v3634
      %3751 = vst [vmem:[%s388 + $0x360] sm:$0xff] %v3636
      %3752 = vst [vmem:[%s388 + $0x368] sm:$0xff] %v3638
      %3753 = vst [vmem:[%s388 + $0x370] sm:$0xff] %v3640
      %3754 = vst [vmem:[%s388 + $0x378] sm:$0xff] %v3642
      %s3755 = smul.u32 16, %s21
      %p3756 = scmp.lt.s32.totalorder %s3755, 31
      %s3757 = scalar_select %p3756, %s3755, 31
      %s3758 = smul.addr %s3757, 7
      %s3759 = smul.addr %s3758, 8
      %s3760 = scalar_lea.vmem %s10, %s3759
      // Predicated region
      $region61: #{vae_forward.1} parent=59 // pred_check
        %p3761 = pneg %p259
      $region62: #{vae_forward.1} parent=59 // pred_check_branch
        %3763 = sbr.rel (%p3761) target = $region64
      $region63: #{vae_forward.1} parent=59 // pred_region
        %s3764 = smul.u32 16, %s21
      $region64: #{vae_forward.1} parent=59 // pred_fallthru
        _
    $region60: #{vae_forward.1} parent=5 // pred_fallthru
      _
    %p3765 = scmp.le.s32.totalorder 2, %s16
    // Predicated region
    $region65: #{vae_forward.1} parent=5 // pred_check
      %p3766 = pneg %p3765
    $region66: #{vae_forward.1} parent=5 // pred_check_branch
      %3768 = sbr.rel (%p3766) target = $region68
    $region67: #{vae_forward.1} parent=5 // pred_region
      %s3769 = ssub.s32 %s16, 2
      // Predicated region
      $region69: #{vae_forward.1} parent=67 // pred_check
        %p3770 = pneg %p265
      $region70: #{vae_forward.1} parent=67 // pred_check_branch
        %3772 = sbr.rel (%p3770) target = $region72
      $region71: #{vae_forward.1} parent=67 // pred_region
        %s3773 = smul.u32 16, %s22
        %p3774 = scmp.lt.s32.totalorder %s3773, 31
        %s3775 = scalar_select %p3774, %s3773, 31
        %s3776 = smul.addr %s3775, 7
        %s3777 = smul.addr %s3776, 8
        %s3778 = scalar_lea.vmem %s10, %s3777
      $region72: #{vae_forward.1} parent=67 // pred_fallthru
        _
    $region68: #{vae_forward.1} parent=5 // pred_fallthru
      _
  $region6: #{vae_forward.1} parent=0 // loop_footer
    %s20 = sadd.s32 1, %s16
  $region7: #{vae_forward.1} parent=0 // loop_footer_branch
    %15 = sbr.rel target = $region3
  $region8: #{vae_forward.1} parent=0 // loop_exit
    _

</llo_original>
